<compile_context>
chip_gen: v6e
topology: v6e:2x2x1
jax: 0.10.0
libtpu: 0.0.40
codegen_flags: <defaults>
</compile_context>

<pallas_src>
import functools

import numpy as np
import jax
import jax.numpy as jnp
from jax.experimental import pallas as pl
from jax.experimental.pallas import tpu as pltpu

BN_EPS = 1e-5


# ---------------------------------------------------------------------------
# Host-side constant spatial operator (pure glue: small 0/1-per-25 matrix).
# ---------------------------------------------------------------------------
def make_pool_up_matrix(H, W):
    """Fused AvgPool2d(k=5, s=2, p=2, count_include_pad=True) + nearest x2 upsample,
    as an (H*W, H*W) matrix acting on row-major flattened (h*W + w) spatial indices."""
    def axis_mat(L):
        m = np.zeros((L, L), dtype=np.float32)
        for h in range(L):
            c = 2 * (h // 2)          # nearest-upsample source row * stride
            for hp in range(c - 2, c + 3):
                if 0 <= hp < L:
                    m[h, hp] = 1.0
        return m
    return (np.kron(axis_mat(H), axis_mat(W)) / 25.0).astype(np.float32)


# ---------------------------------------------------------------------------
# Pallas kernel (single invocation, everything resident in VMEM).
# ---------------------------------------------------------------------------
def ppm_kernel(H, W, x_ref, put_ref, w0_ref, w1_ref, w2_ref,
               b0_ref, b1_ref, b2_ref, gamma_ref, beta_ref, out_ref):
    HW = H * W
    C, NHW = x_ref.shape
    n_batch = NHW // HW

    x = x_ref[...]                               # (C, N*HW) f32
    x_bf = x.astype(jnp.bfloat16)
    put = put_ref[...]                           # (HW, HW) f32  (pool+upsample, right-op)
    w0 = w0_ref[...]                             # (C, C)   bf16
    w1 = w1_ref[...]                             # (C, 9C)  bf16
    w2 = w2_ref[...]                             # (C, 2C)  bf16
    b0 = b0_ref[...]                             # (C, 1)   f32
    b1 = b1_ref[...]
    b2 = b2_ref[...]
    gamma = gamma_ref[...]
    beta = beta_ref[...]

    # conv0 (1x1): one bf16 channel matmul over all batches, f32 accumulation.
    out0 = jnp.dot(w0, x_bf, preferred_element_type=jnp.float32) + b0          # (C, NHW)

    # avgpool(k5,s2,p2) fused with nearest x2 upsample: spatial matmul per batch.
    # Kept in f32 because it feeds the BatchNorm statistics (precision-sensitive).
    pools = [jnp.dot(x[:, n * HW:(n + 1) * HW], put,
                     preferred_element_type=jnp.float32) for n in range(n_batch)]
    pooled = pools[0] if n_batch == 1 else jnp.concatenate(pools, axis=1)      # (C, NHW)

    # BatchNorm2d with batch statistics (per channel over N, H, W). Stats on the
    # upsampled tensor equal stats on the low-res pooled tensor (exact 2x2 replication).
    mean = jnp.mean(pooled, axis=1, keepdims=True)                             # (C, 1)
    var = jnp.mean(jnp.square(pooled - mean), axis=1, keepdims=True)           # biased
    inv_std = jax.lax.rsqrt(var + BN_EPS)
    out10 = jnp.maximum((pooled - mean) * (inv_std * gamma) + beta, 0.0)       # ReLU

    out111 = out10 + out0                                                      # (C, NHW)

    # conv1 (3x3, pad 1): nine XLU rolls + edge masks, stacked along the contraction
    # axis, then ONE (C, 9C) @ (9C, NHW) bf16 matmul.
    pos = jax.lax.broadcasted_iota(jnp.int32, (1, NHW), 1)
    if (W & (W - 1)) == 0 and (HW & (HW - 1)) == 0:          # powers of two -> bit ops
        w_idx = jnp.bitwise_and(pos, W - 1)
        h_idx = jnp.right_shift(jnp.bitwise_and(pos, HW - 1), W.bit_length() - 1)
    else:
        w_idx = pos % W
        h_idx = (pos % HW) // W

    taps = []
    for di in (-1, 0, 1):
        h_ok = jnp.logical_and(h_idx + di >= 0, h_idx + di < H)
        for dj in (-1, 0, 1):
            valid = jnp.logical_and(h_ok,
                                    jnp.logical_and(w_idx + dj >= 0, w_idx + dj < W))
            shift = (-(di * W + dj)) % NHW                   # static python int
            rolled = pltpu.roll(out111, shift=shift, axis=1)  # rolled[p] = out111[p+di*W+dj]
            taps.append(jnp.where(valid, rolled, 0.0))
    x9 = jnp.concatenate(taps, axis=0).astype(jnp.bfloat16)                    # (9C, NHW)
    conv1 = jnp.dot(w1, x9, preferred_element_type=jnp.float32) + b1           # (C, NHW)

    # conv2 (1x1, 2C -> C) on cat([conv1, out0]) as a single K=2C bf16 matmul.
    cat = jnp.concatenate([conv1, out0], axis=0).astype(jnp.bfloat16)          # (2C, NHW)
    conv2 = jnp.dot(w2, cat, preferred_element_type=jnp.float32) + b2          # (C, NHW)

    out_ref[...] = out0 + conv2


# ---------------------------------------------------------------------------
# Wrapper: NCHW in / NCHW out, PyTorch-layout (OIHW) parameters.
# ---------------------------------------------------------------------------
def ppm_forward(x_nchw, w0_pt, b0, w1_pt, b1, w2_pt, b2, gamma, beta):
    N, C, H, W = x_nchw.shape
    assert H % 2 == 0 and W % 2 == 0, "even H, W required (nearest x2 upsample / BN stats)"
    HW = H * W
    NHW = N * HW

    # Lane-dense layout: channels on sublanes, flattened batch*spatial on lanes.
    x = jnp.transpose(x_nchw, (1, 0, 2, 3)).reshape(C, NHW).astype(jnp.float32)

    w0 = w0_pt[:, :, 0, 0].astype(jnp.bfloat16)                                 # (C, C)
    w1 = jnp.transpose(w1_pt, (0, 2, 3, 1)).reshape(C, 9 * C).astype(jnp.bfloat16)
    w2 = w2_pt[:, :, 0, 0].astype(jnp.bfloat16)                                 # (C, 2C)
    put = jnp.asarray(make_pool_up_matrix(H, W).T)                              # (HW, HW)

    col = lambda v: v.reshape(C, 1).astype(jnp.float32)

    kernel = functools.partial(ppm_kernel, H, W)
    out = pl.pallas_call(
        kernel,
        out_shape=jax.ShapeDtypeStruct((C, NHW), jnp.float32),
        in_specs=[pl.BlockSpec(memory_space=pltpu.MemorySpace.VMEM)] * 10,
        out_specs=pl.BlockSpec(memory_space=pltpu.MemorySpace.VMEM),
    )(x, put, w0, w1, w2, col(b0), col(b1), col(b2), col(gamma), col(beta))

    return jnp.transpose(out.reshape(C, N, H, W), (1, 0, 2, 3))


# ---------------------------------------------------------------------------
# Pure-JAX reference (mirrors the PyTorch module in NCHW, f32 everywhere).
# ---------------------------------------------------------------------------
def ref_forward(x, w0_pt, b0, w1_pt, b1, w2_pt, b2, gamma, beta):
    def conv(y, w, b, pad):
        out = jax.lax.conv_general_dilated(
            y, w, window_strides=(1, 1),
            padding=[(pad, pad), (pad, pad)],
            dimension_numbers=('NCHW', 'OIHW', 'NCHW'))
        return out + b.reshape(1, -1, 1, 1)

    out0 = conv(x, w0_pt, b0, 0)
    pooled = jax.lax.reduce_window(
        x, jnp.float32(0.0), jax.lax.add,
        (1, 1, 5, 5), (1, 1, 2, 2),
        padding=[(0, 0), (0, 0), (2, 2), (2, 2)]) / 25.0
    mean = pooled.mean(axis=(0, 2, 3), keepdims=True)
    var = ((pooled - mean) ** 2).mean(axis=(0, 2, 3), keepdims=True)
    bn = ((pooled - mean) / jnp.sqrt(var + BN_EPS)) * gamma.reshape(1, -1, 1, 1) \
         + beta.reshape(1, -1, 1, 1)
    act = jnp.maximum(bn, 0.0)
    up = jnp.repeat(jnp.repeat(act, 2, axis=2), 2, axis=3)
    out111 = up + out0
    out1 = jnp.concatenate([conv(out111, w1_pt, b1, 1), out0], axis=1)
    return out0 + conv(out1, w2_pt, b2, 0)


if __name__ == "__main__":
    N, C, H, W = 2, 64, 16, 16   # channels fixed at 64 by the module
    key = jax.random.PRNGKey(0)
    ks = jax.random.split(key, 9)

    x_nchw = jax.random.normal(ks[0], (N, C, H, W), dtype=jnp.float32)
    w0_pt = 0.05 * jax.random.normal(ks[1], (C, C, 1, 1), dtype=jnp.float32)
    b0 = 0.05 * jax.random.normal(ks[2], (C,), dtype=jnp.float32)
    w1_pt = 0.05 * jax.random.normal(ks[3], (C, C, 3, 3), dtype=jnp.float32)
    b1 = 0.05 * jax.random.normal(ks[4], (C,), dtype=jnp.float32)
    w2_pt = 0.05 * jax.random.normal(ks[5], (C, 2 * C, 1, 1), dtype=jnp.float32)
    b2 = 0.05 * jax.random.normal(ks[6], (C,), dtype=jnp.float32)
    gamma = 1.0 + 0.1 * jax.random.normal(ks[7], (C,), dtype=jnp.float32)
    beta = 0.1 * jax.random.normal(ks[8], (C,), dtype=jnp.float32)

    out_pallas = jax.block_until_ready(
        ppm_forward(x_nchw, w0_pt, b0, w1_pt, b1, w2_pt, b2, gamma, beta))
    out_ref = ref_forward(x_nchw, w0_pt, b0, w1_pt, b1, w2_pt, b2, gamma, beta)

    # bf16 MXU operands (f32 accumulation) -> relaxed absolute tolerance.
    err = float(jnp.max(jnp.abs(out_pallas - out_ref)))
    assert err < 2e-2, f"max abs error {err}"
    print("KERNEL_OK")
</pallas_src>

<mosaic_0001>
module attributes {stable_mosaic.version = 11 : i64} {
  func.func @ppm_kernel(%arg0: memref<64x512xf32, #tpu.memory_space<vmem>>, %arg1: memref<256x256xf32, #tpu.memory_space<vmem>>, %arg2: memref<64x64xbf16, #tpu.memory_space<vmem>>, %arg3: memref<64x576xbf16, #tpu.memory_space<vmem>>, %arg4: memref<64x128xbf16, #tpu.memory_space<vmem>>, %arg5: memref<64x1xf32, #tpu.memory_space<vmem>>, %arg6: memref<64x1xf32, #tpu.memory_space<vmem>>, %arg7: memref<64x1xf32, #tpu.memory_space<vmem>>, %arg8: memref<64x1xf32, #tpu.memory_space<vmem>>, %arg9: memref<64x1xf32, #tpu.memory_space<vmem>>, %arg10: memref<64x512xf32, #tpu.memory_space<vmem>>) attributes {dimension_semantics = [], scalar_prefetch = 0 : i64, scratch_operands = 0 : i64, tpu.core_type = #tpu.core_type<tc>} {
    %c0 = arith.constant 0 : index
    %c0_0 = arith.constant 0 : index
    %0 = vector.load %arg0[%c0, %c0_0] : memref<64x512xf32, #tpu.memory_space<vmem>>, vector<64x512xf32>
    %1 = arith.truncf %0 : vector<64x512xf32> to vector<64x512xbf16>
    %c0_1 = arith.constant 0 : index
    %c0_2 = arith.constant 0 : index
    %2 = vector.load %arg1[%c0_1, %c0_2] : memref<256x256xf32, #tpu.memory_space<vmem>>, vector<256x256xf32>
    %c0_3 = arith.constant 0 : index
    %c0_4 = arith.constant 0 : index
    %3 = vector.load %arg2[%c0_3, %c0_4] : memref<64x64xbf16, #tpu.memory_space<vmem>>, vector<64x64xbf16>
    %c0_5 = arith.constant 0 : index
    %c0_6 = arith.constant 0 : index
    %4 = vector.load %arg3[%c0_5, %c0_6] : memref<64x576xbf16, #tpu.memory_space<vmem>>, vector<64x576xbf16>
    %c0_7 = arith.constant 0 : index
    %c0_8 = arith.constant 0 : index
    %5 = vector.load %arg4[%c0_7, %c0_8] : memref<64x128xbf16, #tpu.memory_space<vmem>>, vector<64x128xbf16>
    %c0_9 = arith.constant 0 : index
    %c0_10 = arith.constant 0 : index
    %6 = vector.load %arg5[%c0_9, %c0_10] : memref<64x1xf32, #tpu.memory_space<vmem>>, vector<64x1xf32>
    %c0_11 = arith.constant 0 : index
    %c0_12 = arith.constant 0 : index
    %7 = vector.load %arg6[%c0_11, %c0_12] : memref<64x1xf32, #tpu.memory_space<vmem>>, vector<64x1xf32>
    %c0_13 = arith.constant 0 : index
    %c0_14 = arith.constant 0 : index
    %8 = vector.load %arg7[%c0_13, %c0_14] : memref<64x1xf32, #tpu.memory_space<vmem>>, vector<64x1xf32>
    %c0_15 = arith.constant 0 : index
    %c0_16 = arith.constant 0 : index
    %9 = vector.load %arg8[%c0_15, %c0_16] : memref<64x1xf32, #tpu.memory_space<vmem>>, vector<64x1xf32>
    %c0_17 = arith.constant 0 : index
    %c0_18 = arith.constant 0 : index
    %10 = vector.load %arg9[%c0_17, %c0_18] : memref<64x1xf32, #tpu.memory_space<vmem>>, vector<64x1xf32>
    %cst = arith.constant dense<0.000000e+00> : vector<64x512xf32>
    %11 = tpu.matmul %3, %1, %cst {dimension_numbers = #tpu.dot_dimension_numbers<[1], [0], [0], [1], [0, 0, 1, 1], [], []>} : vector<64x64xbf16>, vector<64x512xbf16>, vector<64x512xf32> -> vector<64x512xf32>
    %12 = vector.broadcast %6 : vector<64x1xf32> to vector<64x512xf32>
    %13 = arith.addf %11, %12 : vector<64x512xf32>
    %14 = vector.extract_strided_slice %0 {offsets = [0, 0], sizes = [64, 256], strides = [1, 1]} : vector<64x512xf32> to vector<64x256xf32>
    %cst_19 = arith.constant dense<0.000000e+00> : vector<64x256xf32>
    %15 = tpu.matmul %14, %2, %cst_19 {dimension_numbers = #tpu.dot_dimension_numbers<[1], [0], [0], [1], [0, 0, 1, 1], [], []>} : vector<64x256xf32>, vector<256x256xf32>, vector<64x256xf32> -> vector<64x256xf32>
    %16 = vector.extract_strided_slice %0 {offsets = [0, 256], sizes = [64, 256], strides = [1, 1]} : vector<64x512xf32> to vector<64x256xf32>
    %cst_20 = arith.constant dense<0.000000e+00> : vector<64x256xf32>
    %17 = tpu.matmul %16, %2, %cst_20 {dimension_numbers = #tpu.dot_dimension_numbers<[1], [0], [0], [1], [0, 0, 1, 1], [], []>} : vector<64x256xf32>, vector<256x256xf32>, vector<64x256xf32> -> vector<64x256xf32>
    %18 = tpu.concatenate %15, %17 in 1 : vector<64x256xf32>, vector<64x256xf32> -> vector<64x512xf32>
    %cst_21 = arith.constant dense<0.000000e+00> : vector<64xf32>
    %19 = vector.multi_reduction <add>, %18, %cst_21 [1] : vector<64x512xf32> to vector<64xf32>
    %20 = vector.shape_cast %19 : vector<64xf32> to vector<64x1xf32>
    %cst_22 = arith.constant 5.120000e+02 : f32
    %21 = vector.broadcast %cst_22 : f32 to vector<64x1xf32>
    %22 = arith.divf %20, %21 : vector<64x1xf32>
    %23 = vector.broadcast %22 : vector<64x1xf32> to vector<64x512xf32>
    %24 = arith.subf %18, %23 : vector<64x512xf32>
    %25 = arith.mulf %24, %24 : vector<64x512xf32>
    %cst_23 = arith.constant dense<0.000000e+00> : vector<64xf32>
    %26 = vector.multi_reduction <add>, %25, %cst_23 [1] : vector<64x512xf32> to vector<64xf32>
    %27 = vector.shape_cast %26 : vector<64xf32> to vector<64x1xf32>
    %cst_24 = arith.constant 5.120000e+02 : f32
    %28 = vector.broadcast %cst_24 : f32 to vector<64x1xf32>
    %29 = arith.divf %27, %28 : vector<64x1xf32>
    %cst_25 = arith.constant 9.99999974E-6 : f32
    %30 = vector.broadcast %cst_25 : f32 to vector<64x1xf32>
    %31 = arith.addf %29, %30 : vector<64x1xf32>
    %32 = math.rsqrt %31 : vector<64x1xf32>
    %33 = vector.broadcast %22 : vector<64x1xf32> to vector<64x512xf32>
    %34 = arith.subf %18, %33 : vector<64x512xf32>
    %35 = arith.mulf %32, %9 : vector<64x1xf32>
    %36 = vector.broadcast %35 : vector<64x1xf32> to vector<64x512xf32>
    %37 = arith.mulf %34, %36 : vector<64x512xf32>
    %38 = vector.broadcast %10 : vector<64x1xf32> to vector<64x512xf32>
    %39 = arith.addf %37, %38 : vector<64x512xf32>
    %cst_26 = arith.constant 0.000000e+00 : f32
    %40 = vector.broadcast %cst_26 : f32 to vector<64x512xf32>
    %41 = arith.maximumf %39, %40 : vector<64x512xf32>
    %42 = arith.addf %41, %13 : vector<64x512xf32>
    %43 = tpu.iota {dimensions = array<i32: 1>} : vector<1x512xi32>
    %c15_i32 = arith.constant 15 : i32
    %44 = vector.broadcast %c15_i32 : i32 to vector<1x512xi32>
    %45 = arith.andi %43, %44 : vector<1x512xi32>
    %c255_i32 = arith.constant 255 : i32
    %46 = vector.broadcast %c255_i32 : i32 to vector<1x512xi32>
    %47 = arith.andi %43, %46 : vector<1x512xi32>
    %c4_i32 = arith.constant 4 : i32
    %48 = vector.broadcast %c4_i32 : i32 to vector<1x512xi32>
    %49 = arith.shrsi %47, %48 : vector<1x512xi32>
    %c-1_i32 = arith.constant -1 : i32
    %50 = vector.broadcast %c-1_i32 : i32 to vector<1x512xi32>
    %51 = arith.addi %49, %50 : vector<1x512xi32>
    %c0_i32 = arith.constant 0 : i32
    %52 = vector.broadcast %c0_i32 : i32 to vector<1x512xi32>
    %53 = arith.cmpi sge, %51, %52 : vector<1x512xi32>
    %c-1_i32_27 = arith.constant -1 : i32
    %54 = vector.broadcast %c-1_i32_27 : i32 to vector<1x512xi32>
    %55 = arith.addi %49, %54 : vector<1x512xi32>
    %c16_i32 = arith.constant 16 : i32
    %56 = vector.broadcast %c16_i32 : i32 to vector<1x512xi32>
    %57 = arith.cmpi slt, %55, %56 : vector<1x512xi32>
    %58 = arith.andi %53, %57 : vector<1x512xi1>
    %c-1_i32_28 = arith.constant -1 : i32
    %59 = vector.broadcast %c-1_i32_28 : i32 to vector<1x512xi32>
    %60 = arith.addi %45, %59 : vector<1x512xi32>
    %c0_i32_29 = arith.constant 0 : i32
    %61 = vector.broadcast %c0_i32_29 : i32 to vector<1x512xi32>
    %62 = arith.cmpi sge, %60, %61 : vector<1x512xi32>
    %c-1_i32_30 = arith.constant -1 : i32
    %63 = vector.broadcast %c-1_i32_30 : i32 to vector<1x512xi32>
    %64 = arith.addi %45, %63 : vector<1x512xi32>
    %c16_i32_31 = arith.constant 16 : i32
    %65 = vector.broadcast %c16_i32_31 : i32 to vector<1x512xi32>
    %66 = arith.cmpi slt, %64, %65 : vector<1x512xi32>
    %67 = arith.andi %62, %66 : vector<1x512xi1>
    %68 = arith.andi %58, %67 : vector<1x512xi1>
    %c17_i32 = arith.constant 17 : i32
    %69 = tpu.dynamic_rotate %42 by %c17_i32 dim 1 : vector<64x512xf32>, i32 -> vector<64x512xf32>
    %cst_32 = arith.constant 0.000000e+00 : f32
    %70 = vector.shape_cast %68 : vector<1x512xi1> to vector<1x512xi1>
    %71 = vector.broadcast %70 : vector<1x512xi1> to vector<64x512xi1>
    %72 = vector.broadcast %cst_32 : f32 to vector<64x512xf32>
    %73 = arith.select %71, %69, %72 : vector<64x512xi1>, vector<64x512xf32>
    %c0_i32_33 = arith.constant 0 : i32
    %74 = vector.broadcast %c0_i32_33 : i32 to vector<1x512xi32>
    %75 = arith.addi %45, %74 : vector<1x512xi32>
    %c0_i32_34 = arith.constant 0 : i32
    %76 = vector.broadcast %c0_i32_34 : i32 to vector<1x512xi32>
    %77 = arith.cmpi sge, %75, %76 : vector<1x512xi32>
    %c0_i32_35 = arith.constant 0 : i32
    %78 = vector.broadcast %c0_i32_35 : i32 to vector<1x512xi32>
    %79 = arith.addi %45, %78 : vector<1x512xi32>
    %c16_i32_36 = arith.constant 16 : i32
    %80 = vector.broadcast %c16_i32_36 : i32 to vector<1x512xi32>
    %81 = arith.cmpi slt, %79, %80 : vector<1x512xi32>
    %82 = arith.andi %77, %81 : vector<1x512xi1>
    %83 = arith.andi %58, %82 : vector<1x512xi1>
    %c16_i32_37 = arith.constant 16 : i32
    %84 = tpu.dynamic_rotate %42 by %c16_i32_37 dim 1 : vector<64x512xf32>, i32 -> vector<64x512xf32>
    %cst_38 = arith.constant 0.000000e+00 : f32
    %85 = vector.shape_cast %83 : vector<1x512xi1> to vector<1x512xi1>
    %86 = vector.broadcast %85 : vector<1x512xi1> to vector<64x512xi1>
    %87 = vector.broadcast %cst_38 : f32 to vector<64x512xf32>
    %88 = arith.select %86, %84, %87 : vector<64x512xi1>, vector<64x512xf32>
    %c1_i32 = arith.constant 1 : i32
    %89 = vector.broadcast %c1_i32 : i32 to vector<1x512xi32>
    %90 = arith.addi %45, %89 : vector<1x512xi32>
    %c0_i32_39 = arith.constant 0 : i32
    %91 = vector.broadcast %c0_i32_39 : i32 to vector<1x512xi32>
    %92 = arith.cmpi sge, %90, %91 : vector<1x512xi32>
    %c1_i32_40 = arith.constant 1 : i32
    %93 = vector.broadcast %c1_i32_40 : i32 to vector<1x512xi32>
    %94 = arith.addi %45, %93 : vector<1x512xi32>
    %c16_i32_41 = arith.constant 16 : i32
    %95 = vector.broadcast %c16_i32_41 : i32 to vector<1x512xi32>
    %96 = arith.cmpi slt, %94, %95 : vector<1x512xi32>
    %97 = arith.andi %92, %96 : vector<1x512xi1>
    %98 = arith.andi %58, %97 : vector<1x512xi1>
    %c15_i32_42 = arith.constant 15 : i32
    %99 = tpu.dynamic_rotate %42 by %c15_i32_42 dim 1 : vector<64x512xf32>, i32 -> vector<64x512xf32>
    %cst_43 = arith.constant 0.000000e+00 : f32
    %100 = vector.shape_cast %98 : vector<1x512xi1> to vector<1x512xi1>
    %101 = vector.broadcast %100 : vector<1x512xi1> to vector<64x512xi1>
    %102 = vector.broadcast %cst_43 : f32 to vector<64x512xf32>
    %103 = arith.select %101, %99, %102 : vector<64x512xi1>, vector<64x512xf32>
    %c0_i32_44 = arith.constant 0 : i32
    %104 = vector.broadcast %c0_i32_44 : i32 to vector<1x512xi32>
    %105 = arith.addi %49, %104 : vector<1x512xi32>
    %c0_i32_45 = arith.constant 0 : i32
    %106 = vector.broadcast %c0_i32_45 : i32 to vector<1x512xi32>
    %107 = arith.cmpi sge, %105, %106 : vector<1x512xi32>
    %c0_i32_46 = arith.constant 0 : i32
    %108 = vector.broadcast %c0_i32_46 : i32 to vector<1x512xi32>
    %109 = arith.addi %49, %108 : vector<1x512xi32>
    %c16_i32_47 = arith.constant 16 : i32
    %110 = vector.broadcast %c16_i32_47 : i32 to vector<1x512xi32>
    %111 = arith.cmpi slt, %109, %110 : vector<1x512xi32>
    %112 = arith.andi %107, %111 : vector<1x512xi1>
    %c-1_i32_48 = arith.constant -1 : i32
    %113 = vector.broadcast %c-1_i32_48 : i32 to vector<1x512xi32>
    %114 = arith.addi %45, %113 : vector<1x512xi32>
    %c0_i32_49 = arith.constant 0 : i32
    %115 = vector.broadcast %c0_i32_49 : i32 to vector<1x512xi32>
    %116 = arith.cmpi sge, %114, %115 : vector<1x512xi32>
    %c-1_i32_50 = arith.constant -1 : i32
    %117 = vector.broadcast %c-1_i32_50 : i32 to vector<1x512xi32>
    %118 = arith.addi %45, %117 : vector<1x512xi32>
    %c16_i32_51 = arith.constant 16 : i32
    %119 = vector.broadcast %c16_i32_51 : i32 to vector<1x512xi32>
    %120 = arith.cmpi slt, %118, %119 : vector<1x512xi32>
    %121 = arith.andi %116, %120 : vector<1x512xi1>
    %122 = arith.andi %112, %121 : vector<1x512xi1>
    %c1_i32_52 = arith.constant 1 : i32
    %123 = tpu.dynamic_rotate %42 by %c1_i32_52 dim 1 : vector<64x512xf32>, i32 -> vector<64x512xf32>
    %cst_53 = arith.constant 0.000000e+00 : f32
    %124 = vector.shape_cast %122 : vector<1x512xi1> to vector<1x512xi1>
    %125 = vector.broadcast %124 : vector<1x512xi1> to vector<64x512xi1>
    %126 = vector.broadcast %cst_53 : f32 to vector<64x512xf32>
    %127 = arith.select %125, %123, %126 : vector<64x512xi1>, vector<64x512xf32>
    %c0_i32_54 = arith.constant 0 : i32
    %128 = vector.broadcast %c0_i32_54 : i32 to vector<1x512xi32>
    %129 = arith.addi %45, %128 : vector<1x512xi32>
    %c0_i32_55 = arith.constant 0 : i32
    %130 = vector.broadcast %c0_i32_55 : i32 to vector<1x512xi32>
    %131 = arith.cmpi sge, %129, %130 : vector<1x512xi32>
    %c0_i32_56 = arith.constant 0 : i32
    %132 = vector.broadcast %c0_i32_56 : i32 to vector<1x512xi32>
    %133 = arith.addi %45, %132 : vector<1x512xi32>
    %c16_i32_57 = arith.constant 16 : i32
    %134 = vector.broadcast %c16_i32_57 : i32 to vector<1x512xi32>
    %135 = arith.cmpi slt, %133, %134 : vector<1x512xi32>
    %136 = arith.andi %131, %135 : vector<1x512xi1>
    %137 = arith.andi %112, %136 : vector<1x512xi1>
    %c0_i32_58 = arith.constant 0 : i32
    %138 = tpu.dynamic_rotate %42 by %c0_i32_58 dim 1 : vector<64x512xf32>, i32 -> vector<64x512xf32>
    %cst_59 = arith.constant 0.000000e+00 : f32
    %139 = vector.shape_cast %137 : vector<1x512xi1> to vector<1x512xi1>
    %140 = vector.broadcast %139 : vector<1x512xi1> to vector<64x512xi1>
    %141 = vector.broadcast %cst_59 : f32 to vector<64x512xf32>
    %142 = arith.select %140, %138, %141 : vector<64x512xi1>, vector<64x512xf32>
    %c1_i32_60 = arith.constant 1 : i32
    %143 = vector.broadcast %c1_i32_60 : i32 to vector<1x512xi32>
    %144 = arith.addi %45, %143 : vector<1x512xi32>
    %c0_i32_61 = arith.constant 0 : i32
    %145 = vector.broadcast %c0_i32_61 : i32 to vector<1x512xi32>
    %146 = arith.cmpi sge, %144, %145 : vector<1x512xi32>
    %c1_i32_62 = arith.constant 1 : i32
    %147 = vector.broadcast %c1_i32_62 : i32 to vector<1x512xi32>
    %148 = arith.addi %45, %147 : vector<1x512xi32>
    %c16_i32_63 = arith.constant 16 : i32
    %149 = vector.broadcast %c16_i32_63 : i32 to vector<1x512xi32>
    %150 = arith.cmpi slt, %148, %149 : vector<1x512xi32>
    %151 = arith.andi %146, %150 : vector<1x512xi1>
    %152 = arith.andi %112, %151 : vector<1x512xi1>
    %c511_i32 = arith.constant 511 : i32
    %153 = tpu.dynamic_rotate %42 by %c511_i32 dim 1 : vector<64x512xf32>, i32 -> vector<64x512xf32>
    %cst_64 = arith.constant 0.000000e+00 : f32
    %154 = vector.shape_cast %152 : vector<1x512xi1> to vector<1x512xi1>
    %155 = vector.broadcast %154 : vector<1x512xi1> to vector<64x512xi1>
    %156 = vector.broadcast %cst_64 : f32 to vector<64x512xf32>
    %157 = arith.select %155, %153, %156 : vector<64x512xi1>, vector<64x512xf32>
    %c1_i32_65 = arith.constant 1 : i32
    %158 = vector.broadcast %c1_i32_65 : i32 to vector<1x512xi32>
    %159 = arith.addi %49, %158 : vector<1x512xi32>
    %c0_i32_66 = arith.constant 0 : i32
    %160 = vector.broadcast %c0_i32_66 : i32 to vector<1x512xi32>
    %161 = arith.cmpi sge, %159, %160 : vector<1x512xi32>
    %c1_i32_67 = arith.constant 1 : i32
    %162 = vector.broadcast %c1_i32_67 : i32 to vector<1x512xi32>
    %163 = arith.addi %49, %162 : vector<1x512xi32>
    %c16_i32_68 = arith.constant 16 : i32
    %164 = vector.broadcast %c16_i32_68 : i32 to vector<1x512xi32>
    %165 = arith.cmpi slt, %163, %164 : vector<1x512xi32>
    %166 = arith.andi %161, %165 : vector<1x512xi1>
    %c-1_i32_69 = arith.constant -1 : i32
    %167 = vector.broadcast %c-1_i32_69 : i32 to vector<1x512xi32>
    %168 = arith.addi %45, %167 : vector<1x512xi32>
    %c0_i32_70 = arith.constant 0 : i32
    %169 = vector.broadcast %c0_i32_70 : i32 to vector<1x512xi32>
    %170 = arith.cmpi sge, %168, %169 : vector<1x512xi32>
    %c-1_i32_71 = arith.constant -1 : i32
    %171 = vector.broadcast %c-1_i32_71 : i32 to vector<1x512xi32>
    %172 = arith.addi %45, %171 : vector<1x512xi32>
    %c16_i32_72 = arith.constant 16 : i32
    %173 = vector.broadcast %c16_i32_72 : i32 to vector<1x512xi32>
    %174 = arith.cmpi slt, %172, %173 : vector<1x512xi32>
    %175 = arith.andi %170, %174 : vector<1x512xi1>
    %176 = arith.andi %166, %175 : vector<1x512xi1>
    %c497_i32 = arith.constant 497 : i32
    %177 = tpu.dynamic_rotate %42 by %c497_i32 dim 1 : vector<64x512xf32>, i32 -> vector<64x512xf32>
    %cst_73 = arith.constant 0.000000e+00 : f32
    %178 = vector.shape_cast %176 : vector<1x512xi1> to vector<1x512xi1>
    %179 = vector.broadcast %178 : vector<1x512xi1> to vector<64x512xi1>
    %180 = vector.broadcast %cst_73 : f32 to vector<64x512xf32>
    %181 = arith.select %179, %177, %180 : vector<64x512xi1>, vector<64x512xf32>
    %c0_i32_74 = arith.constant 0 : i32
    %182 = vector.broadcast %c0_i32_74 : i32 to vector<1x512xi32>
    %183 = arith.addi %45, %182 : vector<1x512xi32>
    %c0_i32_75 = arith.constant 0 : i32
    %184 = vector.broadcast %c0_i32_75 : i32 to vector<1x512xi32>
    %185 = arith.cmpi sge, %183, %184 : vector<1x512xi32>
    %c0_i32_76 = arith.constant 0 : i32
    %186 = vector.broadcast %c0_i32_76 : i32 to vector<1x512xi32>
    %187 = arith.addi %45, %186 : vector<1x512xi32>
    %c16_i32_77 = arith.constant 16 : i32
    %188 = vector.broadcast %c16_i32_77 : i32 to vector<1x512xi32>
    %189 = arith.cmpi slt, %187, %188 : vector<1x512xi32>
    %190 = arith.andi %185, %189 : vector<1x512xi1>
    %191 = arith.andi %166, %190 : vector<1x512xi1>
    %c496_i32 = arith.constant 496 : i32
    %192 = tpu.dynamic_rotate %42 by %c496_i32 dim 1 : vector<64x512xf32>, i32 -> vector<64x512xf32>
    %cst_78 = arith.constant 0.000000e+00 : f32
    %193 = vector.shape_cast %191 : vector<1x512xi1> to vector<1x512xi1>
    %194 = vector.broadcast %193 : vector<1x512xi1> to vector<64x512xi1>
    %195 = vector.broadcast %cst_78 : f32 to vector<64x512xf32>
    %196 = arith.select %194, %192, %195 : vector<64x512xi1>, vector<64x512xf32>
    %c1_i32_79 = arith.constant 1 : i32
    %197 = vector.broadcast %c1_i32_79 : i32 to vector<1x512xi32>
    %198 = arith.addi %45, %197 : vector<1x512xi32>
    %c0_i32_80 = arith.constant 0 : i32
    %199 = vector.broadcast %c0_i32_80 : i32 to vector<1x512xi32>
    %200 = arith.cmpi sge, %198, %199 : vector<1x512xi32>
    %c1_i32_81 = arith.constant 1 : i32
    %201 = vector.broadcast %c1_i32_81 : i32 to vector<1x512xi32>
    %202 = arith.addi %45, %201 : vector<1x512xi32>
    %c16_i32_82 = arith.constant 16 : i32
    %203 = vector.broadcast %c16_i32_82 : i32 to vector<1x512xi32>
    %204 = arith.cmpi slt, %202, %203 : vector<1x512xi32>
    %205 = arith.andi %200, %204 : vector<1x512xi1>
    %206 = arith.andi %166, %205 : vector<1x512xi1>
    %c495_i32 = arith.constant 495 : i32
    %207 = tpu.dynamic_rotate %42 by %c495_i32 dim 1 : vector<64x512xf32>, i32 -> vector<64x512xf32>
    %cst_83 = arith.constant 0.000000e+00 : f32
    %208 = vector.shape_cast %206 : vector<1x512xi1> to vector<1x512xi1>
    %209 = vector.broadcast %208 : vector<1x512xi1> to vector<64x512xi1>
    %210 = vector.broadcast %cst_83 : f32 to vector<64x512xf32>
    %211 = arith.select %209, %207, %210 : vector<64x512xi1>, vector<64x512xf32>
    %212 = tpu.concatenate %73, %88, %103, %127, %142, %157, %181, %196, %211 in 0 : vector<64x512xf32>, vector<64x512xf32>, vector<64x512xf32>, vector<64x512xf32>, vector<64x512xf32>, vector<64x512xf32>, vector<64x512xf32>, vector<64x512xf32>, vector<64x512xf32> -> vector<576x512xf32>
    %213 = arith.truncf %212 : vector<576x512xf32> to vector<576x512xbf16>
    %cst_84 = arith.constant dense<0.000000e+00> : vector<64x512xf32>
    %214 = tpu.matmul %4, %213, %cst_84 {dimension_numbers = #tpu.dot_dimension_numbers<[1], [0], [0], [1], [0, 0, 1, 1], [], []>} : vector<64x576xbf16>, vector<576x512xbf16>, vector<64x512xf32> -> vector<64x512xf32>
    %215 = vector.broadcast %7 : vector<64x1xf32> to vector<64x512xf32>
    %216 = arith.addf %214, %215 : vector<64x512xf32>
    %217 = tpu.concatenate %216, %13 in 0 : vector<64x512xf32>, vector<64x512xf32> -> vector<128x512xf32>
    %218 = arith.truncf %217 : vector<128x512xf32> to vector<128x512xbf16>
    %cst_85 = arith.constant dense<0.000000e+00> : vector<64x512xf32>
    %219 = tpu.matmul %5, %218, %cst_85 {dimension_numbers = #tpu.dot_dimension_numbers<[1], [0], [0], [1], [0, 0, 1, 1], [], []>} : vector<64x128xbf16>, vector<128x512xbf16>, vector<64x512xf32> -> vector<64x512xf32>
    %220 = vector.broadcast %8 : vector<64x1xf32> to vector<64x512xf32>
    %221 = arith.addf %219, %220 : vector<64x512xf32>
    %222 = arith.addf %13, %221 : vector<64x512xf32>
    %c0_86 = arith.constant 0 : index
    %c0_87 = arith.constant 0 : index
    %223 = vector.load %arg10[%c0_86, %c0_87] : memref<64x512xf32, #tpu.memory_space<vmem>>, vector<64x512xf32>
    tpu.vector_store %arg10[%c0_86, %c0_87], %222 {strides = array<i32>} : memref<64x512xf32, #tpu.memory_space<vmem>>, vector<64x512xf32>,
    return
  }
}

</mosaic_0001>

<llo_original>
// kernel: tpu_custom_call.1
$region0: #{tpu_custom_call.1}
  #allocation0 [shape = 'u32[]', space=smem, size = 0x4, offset = 0x4, fixed_abs, tag = 'smem constant byte address 0x4 - core index']
  #allocation1 [shape = 'u32[144,128]{1,0:T(1,128)}', space=vmem, size = 0x12000, scoped, tag = 'internal scratch']
  %s0 = inlined_call_operand.vmem [shape: f32[64,512], index: 0, kind: input, shape index: {}]
  %s1 = inlined_call_operand.hbm [shape: f32[256,256], index: 1, kind: input, shape index: {}]
  %s2 = inlined_call_operand.vmem [shape: bf16[64,64], index: 2, kind: input, shape index: {}]
  %s3 = inlined_call_operand.hbm [shape: bf16[64,576], index: 3, kind: input, shape index: {}]
  %s4 = inlined_call_operand.vmem [shape: bf16[64,128], index: 4, kind: input, shape index: {}]
  %s5 = inlined_call_operand.vmem [shape: f32[64,1], index: 5, kind: input, shape index: {}]
  %s6 = inlined_call_operand.vmem [shape: f32[64,1], index: 6, kind: input, shape index: {}]
  %s7 = inlined_call_operand.vmem [shape: f32[64,1], index: 7, kind: input, shape index: {}]
  %s8 = inlined_call_operand.vmem [shape: f32[64,1], index: 8, kind: input, shape index: {}]
  %s9 = inlined_call_operand.vmem [shape: f32[64,1], index: 9, kind: input, shape index: {}]
  %s10 = inlined_call_operand.hbm [shape: f32[64,512], index: 10, kind: output, shape index: {}]
  %s11 = sld [smem:[#allocation0]]
  $region58: #{tpu_custom_call.1} parent=0
    _
  %s13 = ssub.s32 1, %s11
  %s14 = scalar_select 0, %s13, %s11
  $region1: #{tpu_custom_call.1} parent=0
    #allocation2 [shape = 'u8[262144]{0}', space=vmem, size = 0x40000, scoped, tag = 'input window, operand 1, single buffered']
    #allocation3 [shape = 's32[1]{0}', space=sflag, size = 0x4, scoped, tag = 'scoped memory for tpu_custom_call.1']
    #allocation4 [shape = 's32[1]{0}', space=sflag, size = 0x4, scoped, tag = 'scoped memory for tpu_custom_call.1']
    #allocation5 [shape = 'u8[81920]{0}', space=vmem, size = 0x14000, scoped, tag = 'input window, operand 3, single buffered']
    #allocation6 [shape = 's32[1]{0}', space=sflag, size = 0x4, scoped, tag = 'scoped memory for tpu_custom_call.1']
    #allocation7 [shape = 'u8[131072]{0}', space=vmem, size = 0x20000, scoped, tag = 'output window, operand 0, single buffered']
    %15 = vsyncpa [#allocation3], 0
    %16 = vsyncpa [#allocation6], 0
    %17 = vsyncpa [#allocation4], 0
    // Predicated region
    $region2: #{tpu_custom_call.1} parent=1 // pred_check
      _
    $region3: #{tpu_custom_call.1} parent=1 // pred_check_branch
      %19 = sbr.rel (0) target = $region5
    $region4: #{tpu_custom_call.1} parent=1 // pred_region
      _
    $region5: #{tpu_custom_call.1} parent=1 // pred_fallthru
      _
    // Predicated region
    $region6: #{tpu_custom_call.1} parent=1 // pred_check
      _
    $region7: #{tpu_custom_call.1} parent=1 // pred_check_branch
      %21 = sbr.rel (0) target = $region9
    $region8: #{tpu_custom_call.1} parent=1 // pred_region
      %s23 = ssub.s32 8192, 8192
      %24 = vsyncadd [#allocation3], %s23
      %s25 = sshll.u32 [#allocation2], 4
      %s26 = int_to_ptr.vmem [resolvable:$true] %s25
      %31 = dma.hbm_to_vmem [thread:$0]  %s1, 8192, %s26, [#allocation3], 256, 256, 16
    $region9: #{tpu_custom_call.1} parent=1 // pred_fallthru
      _
    // Predicated region
    $region10: #{tpu_custom_call.1} parent=1 // pred_check
      _
    $region11: #{tpu_custom_call.1} parent=1 // pred_check_branch
      %33 = sbr.rel (0) target = $region13
    $region12: #{tpu_custom_call.1} parent=1 // pred_region
      _
    $region13: #{tpu_custom_call.1} parent=1 // pred_fallthru
      _
    // Predicated region
    $region14: #{tpu_custom_call.1} parent=1 // pred_check
      _
    $region15: #{tpu_custom_call.1} parent=1 // pred_check_branch
      %35 = sbr.rel (0) target = $region17
    $region16: #{tpu_custom_call.1} parent=1 // pred_region
      %s37 = ssub.s32 2560, 2560
      %38 = vsyncadd [#allocation6], %s37
      %s39 = sshll.u32 [#allocation5], 4
      %s40 = int_to_ptr.vmem [resolvable:$true] %s39
      %45 = dma.hbm_to_vmem [thread:$0]  %s3, 2560, %s40, [#allocation6], 320, 320, 20
    $region17: #{tpu_custom_call.1} parent=1 // pred_fallthru
      _
    // Predicated region
    $region18: #{tpu_custom_call.1} parent=1 // pred_check
      _
    $region19: #{tpu_custom_call.1} parent=1 // pred_check_branch
      %47 = sbr.rel (0) target = $region21
    $region20: #{tpu_custom_call.1} parent=1 // pred_region
      _
    $region21: #{tpu_custom_call.1} parent=1 // pred_fallthru
      _
    // Predicated region
    $region22: #{tpu_custom_call.1} parent=1 // pred_check
      _
    $region23: #{tpu_custom_call.1} parent=1 // pred_check_branch
      %49 = sbr.rel (0) target = $region25
    $region24: #{tpu_custom_call.1} parent=1 // pred_region
      _
    $region25: #{tpu_custom_call.1} parent=1 // pred_fallthru
      _
    // Predicated region
    $region26: #{tpu_custom_call.1} parent=1 // pred_check
      _
    $region27: #{tpu_custom_call.1} parent=1 // pred_check_branch
      %51 = sbr.rel (0) target = $region29
    $region28: #{tpu_custom_call.1} parent=1 // pred_region
      _
    $region29: #{tpu_custom_call.1} parent=1 // pred_fallthru
      _
    // Predicated region
    $region30: #{tpu_custom_call.1} parent=1 // pred_check
      _
    $region31: #{tpu_custom_call.1} parent=1 // pred_check_branch
      %53 = sbr.rel (0) target = $region33
    $region32: #{tpu_custom_call.1} parent=1 // pred_region
      _
    $region33: #{tpu_custom_call.1} parent=1 // pred_fallthru
      _
    // Predicated region
    $region34: #{tpu_custom_call.1} parent=1 // pred_check
      _
    $region35: #{tpu_custom_call.1} parent=1 // pred_check_branch
      %55 = sbr.rel (0) target = $region37
    $region36: #{tpu_custom_call.1} parent=1 // pred_region
      _
    $region37: #{tpu_custom_call.1} parent=1 // pred_fallthru
      _
    // Predicated region
    $region38: #{tpu_custom_call.1} parent=1 // pred_check
      _
    $region39: #{tpu_custom_call.1} parent=1 // pred_check_branch
      %57 = sbr.rel (0) target = $region41
    $region40: #{tpu_custom_call.1} parent=1 // pred_region
      _
    $region41: #{tpu_custom_call.1} parent=1 // pred_fallthru
      _
    // Predicated region
    $region42: #{tpu_custom_call.1} parent=1 // pred_check
      _
    $region43: #{tpu_custom_call.1} parent=1 // pred_check_branch
      %59 = sbr.rel (0) target = $region45
    $region44: #{tpu_custom_call.1} parent=1 // pred_region
      %60 = dma.done [#allocation3], 8192
    $region45: #{tpu_custom_call.1} parent=1 // pred_fallthru
      _
    // Predicated region
    $region46: #{tpu_custom_call.1} parent=1 // pred_check
      _
    $region47: #{tpu_custom_call.1} parent=1 // pred_check_branch
      %62 = sbr.rel (0) target = $region49
    $region48: #{tpu_custom_call.1} parent=1 // pred_region
      %63 = dma.done [#allocation6], 2560
    $region49: #{tpu_custom_call.1} parent=1 // pred_fallthru
      _
    %v65 = vld [vmem:[%s0] sm:$0xff]
    %v66 = vld [vmem:[%s0 + $0x8] sm:$0xff]
    %v67 = vld [vmem:[%s0 + $0x10] sm:$0xff]
    %v68 = vld [vmem:[%s0 + $0x18] sm:$0xff]
    %v69 = vld [vmem:[%s0 + $0x20] sm:$0xff]
    %v70 = vld [vmem:[%s0 + $0x28] sm:$0xff]
    %v71 = vld [vmem:[%s0 + $0x30] sm:$0xff]
    %v72 = vld [vmem:[%s0 + $0x38] sm:$0xff]
    %v73 = vld [vmem:[%s0 + $0x40] sm:$0xff]
    %v74 = vld [vmem:[%s0 + $0x48] sm:$0xff]
    %v75 = vld [vmem:[%s0 + $0x50] sm:$0xff]
    %v76 = vld [vmem:[%s0 + $0x58] sm:$0xff]
    %v77 = vld [vmem:[%s0 + $0x60] sm:$0xff]
    %v78 = vld [vmem:[%s0 + $0x68] sm:$0xff]
    %v79 = vld [vmem:[%s0 + $0x70] sm:$0xff]
    %v80 = vld [vmem:[%s0 + $0x78] sm:$0xff]
    %v81 = vld [vmem:[%s0 + $0x80] sm:$0xff]
    %v82 = vld [vmem:[%s0 + $0x88] sm:$0xff]
    %v83 = vld [vmem:[%s0 + $0x90] sm:$0xff]
    %v84 = vld [vmem:[%s0 + $0x98] sm:$0xff]
    %v85 = vld [vmem:[%s0 + $0xa0] sm:$0xff]
    %v86 = vld [vmem:[%s0 + $0xa8] sm:$0xff]
    %v87 = vld [vmem:[%s0 + $0xb0] sm:$0xff]
    %v88 = vld [vmem:[%s0 + $0xb8] sm:$0xff]
    %v89 = vld [vmem:[%s0 + $0xc0] sm:$0xff]
    %v90 = vld [vmem:[%s0 + $0xc8] sm:$0xff]
    %v91 = vld [vmem:[%s0 + $0xd0] sm:$0xff]
    %v92 = vld [vmem:[%s0 + $0xd8] sm:$0xff]
    %v93 = vld [vmem:[%s0 + $0xe0] sm:$0xff]
    %v94 = vld [vmem:[%s0 + $0xe8] sm:$0xff]
    %v95 = vld [vmem:[%s0 + $0xf0] sm:$0xff]
    %v96 = vld [vmem:[%s0 + $0xf8] sm:$0xff]
    %v97 = vpack.c.bf16 %v69, %v65
    %v98 = vpack.c.bf16 %v70, %v66
    %v99 = vpack.c.bf16 %v71, %v67
    %v100 = vpack.c.bf16 %v72, %v68
    %v101 = vpack.c.bf16 %v77, %v73
    %v102 = vpack.c.bf16 %v78, %v74
    %v103 = vpack.c.bf16 %v79, %v75
    %v104 = vpack.c.bf16 %v80, %v76
    %v105 = vpack.c.bf16 %v85, %v81
    %v106 = vpack.c.bf16 %v86, %v82
    %v107 = vpack.c.bf16 %v87, %v83
    %v108 = vpack.c.bf16 %v88, %v84
    %v109 = vpack.c.bf16 %v93, %v89
    %v110 = vpack.c.bf16 %v94, %v90
    %v111 = vpack.c.bf16 %v95, %v91
    %v112 = vpack.c.bf16 %v96, %v92
    %v113 = vld [vmem:[#allocation2] sm:$0xff]
    %v114 = vld [vmem:[#allocation2 + $0x8] sm:$0xff]
    %v115 = vld [vmem:[#allocation2 + $0x10] sm:$0xff]
    %v116 = vld [vmem:[#allocation2 + $0x18] sm:$0xff]
    %v117 = vld [vmem:[#allocation2 + $0x20] sm:$0xff]
    %v118 = vld [vmem:[#allocation2 + $0x28] sm:$0xff]
    %v119 = vld [vmem:[#allocation2 + $0x30] sm:$0xff]
    %v120 = vld [vmem:[#allocation2 + $0x38] sm:$0xff]
    %v121 = vld [vmem:[#allocation2 + $0x40] sm:$0xff]
    %v122 = vld [vmem:[#allocation2 + $0x48] sm:$0xff]
    %v123 = vld [vmem:[#allocation2 + $0x50] sm:$0xff]
    %v124 = vld [vmem:[#allocation2 + $0x58] sm:$0xff]
    %v125 = vld [vmem:[#allocation2 + $0x60] sm:$0xff]
    %v126 = vld [vmem:[#allocation2 + $0x68] sm:$0xff]
    %v127 = vld [vmem:[#allocation2 + $0x70] sm:$0xff]
    %v128 = vld [vmem:[#allocation2 + $0x78] sm:$0xff]
    %v129 = vld [vmem:[#allocation2 + $0x80] sm:$0xff]
    %v130 = vld [vmem:[#allocation2 + $0x88] sm:$0xff]
    %v131 = vld [vmem:[#allocation2 + $0x90] sm:$0xff]
    %v132 = vld [vmem:[#allocation2 + $0x98] sm:$0xff]
    %v133 = vld [vmem:[#allocation2 + $0xa0] sm:$0xff]
    %v134 = vld [vmem:[#allocation2 + $0xa8] sm:$0xff]
    %v135 = vld [vmem:[#allocation2 + $0xb0] sm:$0xff]
    %v136 = vld [vmem:[#allocation2 + $0xb8] sm:$0xff]
    %v137 = vld [vmem:[#allocation2 + $0xc0] sm:$0xff]
    %v138 = vld [vmem:[#allocation2 + $0xc8] sm:$0xff]
    %v139 = vld [vmem:[#allocation2 + $0xd0] sm:$0xff]
    %v140 = vld [vmem:[#allocation2 + $0xd8] sm:$0xff]
    %v141 = vld [vmem:[#allocation2 + $0xe0] sm:$0xff]
    %v142 = vld [vmem:[#allocation2 + $0xe8] sm:$0xff]
    %v143 = vld [vmem:[#allocation2 + $0xf0] sm:$0xff]
    %v144 = vld [vmem:[#allocation2 + $0xf8] sm:$0xff]
    %v145 = vld [vmem:[#allocation2 + $0x100] sm:$0xff]
    %v146 = vld [vmem:[#allocation2 + $0x108] sm:$0xff]
    %v147 = vld [vmem:[#allocation2 + $0x110] sm:$0xff]
    %v148 = vld [vmem:[#allocation2 + $0x118] sm:$0xff]
    %v149 = vld [vmem:[#allocation2 + $0x120] sm:$0xff]
    %v150 = vld [vmem:[#allocation2 + $0x128] sm:$0xff]
    %v151 = vld [vmem:[#allocation2 + $0x130] sm:$0xff]
    %v152 = vld [vmem:[#allocation2 + $0x138] sm:$0xff]
    %v153 = vld [vmem:[#allocation2 + $0x140] sm:$0xff]
    %v154 = vld [vmem:[#allocation2 + $0x148] sm:$0xff]
    %v155 = vld [vmem:[#allocation2 + $0x150] sm:$0xff]
    %v156 = vld [vmem:[#allocation2 + $0x158] sm:$0xff]
    %v157 = vld [vmem:[#allocation2 + $0x160] sm:$0xff]
    %v158 = vld [vmem:[#allocation2 + $0x168] sm:$0xff]
    %v159 = vld [vmem:[#allocation2 + $0x170] sm:$0xff]
    %v160 = vld [vmem:[#allocation2 + $0x178] sm:$0xff]
    %v161 = vld [vmem:[#allocation2 + $0x180] sm:$0xff]
    %v162 = vld [vmem:[#allocation2 + $0x188] sm:$0xff]
    %v163 = vld [vmem:[#allocation2 + $0x190] sm:$0xff]
    %v164 = vld [vmem:[#allocation2 + $0x198] sm:$0xff]
    %v165 = vld [vmem:[#allocation2 + $0x1a0] sm:$0xff]
    %v166 = vld [vmem:[#allocation2 + $0x1a8] sm:$0xff]
    %v167 = vld [vmem:[#allocation2 + $0x1b0] sm:$0xff]
    %v168 = vld [vmem:[#allocation2 + $0x1b8] sm:$0xff]
    %v169 = vld [vmem:[#allocation2 + $0x1c0] sm:$0xff]
    %v170 = vld [vmem:[#allocation2 + $0x1c8] sm:$0xff]
    %v171 = vld [vmem:[#allocation2 + $0x1d0] sm:$0xff]
    %v172 = vld [vmem:[#allocation2 + $0x1d8] sm:$0xff]
    %v173 = vld [vmem:[#allocation2 + $0x1e0] sm:$0xff]
    %v174 = vld [vmem:[#allocation2 + $0x1e8] sm:$0xff]
    %v175 = vld [vmem:[#allocation2 + $0x1f0] sm:$0xff]
    %v176 = vld [vmem:[#allocation2 + $0x1f8] sm:$0xff]
    %v177 = vld [vmem:[%s2] sm:$0xf]
    %v178 = vld [vmem:[%s2 + $0x4] sm:$0xf]
    %v179 = vld [vmem:[%s2 + $0x8] sm:$0xf]
    %v180 = vld [vmem:[%s2 + $0xc] sm:$0xf]
    %v181 = vld [vmem:[%s2 + $0x10] sm:$0xf]
    %v182 = vld [vmem:[%s2 + $0x14] sm:$0xf]
    %v183 = vld [vmem:[%s2 + $0x18] sm:$0xf]
    %v184 = vld [vmem:[%s2 + $0x1c] sm:$0xf]
    %v185 = vld [vmem:[#allocation5] sm:$0xff]
    %v186 = vld [vmem:[#allocation5 + $0x8] sm:$0xff]
    %v187 = vld [vmem:[#allocation5 + $0x10] sm:$0xf]
    %v188 = vld [vmem:[#allocation5 + $0x14] sm:$0xff]
    %v189 = vld [vmem:[#allocation5 + $0x1c] sm:$0xff]
    %v190 = vld [vmem:[#allocation5 + $0x24] sm:$0xf]
    %v191 = vld [vmem:[#allocation5 + $0x28] sm:$0xff]
    %v192 = vld [vmem:[#allocation5 + $0x30] sm:$0xff]
    %v193 = vld [vmem:[#allocation5 + $0x38] sm:$0xf]
    %v194 = vld [vmem:[#allocation5 + $0x3c] sm:$0xff]
    %v195 = vld [vmem:[#allocation5 + $0x44] sm:$0xff]
    %v196 = vld [vmem:[#allocation5 + $0x4c] sm:$0xf]
    %v197 = vld [vmem:[#allocation5 + $0x50] sm:$0xff]
    %v198 = vld [vmem:[#allocation5 + $0x58] sm:$0xff]
    %v199 = vld [vmem:[#allocation5 + $0x60] sm:$0xf]
    %v200 = vld [vmem:[#allocation5 + $0x64] sm:$0xff]
    %v201 = vld [vmem:[#allocation5 + $0x6c] sm:$0xff]
    %v202 = vld [vmem:[#allocation5 + $0x74] sm:$0xf]
    %v203 = vld [vmem:[#allocation5 + $0x78] sm:$0xff]
    %v204 = vld [vmem:[#allocation5 + $0x80] sm:$0xff]
    %v205 = vld [vmem:[#allocation5 + $0x88] sm:$0xf]
    %v206 = vld [vmem:[#allocation5 + $0x8c] sm:$0xff]
    %v207 = vld [vmem:[#allocation5 + $0x94] sm:$0xff]
    %v208 = vld [vmem:[#allocation5 + $0x9c] sm:$0xf]
    %v209 = vld [vmem:[%s4] sm:$0xf]
    %v210 = vld [vmem:[%s4 + $0x4] sm:$0xf]
    %v211 = vld [vmem:[%s4 + $0x8] sm:$0xf]
    %v212 = vld [vmem:[%s4 + $0xc] sm:$0xf]
    %v213 = vld [vmem:[%s4 + $0x10] sm:$0xf]
    %v214 = vld [vmem:[%s4 + $0x14] sm:$0xf]
    %v215 = vld [vmem:[%s4 + $0x18] sm:$0xf]
    %v216 = vld [vmem:[%s4 + $0x1c] sm:$0xf]
    %v217 = vld [vmem:[%s5] sm:$0xff]
    %v218 = vld [vmem:[%s5 + $0x8] sm:$0xff]
    %v219 = vld [vmem:[%s5 + $0x10] sm:$0xff]
    %v220 = vld [vmem:[%s5 + $0x18] sm:$0xff]
    %v221 = vld [vmem:[%s5 + $0x20] sm:$0xff]
    %v222 = vld [vmem:[%s5 + $0x28] sm:$0xff]
    %v223 = vld [vmem:[%s5 + $0x30] sm:$0xff]
    %v224 = vld [vmem:[%s5 + $0x38] sm:$0xff]
    %v225 = vld [vmem:[%s6] sm:$0xff]
    %v226 = vld [vmem:[%s6 + $0x8] sm:$0xff]
    %v227 = vld [vmem:[%s6 + $0x10] sm:$0xff]
    %v228 = vld [vmem:[%s6 + $0x18] sm:$0xff]
    %v229 = vld [vmem:[%s6 + $0x20] sm:$0xff]
    %v230 = vld [vmem:[%s6 + $0x28] sm:$0xff]
    %v231 = vld [vmem:[%s6 + $0x30] sm:$0xff]
    %v232 = vld [vmem:[%s6 + $0x38] sm:$0xff]
    %v233 = vld [vmem:[%s7] sm:$0xff]
    %v234 = vld [vmem:[%s7 + $0x8] sm:$0xff]
    %v235 = vld [vmem:[%s7 + $0x10] sm:$0xff]
    %v236 = vld [vmem:[%s7 + $0x18] sm:$0xff]
    %v237 = vld [vmem:[%s7 + $0x20] sm:$0xff]
    %v238 = vld [vmem:[%s7 + $0x28] sm:$0xff]
    %v239 = vld [vmem:[%s7 + $0x30] sm:$0xff]
    %v240 = vld [vmem:[%s7 + $0x38] sm:$0xff]
    %v241 = vld [vmem:[%s8] sm:$0xff]
    %v242 = vld [vmem:[%s8 + $0x8] sm:$0xff]
    %v243 = vld [vmem:[%s8 + $0x10] sm:$0xff]
    %v244 = vld [vmem:[%s8 + $0x18] sm:$0xff]
    %v245 = vld [vmem:[%s8 + $0x20] sm:$0xff]
    %v246 = vld [vmem:[%s8 + $0x28] sm:$0xff]
    %v247 = vld [vmem:[%s8 + $0x30] sm:$0xff]
    %v248 = vld [vmem:[%s8 + $0x38] sm:$0xff]
    %v249 = vld [vmem:[%s9] sm:$0xff]
    %v250 = vld [vmem:[%s9 + $0x8] sm:$0xff]
    %v251 = vld [vmem:[%s9 + $0x10] sm:$0xff]
    %v252 = vld [vmem:[%s9 + $0x18] sm:$0xff]
    %v253 = vld [vmem:[%s9 + $0x20] sm:$0xff]
    %v254 = vld [vmem:[%s9 + $0x28] sm:$0xff]
    %v255 = vld [vmem:[%s9 + $0x30] sm:$0xff]
    %v256 = vld [vmem:[%s9 + $0x38] sm:$0xff]
    %258 = vset.pattern.permute.xlu0 0
    %259 = vperm.xlu0 %258, %v217
    %v260 = vpop.permute.xlu0 %259
    %263 = vset.pattern.permute.xlu0 0
    %264 = vperm.xlu0 %263, %v218
    %v265 = vpop.permute.xlu0 %264
    %268 = vset.pattern.permute.xlu0 0
    %269 = vperm.xlu0 %268, %v219
    %v270 = vpop.permute.xlu0 %269
    %273 = vset.pattern.permute.xlu0 0
    %274 = vperm.xlu0 %273, %v220
    %v275 = vpop.permute.xlu0 %274
    %278 = vset.pattern.permute.xlu0 0
    %279 = vperm.xlu0 %278, %v221
    %v280 = vpop.permute.xlu0 %279
    %283 = vset.pattern.permute.xlu0 0
    %284 = vperm.xlu0 %283, %v222
    %v285 = vpop.permute.xlu0 %284
    %288 = vset.pattern.permute.xlu0 0
    %289 = vperm.xlu0 %288, %v223
    %v290 = vpop.permute.xlu0 %289
    %293 = vset.pattern.permute.xlu0 0
    %294 = vperm.xlu0 %293, %v224
    %v295 = vpop.permute.xlu0 %294
    %v305 = vunpack.c.l.b16 %v177
    %v306 = vunpack.c.l.b16 %v178
    %v307 = vunpack.c.l.b16 %v179
    %v308 = vunpack.c.l.b16 %v180
    %v309 = vunpack.c.l.b16 %v181
    %v310 = vunpack.c.l.b16 %v182
    %v311 = vunpack.c.l.b16 %v183
    %v312 = vunpack.c.l.b16 %v184
    %v313 = vpack.c.b16 %v306, %v305
    %v314 = vpack.c.b16 %v308, %v307
    %v315 = vpack.c.b16 %v310, %v309
    %v316 = vpack.c.b16 %v312, %v311
    %vm317 = vcmask 523264
    %v319 = vsel %vm317, %v313, 0
    %v322 = vsel %vm317, %v314, 0
    %v325 = vsel %vm317, %v315, 0
    %v328 = vsel %vm317, %v316, 0
    %330 = vmatprep.subr.bf16.mxu0 0
    %331 = vmatpush1.bf16.msra.mxu0 0
    %332 = vmatprep.subr.bf16.mxu0 0
    %333 = vmatpush1.bf16.msra.mxu0 0
    %334 = vmatprep.subr.bf16.mxu0 0
    %335 = vmatpush1.bf16.msra.mxu0 0
    %336 = vmatprep.subr.bf16.mxu0 0
    %337 = vmatpush1.bf16.msra.mxu0 0
    %338 = vmatprep.subr.bf16.mxu0 %v110
    %339 = vmatpush1.bf16.msra.mxu0 %v109
    %340 = vmatprep.subr.bf16.mxu0 %v106
    %341 = vmatpush1.bf16.msra.mxu0 %v105
    %342 = vmatprep.subr.bf16.mxu0 %v102
    %343 = vmatpush1.bf16.msra.mxu0 %v101
    %344 = vmatprep.subr.bf16.mxu0 %v98
    %345 = vmatpush1.bf16.msra.mxu0 %v97
    %346 = vmatprep.subr.bf16.mxu0 0
    %347 = vmatpush2.bf16.msra.mxu0 0
    %348 = vmatprep.subr.bf16.mxu0 0
    %349 = vmatpush2.bf16.msra.mxu0 0
    %350 = vmatprep.subr.bf16.mxu0 0
    %351 = vmatpush2.bf16.msra.mxu0 0
    %352 = vmatprep.subr.bf16.mxu0 0
    %353 = vmatpush2.bf16.msra.mxu0 0
    %354 = vmatprep.subr.bf16.mxu0 0
    %355 = vmatpush2.bf16.msra.mxu0 0
    %356 = vmatprep.subr.bf16.mxu0 0
    %357 = vmatpush2.bf16.msra.mxu0 0
    %358 = vmatprep.subr.bf16.mxu0 0
    %359 = vmatpush2.bf16.msra.mxu0 0
    %360 = vmatprep.subr.bf16.mxu0 0
    %361 = vmatpush2.bf16.msra.mxu0 0
    %362 = vmatprep.mubr.bf16.mxu0 0
    %363 = vmatmul.mubr.bf16.gmra.mxu0 %v319
    %v364 = vpop.f32.mrf.mxu0
    %v365 = vadd.f32 %v260, %v364
    %v366 = vpop.f32.mrf.mxu0
    %v367 = vadd.f32 %v260, %v366
    %v368 = vpop.f32.mrf.mxu0
    %v369 = vadd.f32 %v265, %v368
    %v370 = vpop.f32.mrf.mxu0
    %v371 = vadd.f32 %v265, %v370
    %372 = vmatprep.mubr.bf16.mxu0 0
    %373 = vmatmul.mubr.bf16.gmra.mxu0 %v322
    %v374 = vpop.f32.mrf.mxu0
    %v375 = vadd.f32 %v270, %v374
    %v376 = vpop.f32.mrf.mxu0
    %v377 = vadd.f32 %v270, %v376
    %v378 = vpop.f32.mrf.mxu0
    %v379 = vadd.f32 %v275, %v378
    %v380 = vpop.f32.mrf.mxu0
    %v381 = vadd.f32 %v275, %v380
    %382 = vmatprep.mubr.bf16.mxu0 0
    %383 = vmatmul.mubr.bf16.gmra.mxu0 %v325
    %v384 = vpop.f32.mrf.mxu0
    %v385 = vadd.f32 %v280, %v384
    %v386 = vpop.f32.mrf.mxu0
    %v387 = vadd.f32 %v280, %v386
    %v388 = vpop.f32.mrf.mxu0
    %v389 = vadd.f32 %v285, %v388
    %v390 = vpop.f32.mrf.mxu0
    %v391 = vadd.f32 %v285, %v390
    %392 = vmatprep.mubr.bf16.mxu0 0
    %393 = vmatmul.mubr.bf16.gmra.mxu0 %v328
    %v394 = vpop.f32.mrf.mxu0
    %v395 = vadd.f32 %v290, %v394
    %v396 = vpop.f32.mrf.mxu0
    %v397 = vadd.f32 %v290, %v396
    %v398 = vpop.f32.mrf.mxu0
    %v399 = vadd.f32 %v295, %v398
    %v400 = vpop.f32.mrf.mxu0
    %v401 = vadd.f32 %v295, %v400
    %402 = vdwg.mxu0
    %403 = vmatprep.subr.bf16.mxu0 0
    %404 = vmatpush1.bf16.msra.mxu0 0
    %405 = vmatprep.subr.bf16.mxu0 0
    %406 = vmatpush1.bf16.msra.mxu0 0
    %407 = vmatprep.subr.bf16.mxu0 0
    %408 = vmatpush1.bf16.msra.mxu0 0
    %409 = vmatprep.subr.bf16.mxu0 0
    %410 = vmatpush1.bf16.msra.mxu0 0
    %411 = vmatprep.subr.bf16.mxu0 %v112
    %412 = vmatpush1.bf16.msra.mxu0 %v111
    %413 = vmatprep.subr.bf16.mxu0 %v108
    %414 = vmatpush1.bf16.msra.mxu0 %v107
    %415 = vmatprep.subr.bf16.mxu0 %v104
    %416 = vmatpush1.bf16.msra.mxu0 %v103
    %417 = vmatprep.subr.bf16.mxu0 %v100
    %418 = vmatpush1.bf16.msra.mxu0 %v99
    %419 = vmatprep.subr.bf16.mxu0 0
    %420 = vmatpush2.bf16.msra.mxu0 0
    %421 = vmatprep.subr.bf16.mxu0 0
    %422 = vmatpush2.bf16.msra.mxu0 0
    %423 = vmatprep.subr.bf16.mxu0 0
    %424 = vmatpush2.bf16.msra.mxu0 0
    %425 = vmatprep.subr.bf16.mxu0 0
    %426 = vmatpush2.bf16.msra.mxu0 0
    %427 = vmatprep.subr.bf16.mxu0 0
    %428 = vmatpush2.bf16.msra.mxu0 0
    %429 = vmatprep.subr.bf16.mxu0 0
    %430 = vmatpush2.bf16.msra.mxu0 0
    %431 = vmatprep.subr.bf16.mxu0 0
    %432 = vmatpush2.bf16.msra.mxu0 0
    %433 = vmatprep.subr.bf16.mxu0 0
    %434 = vmatpush2.bf16.msra.mxu0 0
    %435 = vmatprep.mubr.bf16.mxu0 0
    %436 = vmatmul.mubr.bf16.gmra.mxu0 %v319
    %v437 = vpop.f32.mrf.mxu0
    %v438 = vadd.f32 %v260, %v437
    %v439 = vpop.f32.mrf.mxu0
    %v440 = vadd.f32 %v260, %v439
    %v441 = vpop.f32.mrf.mxu0
    %v442 = vadd.f32 %v265, %v441
    %v443 = vpop.f32.mrf.mxu0
    %v444 = vadd.f32 %v265, %v443
    %445 = vmatprep.mubr.bf16.mxu0 0
    %446 = vmatmul.mubr.bf16.gmra.mxu0 %v322
    %v447 = vpop.f32.mrf.mxu0
    %v448 = vadd.f32 %v270, %v447
    %v449 = vpop.f32.mrf.mxu0
    %v450 = vadd.f32 %v270, %v449
    %v451 = vpop.f32.mrf.mxu0
    %v452 = vadd.f32 %v275, %v451
    %v453 = vpop.f32.mrf.mxu0
    %v454 = vadd.f32 %v275, %v453
    %455 = vmatprep.mubr.bf16.mxu0 0
    %456 = vmatmul.mubr.bf16.gmra.mxu0 %v325
    %v457 = vpop.f32.mrf.mxu0
    %v458 = vadd.f32 %v280, %v457
    %v459 = vpop.f32.mrf.mxu0
    %v460 = vadd.f32 %v280, %v459
    %v461 = vpop.f32.mrf.mxu0
    %v462 = vadd.f32 %v285, %v461
    %v463 = vpop.f32.mrf.mxu0
    %v464 = vadd.f32 %v285, %v463
    %465 = vmatprep.mubr.bf16.mxu0 0
    %466 = vmatmul.mubr.bf16.gmra.mxu0 %v328
    %v467 = vpop.f32.mrf.mxu0
    %v468 = vadd.f32 %v290, %v467
    %v469 = vpop.f32.mrf.mxu0
    %v470 = vadd.f32 %v290, %v469
    %v471 = vpop.f32.mrf.mxu0
    %v472 = vadd.f32 %v295, %v471
    %v473 = vpop.f32.mrf.mxu0
    %v474 = vadd.f32 %v295, %v473
    %475 = vdwg.mxu0
    %476 = vmatprep.subr.mxu0 %v144
    %477 = vmatpush1.msra.mxu0 %v143
    %478 = vmatprep.subr.mxu0 %v142
    %479 = vmatpush1.msra.mxu0 %v141
    %480 = vmatprep.subr.mxu0 %v140
    %481 = vmatpush1.msra.mxu0 %v139
    %482 = vmatprep.subr.mxu0 %v138
    %483 = vmatpush1.msra.mxu0 %v137
    %484 = vmatprep.subr.mxu0 %v136
    %485 = vmatpush1.msra.mxu0 %v135
    %486 = vmatprep.subr.mxu0 %v134
    %487 = vmatpush1.msra.mxu0 %v133
    %488 = vmatprep.subr.mxu0 %v132
    %489 = vmatpush1.msra.mxu0 %v131
    %490 = vmatprep.subr.mxu0 %v130
    %491 = vmatpush1.msra.mxu0 %v129
    %492 = vmatprep.subr.mxu0 %v128
    %493 = vmatpush1.msra.mxu0 %v127
    %494 = vmatprep.subr.mxu0 %v126
    %495 = vmatpush1.msra.mxu0 %v125
    %496 = vmatprep.subr.mxu0 %v124
    %497 = vmatpush1.msra.mxu0 %v123
    %498 = vmatprep.subr.mxu0 %v122
    %499 = vmatpush1.msra.mxu0 %v121
    %500 = vmatprep.subr.mxu0 %v120
    %501 = vmatpush1.msra.mxu0 %v119
    %502 = vmatprep.subr.mxu0 %v118
    %503 = vmatpush1.msra.mxu0 %v117
    %504 = vmatprep.subr.mxu0 %v116
    %505 = vmatpush1.msra.mxu0 %v115
    %506 = vmatprep.subr.mxu0 %v114
    %507 = vmatpush1.msra.mxu0 %v113
    %508 = vmatprep.subr.mxu0 %v176
    %509 = vmatpush2.msra.mxu0 %v175
    %510 = vmatprep.subr.mxu0 %v174
    %511 = vmatpush2.msra.mxu0 %v173
    %512 = vmatprep.subr.mxu0 %v172
    %513 = vmatpush2.msra.mxu0 %v171
    %514 = vmatprep.subr.mxu0 %v170
    %515 = vmatpush2.msra.mxu0 %v169
    %516 = vmatprep.subr.mxu0 %v168
    %517 = vmatpush2.msra.mxu0 %v167
    %518 = vmatprep.subr.mxu0 %v166
    %519 = vmatpush2.msra.mxu0 %v165
    %520 = vmatprep.subr.mxu0 %v164
    %521 = vmatpush2.msra.mxu0 %v163
    %522 = vmatprep.subr.mxu0 %v162
    %523 = vmatpush2.msra.mxu0 %v161
    %524 = vmatprep.subr.mxu0 %v160
    %525 = vmatpush2.msra.mxu0 %v159
    %526 = vmatprep.subr.mxu0 %v158
    %527 = vmatpush2.msra.mxu0 %v157
    %528 = vmatprep.subr.mxu0 %v156
    %529 = vmatpush2.msra.mxu0 %v155
    %530 = vmatprep.subr.mxu0 %v154
    %531 = vmatpush2.msra.mxu0 %v153
    %532 = vmatprep.subr.mxu0 %v152
    %533 = vmatpush2.msra.mxu0 %v151
    %534 = vmatprep.subr.mxu0 %v150
    %535 = vmatpush2.msra.mxu0 %v149
    %536 = vmatprep.subr.mxu0 %v148
    %537 = vmatpush2.msra.mxu0 %v147
    %538 = vmatprep.subr.mxu0 %v146
    %539 = vmatpush2.msra.mxu0 %v145
    %540 = vmatprep.mubr.f32.mxu0 %v66
    %541 = vmatmul.mubr.f32.gmra.mxu0 %v65
    %v542 = vpop.f32.mrf.mxu0
    %v543 = vadd.f32 0.0, %v542
    %v544 = vpop.f32.mrf.mxu0
    %v545 = vadd.f32 0.0, %v544
    %546 = vmatprep.mubr.f32.mxu0 %v70
    %547 = vmatmul.mubr.f32.gmra.mxu0 %v69
    %v548 = vpop.f32.mrf.mxu0
    %v549 = vadd.f32 0.0, %v548
    %v550 = vpop.f32.mrf.mxu0
    %v551 = vadd.f32 0.0, %v550
    %552 = vmatprep.mubr.f32.mxu0 %v74
    %553 = vmatmul.mubr.f32.gmra.mxu0 %v73
    %v554 = vpop.f32.mrf.mxu0
    %v555 = vadd.f32 0.0, %v554
    %v556 = vpop.f32.mrf.mxu0
    %v557 = vadd.f32 0.0, %v556
    %558 = vmatprep.mubr.f32.mxu0 %v78
    %559 = vmatmul.mubr.f32.gmra.mxu0 %v77
    %v560 = vpop.f32.mrf.mxu0
    %v561 = vadd.f32 0.0, %v560
    %v562 = vpop.f32.mrf.mxu0
    %v563 = vadd.f32 0.0, %v562
    %564 = vmatprep.mubr.f32.mxu0 %v82
    %565 = vmatmul.mubr.f32.gmra.mxu0 %v81
    %v566 = vpop.f32.mrf.mxu0
    %v567 = vadd.f32 0.0, %v566
    %v568 = vpop.f32.mrf.mxu0
    %v569 = vadd.f32 0.0, %v568
    %570 = vmatprep.mubr.f32.mxu0 %v86
    %571 = vmatmul.mubr.f32.gmra.mxu0 %v85
    %v572 = vpop.f32.mrf.mxu0
    %v573 = vadd.f32 0.0, %v572
    %v574 = vpop.f32.mrf.mxu0
    %v575 = vadd.f32 0.0, %v574
    %576 = vmatprep.mubr.f32.mxu0 %v90
    %577 = vmatmul.mubr.f32.gmra.mxu0 %v89
    %v578 = vpop.f32.mrf.mxu0
    %v579 = vadd.f32 0.0, %v578
    %v580 = vpop.f32.mrf.mxu0
    %v581 = vadd.f32 0.0, %v580
    %582 = vmatprep.mubr.f32.mxu0 %v94
    %583 = vmatmul.mubr.f32.gmra.mxu0 %v93
    %v584 = vpop.f32.mrf.mxu0
    %v585 = vadd.f32 0.0, %v584
    %v586 = vpop.f32.mrf.mxu0
    %v587 = vadd.f32 0.0, %v586
    %588 = vdwg.mxu0
    %589 = vmatprep.subr.mxu0 %v144
    %590 = vmatpush1.msra.mxu0 %v143
    %591 = vmatprep.subr.mxu0 %v142
    %592 = vmatpush1.msra.mxu0 %v141
    %593 = vmatprep.subr.mxu0 %v140
    %594 = vmatpush1.msra.mxu0 %v139
    %595 = vmatprep.subr.mxu0 %v138
    %596 = vmatpush1.msra.mxu0 %v137
    %597 = vmatprep.subr.mxu0 %v136
    %598 = vmatpush1.msra.mxu0 %v135
    %599 = vmatprep.subr.mxu0 %v134
    %600 = vmatpush1.msra.mxu0 %v133
    %601 = vmatprep.subr.mxu0 %v132
    %602 = vmatpush1.msra.mxu0 %v131
    %603 = vmatprep.subr.mxu0 %v130
    %604 = vmatpush1.msra.mxu0 %v129
    %605 = vmatprep.subr.mxu0 %v128
    %606 = vmatpush1.msra.mxu0 %v127
    %607 = vmatprep.subr.mxu0 %v126
    %608 = vmatpush1.msra.mxu0 %v125
    %609 = vmatprep.subr.mxu0 %v124
    %610 = vmatpush1.msra.mxu0 %v123
    %611 = vmatprep.subr.mxu0 %v122
    %612 = vmatpush1.msra.mxu0 %v121
    %613 = vmatprep.subr.mxu0 %v120
    %614 = vmatpush1.msra.mxu0 %v119
    %615 = vmatprep.subr.mxu0 %v118
    %616 = vmatpush1.msra.mxu0 %v117
    %617 = vmatprep.subr.mxu0 %v116
    %618 = vmatpush1.msra.mxu0 %v115
    %619 = vmatprep.subr.mxu0 %v114
    %620 = vmatpush1.msra.mxu0 %v113
    %621 = vmatprep.subr.mxu0 %v176
    %622 = vmatpush2.msra.mxu0 %v175
    %623 = vmatprep.subr.mxu0 %v174
    %624 = vmatpush2.msra.mxu0 %v173
    %625 = vmatprep.subr.mxu0 %v172
    %626 = vmatpush2.msra.mxu0 %v171
    %627 = vmatprep.subr.mxu0 %v170
    %628 = vmatpush2.msra.mxu0 %v169
    %629 = vmatprep.subr.mxu0 %v168
    %630 = vmatpush2.msra.mxu0 %v167
    %631 = vmatprep.subr.mxu0 %v166
    %632 = vmatpush2.msra.mxu0 %v165
    %633 = vmatprep.subr.mxu0 %v164
    %634 = vmatpush2.msra.mxu0 %v163
    %635 = vmatprep.subr.mxu0 %v162
    %636 = vmatpush2.msra.mxu0 %v161
    %637 = vmatprep.subr.mxu0 %v160
    %638 = vmatpush2.msra.mxu0 %v159
    %639 = vmatprep.subr.mxu0 %v158
    %640 = vmatpush2.msra.mxu0 %v157
    %641 = vmatprep.subr.mxu0 %v156
    %642 = vmatpush2.msra.mxu0 %v155
    %643 = vmatprep.subr.mxu0 %v154
    %644 = vmatpush2.msra.mxu0 %v153
    %645 = vmatprep.subr.mxu0 %v152
    %646 = vmatpush2.msra.mxu0 %v151
    %647 = vmatprep.subr.mxu0 %v150
    %648 = vmatpush2.msra.mxu0 %v149
    %649 = vmatprep.subr.mxu0 %v148
    %650 = vmatpush2.msra.mxu0 %v147
    %651 = vmatprep.subr.mxu0 %v146
    %652 = vmatpush2.msra.mxu0 %v145
    %653 = vmatprep.mubr.f32.mxu0 %v68
    %654 = vmatmul.mubr.f32.gmra.mxu0 %v67
    %v655 = vpop.f32.mrf.mxu0
    %v656 = vadd.f32 0.0, %v655
    %v657 = vpop.f32.mrf.mxu0
    %v658 = vadd.f32 0.0, %v657
    %659 = vmatprep.mubr.f32.mxu0 %v72
    %660 = vmatmul.mubr.f32.gmra.mxu0 %v71
    %v661 = vpop.f32.mrf.mxu0
    %v662 = vadd.f32 0.0, %v661
    %v663 = vpop.f32.mrf.mxu0
    %v664 = vadd.f32 0.0, %v663
    %665 = vmatprep.mubr.f32.mxu0 %v76
    %666 = vmatmul.mubr.f32.gmra.mxu0 %v75
    %v667 = vpop.f32.mrf.mxu0
    %v668 = vadd.f32 0.0, %v667
    %v669 = vpop.f32.mrf.mxu0
    %v670 = vadd.f32 0.0, %v669
    %671 = vmatprep.mubr.f32.mxu0 %v80
    %672 = vmatmul.mubr.f32.gmra.mxu0 %v79
    %v673 = vpop.f32.mrf.mxu0
    %v674 = vadd.f32 0.0, %v673
    %v675 = vpop.f32.mrf.mxu0
    %v676 = vadd.f32 0.0, %v675
    %677 = vmatprep.mubr.f32.mxu0 %v84
    %678 = vmatmul.mubr.f32.gmra.mxu0 %v83
    %v679 = vpop.f32.mrf.mxu0
    %v680 = vadd.f32 0.0, %v679
    %v681 = vpop.f32.mrf.mxu0
    %v682 = vadd.f32 0.0, %v681
    %683 = vmatprep.mubr.f32.mxu0 %v88
    %684 = vmatmul.mubr.f32.gmra.mxu0 %v87
    %v685 = vpop.f32.mrf.mxu0
    %v686 = vadd.f32 0.0, %v685
    %v687 = vpop.f32.mrf.mxu0
    %v688 = vadd.f32 0.0, %v687
    %689 = vmatprep.mubr.f32.mxu0 %v92
    %690 = vmatmul.mubr.f32.gmra.mxu0 %v91
    %v691 = vpop.f32.mrf.mxu0
    %v692 = vadd.f32 0.0, %v691
    %v693 = vpop.f32.mrf.mxu0
    %v694 = vadd.f32 0.0, %v693
    %695 = vmatprep.mubr.f32.mxu0 %v96
    %696 = vmatmul.mubr.f32.gmra.mxu0 %v95
    %v697 = vpop.f32.mrf.mxu0
    %v698 = vadd.f32 0.0, %v697
    %v699 = vpop.f32.mrf.mxu0
    %v700 = vadd.f32 0.0, %v699
    %701 = vdwg.mxu0
    %v702 = vadd.f32 %v543, %v545
    %v703 = vadd.f32 %v702, %v656
    %v704 = vadd.f32 %v703, %v658
    %705 = vadd.xlane.f32.xlu0 %v704
    %v706 = vpop.xlane.xlu0 %705
    %v707 = vadd.f32 %v549, %v551
    %v708 = vadd.f32 %v707, %v662
    %v709 = vadd.f32 %v708, %v664
    %710 = vadd.xlane.f32.xlu0 %v709
    %v711 = vpop.xlane.xlu0 %710
    %v712 = vadd.f32 %v555, %v557
    %v713 = vadd.f32 %v712, %v668
    %v714 = vadd.f32 %v713, %v670
    %715 = vadd.xlane.f32.xlu0 %v714
    %v716 = vpop.xlane.xlu0 %715
    %v717 = vadd.f32 %v561, %v563
    %v718 = vadd.f32 %v717, %v674
    %v719 = vadd.f32 %v718, %v676
    %720 = vadd.xlane.f32.xlu0 %v719
    %v721 = vpop.xlane.xlu0 %720
    %v722 = vadd.f32 %v567, %v569
    %v723 = vadd.f32 %v722, %v680
    %v724 = vadd.f32 %v723, %v682
    %725 = vadd.xlane.f32.xlu0 %v724
    %v726 = vpop.xlane.xlu0 %725
    %v727 = vadd.f32 %v573, %v575
    %v728 = vadd.f32 %v727, %v686
    %v729 = vadd.f32 %v728, %v688
    %730 = vadd.xlane.f32.xlu0 %v729
    %v731 = vpop.xlane.xlu0 %730
    %v732 = vadd.f32 %v579, %v581
    %v733 = vadd.f32 %v732, %v692
    %v734 = vadd.f32 %v733, %v694
    %735 = vadd.xlane.f32.xlu0 %v734
    %v736 = vpop.xlane.xlu0 %735
    %v737 = vadd.f32 %v585, %v587
    %v738 = vadd.f32 %v737, %v698
    %v739 = vadd.f32 %v738, %v700
    %740 = vadd.xlane.f32.xlu0 %v739
    %v741 = vpop.xlane.xlu0 %740
    %v742 = vrcp.pop 512.0
    %v743 = vmul.f32 %v706, %v742
    %v744 = vmul.f32 %v711, %v742
    %v745 = vmul.f32 %v716, %v742
    %v746 = vmul.f32 %v721, %v742
    %v747 = vmul.f32 %v726, %v742
    %v748 = vmul.f32 %v731, %v742
    %v749 = vmul.f32 %v736, %v742
    %v750 = vmul.f32 %v741, %v742
    %v751 = vsub.f32 %v543, %v743
    %v752 = vsub.f32 %v545, %v743
    %v753 = vsub.f32 %v656, %v743
    %v754 = vsub.f32 %v658, %v743
    %v755 = vsub.f32 %v549, %v744
    %v756 = vsub.f32 %v551, %v744
    %v757 = vsub.f32 %v662, %v744
    %v758 = vsub.f32 %v664, %v744
    %v759 = vsub.f32 %v555, %v745
    %v760 = vsub.f32 %v557, %v745
    %v761 = vsub.f32 %v668, %v745
    %v762 = vsub.f32 %v670, %v745
    %v763 = vsub.f32 %v561, %v746
    %v764 = vsub.f32 %v563, %v746
    %v765 = vsub.f32 %v674, %v746
    %v766 = vsub.f32 %v676, %v746
    %v767 = vsub.f32 %v567, %v747
    %v768 = vsub.f32 %v569, %v747
    %v769 = vsub.f32 %v680, %v747
    %v770 = vsub.f32 %v682, %v747
    %v771 = vsub.f32 %v573, %v748
    %v772 = vsub.f32 %v575, %v748
    %v773 = vsub.f32 %v686, %v748
    %v774 = vsub.f32 %v688, %v748
    %v775 = vsub.f32 %v579, %v749
    %v776 = vsub.f32 %v581, %v749
    %v777 = vsub.f32 %v692, %v749
    %v778 = vsub.f32 %v694, %v749
    %v779 = vsub.f32 %v585, %v750
    %v780 = vsub.f32 %v587, %v750
    %v781 = vsub.f32 %v698, %v750
    %v782 = vsub.f32 %v700, %v750
    %v783 = vmul.f32 %v751, %v751
    %v784 = vmul.f32 %v752, %v752
    %v785 = vmul.f32 %v753, %v753
    %v786 = vmul.f32 %v754, %v754
    %v787 = vmul.f32 %v755, %v755
    %v788 = vmul.f32 %v756, %v756
    %v789 = vmul.f32 %v757, %v757
    %v790 = vmul.f32 %v758, %v758
    %v791 = vmul.f32 %v759, %v759
    %v792 = vmul.f32 %v760, %v760
    %v793 = vmul.f32 %v761, %v761
    %v794 = vmul.f32 %v762, %v762
    %v795 = vmul.f32 %v763, %v763
    %v796 = vmul.f32 %v764, %v764
    %v797 = vmul.f32 %v765, %v765
    %v798 = vmul.f32 %v766, %v766
    %v799 = vmul.f32 %v767, %v767
    %v800 = vmul.f32 %v768, %v768
    %v801 = vmul.f32 %v769, %v769
    %v802 = vmul.f32 %v770, %v770
    %v803 = vmul.f32 %v771, %v771
    %v804 = vmul.f32 %v772, %v772
    %v805 = vmul.f32 %v773, %v773
    %v806 = vmul.f32 %v774, %v774
    %v807 = vmul.f32 %v775, %v775
    %v808 = vmul.f32 %v776, %v776
    %v809 = vmul.f32 %v777, %v777
    %v810 = vmul.f32 %v778, %v778
    %v811 = vmul.f32 %v779, %v779
    %v812 = vmul.f32 %v780, %v780
    %v813 = vmul.f32 %v781, %v781
    %v814 = vmul.f32 %v782, %v782
    %v815 = vadd.f32 %v783, %v784
    %v816 = vadd.f32 %v815, %v785
    %v817 = vadd.f32 %v816, %v786
    %818 = vadd.xlane.f32.xlu0 %v817
    %v819 = vpop.xlane.xlu0 %818
    %v820 = vadd.f32 %v787, %v788
    %v821 = vadd.f32 %v820, %v789
    %v822 = vadd.f32 %v821, %v790
    %823 = vadd.xlane.f32.xlu0 %v822
    %v824 = vpop.xlane.xlu0 %823
    %v825 = vadd.f32 %v791, %v792
    %v826 = vadd.f32 %v825, %v793
    %v827 = vadd.f32 %v826, %v794
    %828 = vadd.xlane.f32.xlu0 %v827
    %v829 = vpop.xlane.xlu0 %828
    %v830 = vadd.f32 %v795, %v796
    %v831 = vadd.f32 %v830, %v797
    %v832 = vadd.f32 %v831, %v798
    %833 = vadd.xlane.f32.xlu0 %v832
    %v834 = vpop.xlane.xlu0 %833
    %v835 = vadd.f32 %v799, %v800
    %v836 = vadd.f32 %v835, %v801
    %v837 = vadd.f32 %v836, %v802
    %838 = vadd.xlane.f32.xlu0 %v837
    %v839 = vpop.xlane.xlu0 %838
    %v840 = vadd.f32 %v803, %v804
    %v841 = vadd.f32 %v840, %v805
    %v842 = vadd.f32 %v841, %v806
    %843 = vadd.xlane.f32.xlu0 %v842
    %v844 = vpop.xlane.xlu0 %843
    %v845 = vadd.f32 %v807, %v808
    %v846 = vadd.f32 %v845, %v809
    %v847 = vadd.f32 %v846, %v810
    %848 = vadd.xlane.f32.xlu0 %v847
    %v849 = vpop.xlane.xlu0 %848
    %v850 = vadd.f32 %v811, %v812
    %v851 = vadd.f32 %v850, %v813
    %v852 = vadd.f32 %v851, %v814
    %853 = vadd.xlane.f32.xlu0 %v852
    %v854 = vpop.xlane.xlu0 %853
    %v855 = vmul.f32 %v819, %v742
    %v856 = vmul.f32 %v824, %v742
    %v857 = vmul.f32 %v829, %v742
    %v858 = vmul.f32 %v834, %v742
    %v859 = vmul.f32 %v839, %v742
    %v860 = vmul.f32 %v844, %v742
    %v861 = vmul.f32 %v849, %v742
    %v862 = vmul.f32 %v854, %v742
    %v863 = vadd.f32 %v855, 1e-05
    %v864 = vadd.f32 %v856, 1e-05
    %v865 = vadd.f32 %v857, 1e-05
    %v866 = vadd.f32 %v858, 1e-05
    %v867 = vadd.f32 %v859, 1e-05
    %v868 = vadd.f32 %v860, 1e-05
    %v869 = vadd.f32 %v861, 1e-05
    %v870 = vadd.f32 %v862, 1e-05
    %v871 = vrsqrt.pop %v863
    %v872 = vrsqrt.pop %v864
    %v873 = vrsqrt.pop %v865
    %v874 = vrsqrt.pop %v866
    %v875 = vrsqrt.pop %v867
    %v876 = vrsqrt.pop %v868
    %v877 = vrsqrt.pop %v869
    %v878 = vrsqrt.pop %v870
    %v879 = vmul.f32 %v871, %v241
    %v880 = vmul.f32 %v872, %v242
    %v881 = vmul.f32 %v873, %v243
    %v882 = vmul.f32 %v874, %v244
    %v883 = vmul.f32 %v875, %v245
    %v884 = vmul.f32 %v876, %v246
    %v885 = vmul.f32 %v877, %v247
    %v886 = vmul.f32 %v878, %v248
    %888 = vset.pattern.permute.xlu0 0
    %889 = vperm.xlu0 %888, %v879
    %v890 = vpop.permute.xlu0 %889
    %893 = vset.pattern.permute.xlu0 0
    %894 = vperm.xlu0 %893, %v880
    %v895 = vpop.permute.xlu0 %894
    %898 = vset.pattern.permute.xlu0 0
    %899 = vperm.xlu0 %898, %v881
    %v900 = vpop.permute.xlu0 %899
    %903 = vset.pattern.permute.xlu0 0
    %904 = vperm.xlu0 %903, %v882
    %v905 = vpop.permute.xlu0 %904
    %908 = vset.pattern.permute.xlu0 0
    %909 = vperm.xlu0 %908, %v883
    %v910 = vpop.permute.xlu0 %909
    %913 = vset.pattern.permute.xlu0 0
    %914 = vperm.xlu0 %913, %v884
    %v915 = vpop.permute.xlu0 %914
    %918 = vset.pattern.permute.xlu0 0
    %919 = vperm.xlu0 %918, %v885
    %v920 = vpop.permute.xlu0 %919
    %923 = vset.pattern.permute.xlu0 0
    %924 = vperm.xlu0 %923, %v886
    %v925 = vpop.permute.xlu0 %924
    %v927 = vmul.f32 %v751, %v890
    %v928 = vmul.f32 %v752, %v890
    %v929 = vmul.f32 %v753, %v890
    %v930 = vmul.f32 %v754, %v890
    %v931 = vmul.f32 %v755, %v895
    %v932 = vmul.f32 %v756, %v895
    %v933 = vmul.f32 %v757, %v895
    %v934 = vmul.f32 %v758, %v895
    %v935 = vmul.f32 %v759, %v900
    %v936 = vmul.f32 %v760, %v900
    %v937 = vmul.f32 %v761, %v900
    %v938 = vmul.f32 %v762, %v900
    %v939 = vmul.f32 %v763, %v905
    %v940 = vmul.f32 %v764, %v905
    %v941 = vmul.f32 %v765, %v905
    %v942 = vmul.f32 %v766, %v905
    %v943 = vmul.f32 %v767, %v910
    %v944 = vmul.f32 %v768, %v910
    %v945 = vmul.f32 %v769, %v910
    %v946 = vmul.f32 %v770, %v910
    %v947 = vmul.f32 %v771, %v915
    %v948 = vmul.f32 %v772, %v915
    %v949 = vmul.f32 %v773, %v915
    %v950 = vmul.f32 %v774, %v915
    %v951 = vmul.f32 %v775, %v920
    %v952 = vmul.f32 %v776, %v920
    %v953 = vmul.f32 %v777, %v920
    %v954 = vmul.f32 %v778, %v920
    %v955 = vmul.f32 %v779, %v925
    %v956 = vmul.f32 %v780, %v925
    %v957 = vmul.f32 %v781, %v925
    %v958 = vmul.f32 %v782, %v925
    %960 = vset.pattern.permute.xlu0 0
    %961 = vperm.xlu0 %960, %v249
    %v962 = vpop.permute.xlu0 %961
    %965 = vset.pattern.permute.xlu0 0
    %966 = vperm.xlu0 %965, %v250
    %v967 = vpop.permute.xlu0 %966
    %970 = vset.pattern.permute.xlu0 0
    %971 = vperm.xlu0 %970, %v251
    %v972 = vpop.permute.xlu0 %971
    %975 = vset.pattern.permute.xlu0 0
    %976 = vperm.xlu0 %975, %v252
    %v977 = vpop.permute.xlu0 %976
    %980 = vset.pattern.permute.xlu0 0
    %981 = vperm.xlu0 %980, %v253
    %v982 = vpop.permute.xlu0 %981
    %985 = vset.pattern.permute.xlu0 0
    %986 = vperm.xlu0 %985, %v254
    %v987 = vpop.permute.xlu0 %986
    %990 = vset.pattern.permute.xlu0 0
    %991 = vperm.xlu0 %990, %v255
    %v992 = vpop.permute.xlu0 %991
    %995 = vset.pattern.permute.xlu0 0
    %996 = vperm.xlu0 %995, %v256
    %v997 = vpop.permute.xlu0 %996
    %v999 = vadd.f32 %v927, %v962
    %v1000 = vadd.f32 %v928, %v962
    %v1001 = vadd.f32 %v929, %v962
    %v1002 = vadd.f32 %v930, %v962
    %v1003 = vadd.f32 %v931, %v967
    %v1004 = vadd.f32 %v932, %v967
    %v1005 = vadd.f32 %v933, %v967
    %v1006 = vadd.f32 %v934, %v967
    %v1007 = vadd.f32 %v935, %v972
    %v1008 = vadd.f32 %v936, %v972
    %v1009 = vadd.f32 %v937, %v972
    %v1010 = vadd.f32 %v938, %v972
    %v1011 = vadd.f32 %v939, %v977
    %v1012 = vadd.f32 %v940, %v977
    %v1013 = vadd.f32 %v941, %v977
    %v1014 = vadd.f32 %v942, %v977
    %v1015 = vadd.f32 %v943, %v982
    %v1016 = vadd.f32 %v944, %v982
    %v1017 = vadd.f32 %v945, %v982
    %v1018 = vadd.f32 %v946, %v982
    %v1019 = vadd.f32 %v947, %v987
    %v1020 = vadd.f32 %v948, %v987
    %v1021 = vadd.f32 %v949, %v987
    %v1022 = vadd.f32 %v950, %v987
    %v1023 = vadd.f32 %v951, %v992
    %v1024 = vadd.f32 %v952, %v992
    %v1025 = vadd.f32 %v953, %v992
    %v1026 = vadd.f32 %v954, %v992
    %v1027 = vadd.f32 %v955, %v997
    %v1028 = vadd.f32 %v956, %v997
    %v1029 = vadd.f32 %v957, %v997
    %v1030 = vadd.f32 %v958, %v997
    %v1031 = vmax.f32 %v999, 0.0
    %v1032 = vmax.f32 %v1000, 0.0
    %v1033 = vmax.f32 %v1001, 0.0
    %v1034 = vmax.f32 %v1002, 0.0
    %v1035 = vmax.f32 %v1003, 0.0
    %v1036 = vmax.f32 %v1004, 0.0
    %v1037 = vmax.f32 %v1005, 0.0
    %v1038 = vmax.f32 %v1006, 0.0
    %v1039 = vmax.f32 %v1007, 0.0
    %v1040 = vmax.f32 %v1008, 0.0
    %v1041 = vmax.f32 %v1009, 0.0
    %v1042 = vmax.f32 %v1010, 0.0
    %v1043 = vmax.f32 %v1011, 0.0
    %v1044 = vmax.f32 %v1012, 0.0
    %v1045 = vmax.f32 %v1013, 0.0
    %v1046 = vmax.f32 %v1014, 0.0
    %v1047 = vmax.f32 %v1015, 0.0
    %v1048 = vmax.f32 %v1016, 0.0
    %v1049 = vmax.f32 %v1017, 0.0
    %v1050 = vmax.f32 %v1018, 0.0
    %v1051 = vmax.f32 %v1019, 0.0
    %v1052 = vmax.f32 %v1020, 0.0
    %v1053 = vmax.f32 %v1021, 0.0
    %v1054 = vmax.f32 %v1022, 0.0
    %v1055 = vmax.f32 %v1023, 0.0
    %v1056 = vmax.f32 %v1024, 0.0
    %v1057 = vmax.f32 %v1025, 0.0
    %v1058 = vmax.f32 %v1026, 0.0
    %v1059 = vmax.f32 %v1027, 0.0
    %v1060 = vmax.f32 %v1028, 0.0
    %v1061 = vmax.f32 %v1029, 0.0
    %v1062 = vmax.f32 %v1030, 0.0
    %v1063 = vadd.f32 %v1031, %v365
    %v1064 = vadd.f32 %v1032, %v367
    %v1065 = vadd.f32 %v1033, %v438
    %v1066 = vadd.f32 %v1034, %v440
    %v1067 = vadd.f32 %v1035, %v369
    %v1068 = vadd.f32 %v1036, %v371
    %v1069 = vadd.f32 %v1037, %v442
    %v1070 = vadd.f32 %v1038, %v444
    %v1071 = vadd.f32 %v1039, %v375
    %v1072 = vadd.f32 %v1040, %v377
    %v1073 = vadd.f32 %v1041, %v448
    %v1074 = vadd.f32 %v1042, %v450
    %v1075 = vadd.f32 %v1043, %v379
    %v1076 = vadd.f32 %v1044, %v381
    %v1077 = vadd.f32 %v1045, %v452
    %v1078 = vadd.f32 %v1046, %v454
    %v1079 = vadd.f32 %v1047, %v385
    %v1080 = vadd.f32 %v1048, %v387
    %v1081 = vadd.f32 %v1049, %v458
    %v1082 = vadd.f32 %v1050, %v460
    %v1083 = vadd.f32 %v1051, %v389
    %v1084 = vadd.f32 %v1052, %v391
    %v1085 = vadd.f32 %v1053, %v462
    %v1086 = vadd.f32 %v1054, %v464
    %v1087 = vadd.f32 %v1055, %v395
    %v1088 = vadd.f32 %v1056, %v397
    %v1089 = vadd.f32 %v1057, %v468
    %v1090 = vadd.f32 %v1058, %v470
    %v1091 = vadd.f32 %v1059, %v399
    %v1092 = vadd.f32 %v1060, %v401
    %v1093 = vadd.f32 %v1061, %v472
    %v1094 = vadd.f32 %v1062, %v474
    %v1095 = vlaneseq
    %v1096 = vand.u32 %v1095, 127
    %v1097 = vadd.s32 %v1096, 128
    %v1098 = vadd.s32 %v1096, 256
    %v1099 = vadd.s32 %v1096, 384
    %v1100 = vand.u32 %v1096, 15
    %v1101 = vand.u32 %v1097, 15
    %v1102 = vand.u32 %v1098, 15
    %v1103 = vand.u32 %v1099, 15
    %v1104 = vand.u32 %v1096, 255
    %v1105 = vand.u32 %v1097, 255
    %v1106 = vand.u32 %v1098, 255
    %v1107 = vand.u32 %v1099, 255
    %v1108 = vshra.s32 %v1104, 4
    %v1109 = vshra.s32 %v1105, 4
    %v1110 = vshra.s32 %v1106, 4
    %v1111 = vshra.s32 %v1107, 4
    %v1112 = vadd.s32 %v1108, 4294967295
    %v1113 = vadd.s32 %v1109, 4294967295
    %v1114 = vadd.s32 %v1110, 4294967295
    %v1115 = vadd.s32 %v1111, 4294967295
    %vm1116 = vcmp.ge.s32.totalorder %v1112, 0
    %vm1117 = vcmp.ge.s32.totalorder %v1113, 0
    %vm1118 = vcmp.ge.s32.totalorder %v1114, 0
    %vm1119 = vcmp.ge.s32.totalorder %v1115, 0
    %vm1120 = vcmp.lt.s32.totalorder %v1112, 16
    %vm1121 = vcmp.lt.s32.totalorder %v1113, 16
    %vm1122 = vcmp.lt.s32.totalorder %v1114, 16
    %vm1123 = vcmp.lt.s32.totalorder %v1115, 16
    %vm1124 = vmand %vm1116, %vm1120
    %vm1125 = vmand %vm1117, %vm1121
    %vm1126 = vmand %vm1118, %vm1122
    %vm1127 = vmand %vm1119, %vm1123
    %v1128 = vadd.s32 %v1100, 4294967295
    %v1129 = vadd.s32 %v1101, 4294967295
    %v1130 = vadd.s32 %v1102, 4294967295
    %v1131 = vadd.s32 %v1103, 4294967295
    %vm1132 = vcmp.ge.s32.totalorder %v1128, 0
    %vm1133 = vcmp.ge.s32.totalorder %v1129, 0
    %vm1134 = vcmp.ge.s32.totalorder %v1130, 0
    %vm1135 = vcmp.ge.s32.totalorder %v1131, 0
    %vm1136 = vcmp.lt.s32.totalorder %v1128, 16
    %vm1137 = vcmp.lt.s32.totalorder %v1129, 16
    %vm1138 = vcmp.lt.s32.totalorder %v1130, 16
    %vm1139 = vcmp.lt.s32.totalorder %v1131, 16
    %vm1140 = vmand %vm1132, %vm1136
    %vm1141 = vmand %vm1133, %vm1137
    %vm1142 = vmand %vm1134, %vm1138
    %vm1143 = vmand %vm1135, %vm1139
    %vm1144 = vmand %vm1124, %vm1140
    %vm1145 = vmand %vm1125, %vm1141
    %vm1146 = vmand %vm1126, %vm1142
    %vm1147 = vmand %vm1127, %vm1143
    %1148 = vrot.lane.b32.xlu0 %v1063, 17
    %v1149 = vpop.permute.xlu0 %1148
    %1150 = vrot.lane.b32.xlu0 %v1067, 17
    %v1151 = vpop.permute.xlu0 %1150
    %1152 = vrot.lane.b32.xlu0 %v1071, 17
    %v1153 = vpop.permute.xlu0 %1152
    %1154 = vrot.lane.b32.xlu0 %v1075, 17
    %v1155 = vpop.permute.xlu0 %1154
    %1156 = vrot.lane.b32.xlu0 %v1079, 17
    %v1157 = vpop.permute.xlu0 %1156
    %1158 = vrot.lane.b32.xlu0 %v1083, 17
    %v1159 = vpop.permute.xlu0 %1158
    %1160 = vrot.lane.b32.xlu0 %v1087, 17
    %v1161 = vpop.permute.xlu0 %1160
    %1162 = vrot.lane.b32.xlu0 %v1091, 17
    %v1163 = vpop.permute.xlu0 %1162
    %1164 = vrot.lane.b32.xlu0 %v1064, 17
    %v1165 = vpop.permute.xlu0 %1164
    %1166 = vrot.lane.b32.xlu0 %v1068, 17
    %v1167 = vpop.permute.xlu0 %1166
    %1168 = vrot.lane.b32.xlu0 %v1072, 17
    %v1169 = vpop.permute.xlu0 %1168
    %1170 = vrot.lane.b32.xlu0 %v1076, 17
    %v1171 = vpop.permute.xlu0 %1170
    %1172 = vrot.lane.b32.xlu0 %v1080, 17
    %v1173 = vpop.permute.xlu0 %1172
    %1174 = vrot.lane.b32.xlu0 %v1084, 17
    %v1175 = vpop.permute.xlu0 %1174
    %1176 = vrot.lane.b32.xlu0 %v1088, 17
    %v1177 = vpop.permute.xlu0 %1176
    %1178 = vrot.lane.b32.xlu0 %v1092, 17
    %v1179 = vpop.permute.xlu0 %1178
    %1180 = vrot.lane.b32.xlu0 %v1065, 17
    %v1181 = vpop.permute.xlu0 %1180
    %1182 = vrot.lane.b32.xlu0 %v1069, 17
    %v1183 = vpop.permute.xlu0 %1182
    %1184 = vrot.lane.b32.xlu0 %v1073, 17
    %v1185 = vpop.permute.xlu0 %1184
    %1186 = vrot.lane.b32.xlu0 %v1077, 17
    %v1187 = vpop.permute.xlu0 %1186
    %1188 = vrot.lane.b32.xlu0 %v1081, 17
    %v1189 = vpop.permute.xlu0 %1188
    %1190 = vrot.lane.b32.xlu0 %v1085, 17
    %v1191 = vpop.permute.xlu0 %1190
    %1192 = vrot.lane.b32.xlu0 %v1089, 17
    %v1193 = vpop.permute.xlu0 %1192
    %1194 = vrot.lane.b32.xlu0 %v1093, 17
    %v1195 = vpop.permute.xlu0 %1194
    %1196 = vrot.lane.b32.xlu0 %v1066, 17
    %v1197 = vpop.permute.xlu0 %1196
    %1198 = vrot.lane.b32.xlu0 %v1070, 17
    %v1199 = vpop.permute.xlu0 %1198
    %1200 = vrot.lane.b32.xlu0 %v1074, 17
    %v1201 = vpop.permute.xlu0 %1200
    %1202 = vrot.lane.b32.xlu0 %v1078, 17
    %v1203 = vpop.permute.xlu0 %1202
    %1204 = vrot.lane.b32.xlu0 %v1082, 17
    %v1205 = vpop.permute.xlu0 %1204
    %1206 = vrot.lane.b32.xlu0 %v1086, 17
    %v1207 = vpop.permute.xlu0 %1206
    %1208 = vrot.lane.b32.xlu0 %v1090, 17
    %v1209 = vpop.permute.xlu0 %1208
    %1210 = vrot.lane.b32.xlu0 %v1094, 17
    %v1211 = vpop.permute.xlu0 %1210
    %vm1212 = vcmp.lt.s32.totalorder %v1096, 17
    %v1213 = vsel %vm1212, %v1181, %v1197
    %v1214 = vsel %vm1212, %v1183, %v1199
    %v1215 = vsel %vm1212, %v1185, %v1201
    %v1216 = vsel %vm1212, %v1187, %v1203
    %v1217 = vsel %vm1212, %v1189, %v1205
    %v1218 = vsel %vm1212, %v1191, %v1207
    %v1219 = vsel %vm1212, %v1193, %v1209
    %v1220 = vsel %vm1212, %v1195, %v1211
    %v1221 = vsel %vm1212, %v1165, %v1181
    %v1222 = vsel %vm1212, %v1167, %v1183
    %v1223 = vsel %vm1212, %v1169, %v1185
    %v1224 = vsel %vm1212, %v1171, %v1187
    %v1225 = vsel %vm1212, %v1173, %v1189
    %v1226 = vsel %vm1212, %v1175, %v1191
    %v1227 = vsel %vm1212, %v1177, %v1193
    %v1228 = vsel %vm1212, %v1179, %v1195
    %v1229 = vsel %vm1212, %v1149, %v1165
    %v1230 = vsel %vm1212, %v1151, %v1167
    %v1231 = vsel %vm1212, %v1153, %v1169
    %v1232 = vsel %vm1212, %v1155, %v1171
    %v1233 = vsel %vm1212, %v1157, %v1173
    %v1234 = vsel %vm1212, %v1159, %v1175
    %v1235 = vsel %vm1212, %v1161, %v1177
    %v1236 = vsel %vm1212, %v1163, %v1179
    %v1237 = vsel %vm1212, %v1197, %v1149
    %v1238 = vsel %vm1212, %v1199, %v1151
    %v1239 = vsel %vm1212, %v1201, %v1153
    %v1240 = vsel %vm1212, %v1203, %v1155
    %v1241 = vsel %vm1212, %v1205, %v1157
    %v1242 = vsel %vm1212, %v1207, %v1159
    %v1243 = vsel %vm1212, %v1209, %v1161
    %v1244 = vsel %vm1212, %v1211, %v1163
    %v1245 = vsel %vm1144, 1, 0
    %v1246 = vsel %vm1145, 1, 0
    %v1247 = vsel %vm1146, 1, 0
    %v1248 = vsel %vm1147, 1, 0
    %vm1249 = vcmp.eq.s32.totalorder %v1245, 1
    %vm1250 = vcmp.eq.s32.totalorder %v1246, 1
    %vm1251 = vcmp.eq.s32.totalorder %v1247, 1
    %vm1252 = vcmp.eq.s32.totalorder %v1248, 1
    %v1253 = vsel %vm1249, %v1237, 0.0
    %v1254 = vsel %vm1250, %v1229, 0.0
    %v1255 = vsel %vm1251, %v1221, 0.0
    %v1256 = vsel %vm1252, %v1213, 0.0
    %v1257 = vsel %vm1249, %v1238, 0.0
    %v1258 = vsel %vm1250, %v1230, 0.0
    %v1259 = vsel %vm1251, %v1222, 0.0
    %v1260 = vsel %vm1252, %v1214, 0.0
    %v1261 = vsel %vm1249, %v1239, 0.0
    %v1262 = vsel %vm1250, %v1231, 0.0
    %v1263 = vsel %vm1251, %v1223, 0.0
    %v1264 = vsel %vm1252, %v1215, 0.0
    %v1265 = vsel %vm1249, %v1240, 0.0
    %v1266 = vsel %vm1250, %v1232, 0.0
    %v1267 = vsel %vm1251, %v1224, 0.0
    %v1268 = vsel %vm1252, %v1216, 0.0
    %v1269 = vsel %vm1249, %v1241, 0.0
    %v1270 = vsel %vm1250, %v1233, 0.0
    %v1271 = vsel %vm1251, %v1225, 0.0
    %v1272 = vsel %vm1252, %v1217, 0.0
    %v1273 = vsel %vm1249, %v1242, 0.0
    %v1274 = vsel %vm1250, %v1234, 0.0
    %v1275 = vsel %vm1251, %v1226, 0.0
    %v1276 = vsel %vm1252, %v1218, 0.0
    %v1277 = vsel %vm1249, %v1243, 0.0
    %v1278 = vsel %vm1250, %v1235, 0.0
    %v1279 = vsel %vm1251, %v1227, 0.0
    %v1280 = vsel %vm1252, %v1219, 0.0
    %v1281 = vsel %vm1249, %v1244, 0.0
    %v1282 = vsel %vm1250, %v1236, 0.0
    %v1283 = vsel %vm1251, %v1228, 0.0
    %v1284 = vsel %vm1252, %v1220, 0.0
    %vm1285 = vcmp.ge.s32.totalorder %v1100, 0
    %vm1286 = vcmp.ge.s32.totalorder %v1101, 0
    %vm1287 = vcmp.ge.s32.totalorder %v1102, 0
    %vm1288 = vcmp.ge.s32.totalorder %v1103, 0
    %vm1289 = vcmp.lt.s32.totalorder %v1100, 16
    %vm1290 = vcmp.lt.s32.totalorder %v1101, 16
    %vm1291 = vcmp.lt.s32.totalorder %v1102, 16
    %vm1292 = vcmp.lt.s32.totalorder %v1103, 16
    %vm1293 = vmand %vm1285, %vm1289
    %vm1294 = vmand %vm1286, %vm1290
    %vm1295 = vmand %vm1287, %vm1291
    %vm1296 = vmand %vm1288, %vm1292
    %vm1297 = vmand %vm1124, %vm1293
    %vm1298 = vmand %vm1125, %vm1294
    %vm1299 = vmand %vm1126, %vm1295
    %vm1300 = vmand %vm1127, %vm1296
    %1301 = vrot.lane.b32.xlu0 %v1063, 16
    %v1302 = vpop.permute.xlu0 %1301
    %1303 = vrot.lane.b32.xlu0 %v1067, 16
    %v1304 = vpop.permute.xlu0 %1303
    %1305 = vrot.lane.b32.xlu0 %v1071, 16
    %v1306 = vpop.permute.xlu0 %1305
    %1307 = vrot.lane.b32.xlu0 %v1075, 16
    %v1308 = vpop.permute.xlu0 %1307
    %1309 = vrot.lane.b32.xlu0 %v1079, 16
    %v1310 = vpop.permute.xlu0 %1309
    %1311 = vrot.lane.b32.xlu0 %v1083, 16
    %v1312 = vpop.permute.xlu0 %1311
    %1313 = vrot.lane.b32.xlu0 %v1087, 16
    %v1314 = vpop.permute.xlu0 %1313
    %1315 = vrot.lane.b32.xlu0 %v1091, 16
    %v1316 = vpop.permute.xlu0 %1315
    %1317 = vrot.lane.b32.xlu0 %v1064, 16
    %v1318 = vpop.permute.xlu0 %1317
    %1319 = vrot.lane.b32.xlu0 %v1068, 16
    %v1320 = vpop.permute.xlu0 %1319
    %1321 = vrot.lane.b32.xlu0 %v1072, 16
    %v1322 = vpop.permute.xlu0 %1321
    %1323 = vrot.lane.b32.xlu0 %v1076, 16
    %v1324 = vpop.permute.xlu0 %1323
    %1325 = vrot.lane.b32.xlu0 %v1080, 16
    %v1326 = vpop.permute.xlu0 %1325
    %1327 = vrot.lane.b32.xlu0 %v1084, 16
    %v1328 = vpop.permute.xlu0 %1327
    %1329 = vrot.lane.b32.xlu0 %v1088, 16
    %v1330 = vpop.permute.xlu0 %1329
    %1331 = vrot.lane.b32.xlu0 %v1092, 16
    %v1332 = vpop.permute.xlu0 %1331
    %1333 = vrot.lane.b32.xlu0 %v1065, 16
    %v1334 = vpop.permute.xlu0 %1333
    %1335 = vrot.lane.b32.xlu0 %v1069, 16
    %v1336 = vpop.permute.xlu0 %1335
    %1337 = vrot.lane.b32.xlu0 %v1073, 16
    %v1338 = vpop.permute.xlu0 %1337
    %1339 = vrot.lane.b32.xlu0 %v1077, 16
    %v1340 = vpop.permute.xlu0 %1339
    %1341 = vrot.lane.b32.xlu0 %v1081, 16
    %v1342 = vpop.permute.xlu0 %1341
    %1343 = vrot.lane.b32.xlu0 %v1085, 16
    %v1344 = vpop.permute.xlu0 %1343
    %1345 = vrot.lane.b32.xlu0 %v1089, 16
    %v1346 = vpop.permute.xlu0 %1345
    %1347 = vrot.lane.b32.xlu0 %v1093, 16
    %v1348 = vpop.permute.xlu0 %1347
    %1349 = vrot.lane.b32.xlu0 %v1066, 16
    %v1350 = vpop.permute.xlu0 %1349
    %1351 = vrot.lane.b32.xlu0 %v1070, 16
    %v1352 = vpop.permute.xlu0 %1351
    %1353 = vrot.lane.b32.xlu0 %v1074, 16
    %v1354 = vpop.permute.xlu0 %1353
    %1355 = vrot.lane.b32.xlu0 %v1078, 16
    %v1356 = vpop.permute.xlu0 %1355
    %1357 = vrot.lane.b32.xlu0 %v1082, 16
    %v1358 = vpop.permute.xlu0 %1357
    %1359 = vrot.lane.b32.xlu0 %v1086, 16
    %v1360 = vpop.permute.xlu0 %1359
    %1361 = vrot.lane.b32.xlu0 %v1090, 16
    %v1362 = vpop.permute.xlu0 %1361
    %1363 = vrot.lane.b32.xlu0 %v1094, 16
    %v1364 = vpop.permute.xlu0 %1363
    %vm1365 = vcmp.lt.s32.totalorder %v1096, 16
    %v1366 = vsel %vm1365, %v1334, %v1350
    %v1367 = vsel %vm1365, %v1336, %v1352
    %v1368 = vsel %vm1365, %v1338, %v1354
    %v1369 = vsel %vm1365, %v1340, %v1356
    %v1370 = vsel %vm1365, %v1342, %v1358
    %v1371 = vsel %vm1365, %v1344, %v1360
    %v1372 = vsel %vm1365, %v1346, %v1362
    %v1373 = vsel %vm1365, %v1348, %v1364
    %v1374 = vsel %vm1365, %v1318, %v1334
    %v1375 = vsel %vm1365, %v1320, %v1336
    %v1376 = vsel %vm1365, %v1322, %v1338
    %v1377 = vsel %vm1365, %v1324, %v1340
    %v1378 = vsel %vm1365, %v1326, %v1342
    %v1379 = vsel %vm1365, %v1328, %v1344
    %v1380 = vsel %vm1365, %v1330, %v1346
    %v1381 = vsel %vm1365, %v1332, %v1348
    %v1382 = vsel %vm1365, %v1302, %v1318
    %v1383 = vsel %vm1365, %v1304, %v1320
    %v1384 = vsel %vm1365, %v1306, %v1322
    %v1385 = vsel %vm1365, %v1308, %v1324
    %v1386 = vsel %vm1365, %v1310, %v1326
    %v1387 = vsel %vm1365, %v1312, %v1328
    %v1388 = vsel %vm1365, %v1314, %v1330
    %v1389 = vsel %vm1365, %v1316, %v1332
    %v1390 = vsel %vm1365, %v1350, %v1302
    %v1391 = vsel %vm1365, %v1352, %v1304
    %v1392 = vsel %vm1365, %v1354, %v1306
    %v1393 = vsel %vm1365, %v1356, %v1308
    %v1394 = vsel %vm1365, %v1358, %v1310
    %v1395 = vsel %vm1365, %v1360, %v1312
    %v1396 = vsel %vm1365, %v1362, %v1314
    %v1397 = vsel %vm1365, %v1364, %v1316
    %v1398 = vsel %vm1297, 1, 0
    %v1399 = vsel %vm1298, 1, 0
    %v1400 = vsel %vm1299, 1, 0
    %v1401 = vsel %vm1300, 1, 0
    %vm1402 = vcmp.eq.s32.totalorder %v1398, 1
    %vm1403 = vcmp.eq.s32.totalorder %v1399, 1
    %vm1404 = vcmp.eq.s32.totalorder %v1400, 1
    %vm1405 = vcmp.eq.s32.totalorder %v1401, 1
    %v1406 = vsel %vm1402, %v1390, 0.0
    %v1407 = vsel %vm1403, %v1382, 0.0
    %v1408 = vsel %vm1404, %v1374, 0.0
    %v1409 = vsel %vm1405, %v1366, 0.0
    %v1410 = vsel %vm1402, %v1391, 0.0
    %v1411 = vsel %vm1403, %v1383, 0.0
    %v1412 = vsel %vm1404, %v1375, 0.0
    %v1413 = vsel %vm1405, %v1367, 0.0
    %v1414 = vsel %vm1402, %v1392, 0.0
    %v1415 = vsel %vm1403, %v1384, 0.0
    %v1416 = vsel %vm1404, %v1376, 0.0
    %v1417 = vsel %vm1405, %v1368, 0.0
    %v1418 = vsel %vm1402, %v1393, 0.0
    %v1419 = vsel %vm1403, %v1385, 0.0
    %v1420 = vsel %vm1404, %v1377, 0.0
    %v1421 = vsel %vm1405, %v1369, 0.0
    %v1422 = vsel %vm1402, %v1394, 0.0
    %v1423 = vsel %vm1403, %v1386, 0.0
    %v1424 = vsel %vm1404, %v1378, 0.0
    %v1425 = vsel %vm1405, %v1370, 0.0
    %v1426 = vsel %vm1402, %v1395, 0.0
    %v1427 = vsel %vm1403, %v1387, 0.0
    %v1428 = vsel %vm1404, %v1379, 0.0
    %v1429 = vsel %vm1405, %v1371, 0.0
    %v1430 = vsel %vm1402, %v1396, 0.0
    %v1431 = vsel %vm1403, %v1388, 0.0
    %v1432 = vsel %vm1404, %v1380, 0.0
    %v1433 = vsel %vm1405, %v1372, 0.0
    %v1434 = vsel %vm1402, %v1397, 0.0
    %v1435 = vsel %vm1403, %v1389, 0.0
    %v1436 = vsel %vm1404, %v1381, 0.0
    %v1437 = vsel %vm1405, %v1373, 0.0
    %v1438 = vadd.s32 %v1100, 1
    %v1439 = vadd.s32 %v1101, 1
    %v1440 = vadd.s32 %v1102, 1
    %v1441 = vadd.s32 %v1103, 1
    %vm1442 = vcmp.ge.s32.totalorder %v1438, 0
    %vm1443 = vcmp.ge.s32.totalorder %v1439, 0
    %vm1444 = vcmp.ge.s32.totalorder %v1440, 0
    %vm1445 = vcmp.ge.s32.totalorder %v1441, 0
    %vm1446 = vcmp.lt.s32.totalorder %v1438, 16
    %vm1447 = vcmp.lt.s32.totalorder %v1439, 16
    %vm1448 = vcmp.lt.s32.totalorder %v1440, 16
    %vm1449 = vcmp.lt.s32.totalorder %v1441, 16
    %vm1450 = vmand %vm1442, %vm1446
    %vm1451 = vmand %vm1443, %vm1447
    %vm1452 = vmand %vm1444, %vm1448
    %vm1453 = vmand %vm1445, %vm1449
    %vm1454 = vmand %vm1124, %vm1450
    %vm1455 = vmand %vm1125, %vm1451
    %vm1456 = vmand %vm1126, %vm1452
    %vm1457 = vmand %vm1127, %vm1453
    %1458 = vrot.lane.b32.xlu0 %v1063, 15
    %v1459 = vpop.permute.xlu0 %1458
    %1460 = vrot.lane.b32.xlu0 %v1067, 15
    %v1461 = vpop.permute.xlu0 %1460
    %1462 = vrot.lane.b32.xlu0 %v1071, 15
    %v1463 = vpop.permute.xlu0 %1462
    %1464 = vrot.lane.b32.xlu0 %v1075, 15
    %v1465 = vpop.permute.xlu0 %1464
    %1466 = vrot.lane.b32.xlu0 %v1079, 15
    %v1467 = vpop.permute.xlu0 %1466
    %1468 = vrot.lane.b32.xlu0 %v1083, 15
    %v1469 = vpop.permute.xlu0 %1468
    %1470 = vrot.lane.b32.xlu0 %v1087, 15
    %v1471 = vpop.permute.xlu0 %1470
    %1472 = vrot.lane.b32.xlu0 %v1091, 15
    %v1473 = vpop.permute.xlu0 %1472
    %1474 = vrot.lane.b32.xlu0 %v1064, 15
    %v1475 = vpop.permute.xlu0 %1474
    %1476 = vrot.lane.b32.xlu0 %v1068, 15
    %v1477 = vpop.permute.xlu0 %1476
    %1478 = vrot.lane.b32.xlu0 %v1072, 15
    %v1479 = vpop.permute.xlu0 %1478
    %1480 = vrot.lane.b32.xlu0 %v1076, 15
    %v1481 = vpop.permute.xlu0 %1480
    %1482 = vrot.lane.b32.xlu0 %v1080, 15
    %v1483 = vpop.permute.xlu0 %1482
    %1484 = vrot.lane.b32.xlu0 %v1084, 15
    %v1485 = vpop.permute.xlu0 %1484
    %1486 = vrot.lane.b32.xlu0 %v1088, 15
    %v1487 = vpop.permute.xlu0 %1486
    %1488 = vrot.lane.b32.xlu0 %v1092, 15
    %v1489 = vpop.permute.xlu0 %1488
    %1490 = vrot.lane.b32.xlu0 %v1065, 15
    %v1491 = vpop.permute.xlu0 %1490
    %1492 = vrot.lane.b32.xlu0 %v1069, 15
    %v1493 = vpop.permute.xlu0 %1492
    %1494 = vrot.lane.b32.xlu0 %v1073, 15
    %v1495 = vpop.permute.xlu0 %1494
    %1496 = vrot.lane.b32.xlu0 %v1077, 15
    %v1497 = vpop.permute.xlu0 %1496
    %1498 = vrot.lane.b32.xlu0 %v1081, 15
    %v1499 = vpop.permute.xlu0 %1498
    %1500 = vrot.lane.b32.xlu0 %v1085, 15
    %v1501 = vpop.permute.xlu0 %1500
    %1502 = vrot.lane.b32.xlu0 %v1089, 15
    %v1503 = vpop.permute.xlu0 %1502
    %1504 = vrot.lane.b32.xlu0 %v1093, 15
    %v1505 = vpop.permute.xlu0 %1504
    %1506 = vrot.lane.b32.xlu0 %v1066, 15
    %v1507 = vpop.permute.xlu0 %1506
    %1508 = vrot.lane.b32.xlu0 %v1070, 15
    %v1509 = vpop.permute.xlu0 %1508
    %1510 = vrot.lane.b32.xlu0 %v1074, 15
    %v1511 = vpop.permute.xlu0 %1510
    %1512 = vrot.lane.b32.xlu0 %v1078, 15
    %v1513 = vpop.permute.xlu0 %1512
    %1514 = vrot.lane.b32.xlu0 %v1082, 15
    %v1515 = vpop.permute.xlu0 %1514
    %1516 = vrot.lane.b32.xlu0 %v1086, 15
    %v1517 = vpop.permute.xlu0 %1516
    %1518 = vrot.lane.b32.xlu0 %v1090, 15
    %v1519 = vpop.permute.xlu0 %1518
    %1520 = vrot.lane.b32.xlu0 %v1094, 15
    %v1521 = vpop.permute.xlu0 %1520
    %vm1522 = vcmp.lt.s32.totalorder %v1096, 15
    %v1523 = vsel %vm1522, %v1491, %v1507
    %v1524 = vsel %vm1522, %v1493, %v1509
    %v1525 = vsel %vm1522, %v1495, %v1511
    %v1526 = vsel %vm1522, %v1497, %v1513
    %v1527 = vsel %vm1522, %v1499, %v1515
    %v1528 = vsel %vm1522, %v1501, %v1517
    %v1529 = vsel %vm1522, %v1503, %v1519
    %v1530 = vsel %vm1522, %v1505, %v1521
    %v1531 = vsel %vm1522, %v1475, %v1491
    %v1532 = vsel %vm1522, %v1477, %v1493
    %v1533 = vsel %vm1522, %v1479, %v1495
    %v1534 = vsel %vm1522, %v1481, %v1497
    %v1535 = vsel %vm1522, %v1483, %v1499
    %v1536 = vsel %vm1522, %v1485, %v1501
    %v1537 = vsel %vm1522, %v1487, %v1503
    %v1538 = vsel %vm1522, %v1489, %v1505
    %v1539 = vsel %vm1522, %v1459, %v1475
    %v1540 = vsel %vm1522, %v1461, %v1477
    %v1541 = vsel %vm1522, %v1463, %v1479
    %v1542 = vsel %vm1522, %v1465, %v1481
    %v1543 = vsel %vm1522, %v1467, %v1483
    %v1544 = vsel %vm1522, %v1469, %v1485
    %v1545 = vsel %vm1522, %v1471, %v1487
    %v1546 = vsel %vm1522, %v1473, %v1489
    %v1547 = vsel %vm1522, %v1507, %v1459
    %v1548 = vsel %vm1522, %v1509, %v1461
    %v1549 = vsel %vm1522, %v1511, %v1463
    %v1550 = vsel %vm1522, %v1513, %v1465
    %v1551 = vsel %vm1522, %v1515, %v1467
    %v1552 = vsel %vm1522, %v1517, %v1469
    %v1553 = vsel %vm1522, %v1519, %v1471
    %v1554 = vsel %vm1522, %v1521, %v1473
    %v1555 = vsel %vm1454, 1, 0
    %v1556 = vsel %vm1455, 1, 0
    %v1557 = vsel %vm1456, 1, 0
    %v1558 = vsel %vm1457, 1, 0
    %vm1559 = vcmp.eq.s32.totalorder %v1555, 1
    %vm1560 = vcmp.eq.s32.totalorder %v1556, 1
    %vm1561 = vcmp.eq.s32.totalorder %v1557, 1
    %vm1562 = vcmp.eq.s32.totalorder %v1558, 1
    %v1563 = vsel %vm1559, %v1547, 0.0
    %v1564 = vsel %vm1560, %v1539, 0.0
    %v1565 = vsel %vm1561, %v1531, 0.0
    %v1566 = vsel %vm1562, %v1523, 0.0
    %v1567 = vsel %vm1559, %v1548, 0.0
    %v1568 = vsel %vm1560, %v1540, 0.0
    %v1569 = vsel %vm1561, %v1532, 0.0
    %v1570 = vsel %vm1562, %v1524, 0.0
    %v1571 = vsel %vm1559, %v1549, 0.0
    %v1572 = vsel %vm1560, %v1541, 0.0
    %v1573 = vsel %vm1561, %v1533, 0.0
    %v1574 = vsel %vm1562, %v1525, 0.0
    %v1575 = vsel %vm1559, %v1550, 0.0
    %v1576 = vsel %vm1560, %v1542, 0.0
    %v1577 = vsel %vm1561, %v1534, 0.0
    %v1578 = vsel %vm1562, %v1526, 0.0
    %v1579 = vsel %vm1559, %v1551, 0.0
    %v1580 = vsel %vm1560, %v1543, 0.0
    %v1581 = vsel %vm1561, %v1535, 0.0
    %v1582 = vsel %vm1562, %v1527, 0.0
    %v1583 = vsel %vm1559, %v1552, 0.0
    %v1584 = vsel %vm1560, %v1544, 0.0
    %v1585 = vsel %vm1561, %v1536, 0.0
    %v1586 = vsel %vm1562, %v1528, 0.0
    %v1587 = vsel %vm1559, %v1553, 0.0
    %v1588 = vsel %vm1560, %v1545, 0.0
    %v1589 = vsel %vm1561, %v1537, 0.0
    %v1590 = vsel %vm1562, %v1529, 0.0
    %v1591 = vsel %vm1559, %v1554, 0.0
    %v1592 = vsel %vm1560, %v1546, 0.0
    %v1593 = vsel %vm1561, %v1538, 0.0
    %v1594 = vsel %vm1562, %v1530, 0.0
    %vm1595 = vcmp.ge.s32.totalorder %v1108, 0
    %vm1596 = vcmp.ge.s32.totalorder %v1109, 0
    %vm1597 = vcmp.ge.s32.totalorder %v1110, 0
    %vm1598 = vcmp.ge.s32.totalorder %v1111, 0
    %vm1599 = vcmp.lt.s32.totalorder %v1108, 16
    %vm1600 = vcmp.lt.s32.totalorder %v1109, 16
    %vm1601 = vcmp.lt.s32.totalorder %v1110, 16
    %vm1602 = vcmp.lt.s32.totalorder %v1111, 16
    %vm1603 = vmand %vm1595, %vm1599
    %vm1604 = vmand %vm1596, %vm1600
    %vm1605 = vmand %vm1597, %vm1601
    %vm1606 = vmand %vm1598, %vm1602
    %vm1607 = vmand %vm1603, %vm1140
    %vm1608 = vmand %vm1604, %vm1141
    %vm1609 = vmand %vm1605, %vm1142
    %vm1610 = vmand %vm1606, %vm1143
    %1611 = vrot.lane.b32.xlu0 %v1063, 1
    %v1612 = vpop.permute.xlu0 %1611
    %1613 = vrot.lane.b32.xlu0 %v1067, 1
    %v1614 = vpop.permute.xlu0 %1613
    %1615 = vrot.lane.b32.xlu0 %v1071, 1
    %v1616 = vpop.permute.xlu0 %1615
    %1617 = vrot.lane.b32.xlu0 %v1075, 1
    %v1618 = vpop.permute.xlu0 %1617
    %1619 = vrot.lane.b32.xlu0 %v1079, 1
    %v1620 = vpop.permute.xlu0 %1619
    %1621 = vrot.lane.b32.xlu0 %v1083, 1
    %v1622 = vpop.permute.xlu0 %1621
    %1623 = vrot.lane.b32.xlu0 %v1087, 1
    %v1624 = vpop.permute.xlu0 %1623
    %1625 = vrot.lane.b32.xlu0 %v1091, 1
    %v1626 = vpop.permute.xlu0 %1625
    %1627 = vrot.lane.b32.xlu0 %v1064, 1
    %v1628 = vpop.permute.xlu0 %1627
    %1629 = vrot.lane.b32.xlu0 %v1068, 1
    %v1630 = vpop.permute.xlu0 %1629
    %1631 = vrot.lane.b32.xlu0 %v1072, 1
    %v1632 = vpop.permute.xlu0 %1631
    %1633 = vrot.lane.b32.xlu0 %v1076, 1
    %v1634 = vpop.permute.xlu0 %1633
    %1635 = vrot.lane.b32.xlu0 %v1080, 1
    %v1636 = vpop.permute.xlu0 %1635
    %1637 = vrot.lane.b32.xlu0 %v1084, 1
    %v1638 = vpop.permute.xlu0 %1637
    %1639 = vrot.lane.b32.xlu0 %v1088, 1
    %v1640 = vpop.permute.xlu0 %1639
    %1641 = vrot.lane.b32.xlu0 %v1092, 1
    %v1642 = vpop.permute.xlu0 %1641
    %1643 = vrot.lane.b32.xlu0 %v1065, 1
    %v1644 = vpop.permute.xlu0 %1643
    %1645 = vrot.lane.b32.xlu0 %v1069, 1
    %v1646 = vpop.permute.xlu0 %1645
    %1647 = vrot.lane.b32.xlu0 %v1073, 1
    %v1648 = vpop.permute.xlu0 %1647
    %1649 = vrot.lane.b32.xlu0 %v1077, 1
    %v1650 = vpop.permute.xlu0 %1649
    %1651 = vrot.lane.b32.xlu0 %v1081, 1
    %v1652 = vpop.permute.xlu0 %1651
    %1653 = vrot.lane.b32.xlu0 %v1085, 1
    %v1654 = vpop.permute.xlu0 %1653
    %1655 = vrot.lane.b32.xlu0 %v1089, 1
    %v1656 = vpop.permute.xlu0 %1655
    %1657 = vrot.lane.b32.xlu0 %v1093, 1
    %v1658 = vpop.permute.xlu0 %1657
    %1659 = vrot.lane.b32.xlu0 %v1066, 1
    %v1660 = vpop.permute.xlu0 %1659
    %1661 = vrot.lane.b32.xlu0 %v1070, 1
    %v1662 = vpop.permute.xlu0 %1661
    %1663 = vrot.lane.b32.xlu0 %v1074, 1
    %v1664 = vpop.permute.xlu0 %1663
    %1665 = vrot.lane.b32.xlu0 %v1078, 1
    %v1666 = vpop.permute.xlu0 %1665
    %1667 = vrot.lane.b32.xlu0 %v1082, 1
    %v1668 = vpop.permute.xlu0 %1667
    %1669 = vrot.lane.b32.xlu0 %v1086, 1
    %v1670 = vpop.permute.xlu0 %1669
    %1671 = vrot.lane.b32.xlu0 %v1090, 1
    %v1672 = vpop.permute.xlu0 %1671
    %1673 = vrot.lane.b32.xlu0 %v1094, 1
    %v1674 = vpop.permute.xlu0 %1673
    %vm1675 = vcmp.lt.s32.totalorder %v1096, 1
    %v1676 = vsel %vm1675, %v1644, %v1660
    %v1677 = vsel %vm1675, %v1646, %v1662
    %v1678 = vsel %vm1675, %v1648, %v1664
    %v1679 = vsel %vm1675, %v1650, %v1666
    %v1680 = vsel %vm1675, %v1652, %v1668
    %v1681 = vsel %vm1675, %v1654, %v1670
    %v1682 = vsel %vm1675, %v1656, %v1672
    %v1683 = vsel %vm1675, %v1658, %v1674
    %v1684 = vsel %vm1675, %v1628, %v1644
    %v1685 = vsel %vm1675, %v1630, %v1646
    %v1686 = vsel %vm1675, %v1632, %v1648
    %v1687 = vsel %vm1675, %v1634, %v1650
    %v1688 = vsel %vm1675, %v1636, %v1652
    %v1689 = vsel %vm1675, %v1638, %v1654
    %v1690 = vsel %vm1675, %v1640, %v1656
    %v1691 = vsel %vm1675, %v1642, %v1658
    %v1692 = vsel %vm1675, %v1612, %v1628
    %v1693 = vsel %vm1675, %v1614, %v1630
    %v1694 = vsel %vm1675, %v1616, %v1632
    %v1695 = vsel %vm1675, %v1618, %v1634
    %v1696 = vsel %vm1675, %v1620, %v1636
    %v1697 = vsel %vm1675, %v1622, %v1638
    %v1698 = vsel %vm1675, %v1624, %v1640
    %v1699 = vsel %vm1675, %v1626, %v1642
    %v1700 = vsel %vm1675, %v1660, %v1612
    %v1701 = vsel %vm1675, %v1662, %v1614
    %v1702 = vsel %vm1675, %v1664, %v1616
    %v1703 = vsel %vm1675, %v1666, %v1618
    %v1704 = vsel %vm1675, %v1668, %v1620
    %v1705 = vsel %vm1675, %v1670, %v1622
    %v1706 = vsel %vm1675, %v1672, %v1624
    %v1707 = vsel %vm1675, %v1674, %v1626
    %v1708 = vsel %vm1607, 1, 0
    %v1709 = vsel %vm1608, 1, 0
    %v1710 = vsel %vm1609, 1, 0
    %v1711 = vsel %vm1610, 1, 0
    %vm1712 = vcmp.eq.s32.totalorder %v1708, 1
    %vm1713 = vcmp.eq.s32.totalorder %v1709, 1
    %vm1714 = vcmp.eq.s32.totalorder %v1710, 1
    %vm1715 = vcmp.eq.s32.totalorder %v1711, 1
    %v1716 = vsel %vm1712, %v1700, 0.0
    %v1717 = vsel %vm1713, %v1692, 0.0
    %v1718 = vsel %vm1714, %v1684, 0.0
    %v1719 = vsel %vm1715, %v1676, 0.0
    %v1720 = vsel %vm1712, %v1701, 0.0
    %v1721 = vsel %vm1713, %v1693, 0.0
    %v1722 = vsel %vm1714, %v1685, 0.0
    %v1723 = vsel %vm1715, %v1677, 0.0
    %v1724 = vsel %vm1712, %v1702, 0.0
    %v1725 = vsel %vm1713, %v1694, 0.0
    %v1726 = vsel %vm1714, %v1686, 0.0
    %v1727 = vsel %vm1715, %v1678, 0.0
    %v1728 = vsel %vm1712, %v1703, 0.0
    %v1729 = vsel %vm1713, %v1695, 0.0
    %v1730 = vsel %vm1714, %v1687, 0.0
    %v1731 = vsel %vm1715, %v1679, 0.0
    %v1732 = vsel %vm1712, %v1704, 0.0
    %v1733 = vsel %vm1713, %v1696, 0.0
    %v1734 = vsel %vm1714, %v1688, 0.0
    %v1735 = vsel %vm1715, %v1680, 0.0
    %v1736 = vsel %vm1712, %v1705, 0.0
    %v1737 = vsel %vm1713, %v1697, 0.0
    %v1738 = vsel %vm1714, %v1689, 0.0
    %v1739 = vsel %vm1715, %v1681, 0.0
    %v1740 = vsel %vm1712, %v1706, 0.0
    %v1741 = vsel %vm1713, %v1698, 0.0
    %v1742 = vsel %vm1714, %v1690, 0.0
    %v1743 = vsel %vm1715, %v1682, 0.0
    %v1744 = vsel %vm1712, %v1707, 0.0
    %v1745 = vsel %vm1713, %v1699, 0.0
    %v1746 = vsel %vm1714, %v1691, 0.0
    %v1747 = vsel %vm1715, %v1683, 0.0
    %vm1748 = vmand %vm1603, %vm1293
    %vm1749 = vmand %vm1604, %vm1294
    %vm1750 = vmand %vm1605, %vm1295
    %vm1751 = vmand %vm1606, %vm1296
    %v1752 = vsel %vm1748, 1, 0
    %v1753 = vsel %vm1749, 1, 0
    %v1754 = vsel %vm1750, 1, 0
    %v1755 = vsel %vm1751, 1, 0
    %vm1756 = vcmp.eq.s32.totalorder %v1752, 1
    %vm1757 = vcmp.eq.s32.totalorder %v1753, 1
    %vm1758 = vcmp.eq.s32.totalorder %v1754, 1
    %vm1759 = vcmp.eq.s32.totalorder %v1755, 1
    %v1760 = vsel %vm1756, %v1063, 0.0
    %v1761 = vsel %vm1757, %v1064, 0.0
    %v1762 = vsel %vm1758, %v1065, 0.0
    %v1763 = vsel %vm1759, %v1066, 0.0
    %v1764 = vsel %vm1756, %v1067, 0.0
    %v1765 = vsel %vm1757, %v1068, 0.0
    %v1766 = vsel %vm1758, %v1069, 0.0
    %v1767 = vsel %vm1759, %v1070, 0.0
    %v1768 = vsel %vm1756, %v1071, 0.0
    %v1769 = vsel %vm1757, %v1072, 0.0
    %v1770 = vsel %vm1758, %v1073, 0.0
    %v1771 = vsel %vm1759, %v1074, 0.0
    %v1772 = vsel %vm1756, %v1075, 0.0
    %v1773 = vsel %vm1757, %v1076, 0.0
    %v1774 = vsel %vm1758, %v1077, 0.0
    %v1775 = vsel %vm1759, %v1078, 0.0
    %v1776 = vsel %vm1756, %v1079, 0.0
    %v1777 = vsel %vm1757, %v1080, 0.0
    %v1778 = vsel %vm1758, %v1081, 0.0
    %v1779 = vsel %vm1759, %v1082, 0.0
    %v1780 = vsel %vm1756, %v1083, 0.0
    %v1781 = vsel %vm1757, %v1084, 0.0
    %v1782 = vsel %vm1758, %v1085, 0.0
    %v1783 = vsel %vm1759, %v1086, 0.0
    %v1784 = vsel %vm1756, %v1087, 0.0
    %v1785 = vsel %vm1757, %v1088, 0.0
    %v1786 = vsel %vm1758, %v1089, 0.0
    %v1787 = vsel %vm1759, %v1090, 0.0
    %v1788 = vsel %vm1756, %v1091, 0.0
    %v1789 = vsel %vm1757, %v1092, 0.0
    %v1790 = vsel %vm1758, %v1093, 0.0
    %v1791 = vsel %vm1759, %v1094, 0.0
    %vm1792 = vmand %vm1603, %vm1450
    %vm1793 = vmand %vm1604, %vm1451
    %vm1794 = vmand %vm1605, %vm1452
    %vm1795 = vmand %vm1606, %vm1453
    %1796 = vrot.lane.b32.xlu0 %v1063, 127
    %v1797 = vpop.permute.xlu0 %1796
    %1798 = vrot.lane.b32.xlu0 %v1067, 127
    %v1799 = vpop.permute.xlu0 %1798
    %1800 = vrot.lane.b32.xlu0 %v1071, 127
    %v1801 = vpop.permute.xlu0 %1800
    %1802 = vrot.lane.b32.xlu0 %v1075, 127
    %v1803 = vpop.permute.xlu0 %1802
    %1804 = vrot.lane.b32.xlu0 %v1079, 127
    %v1805 = vpop.permute.xlu0 %1804
    %1806 = vrot.lane.b32.xlu0 %v1083, 127
    %v1807 = vpop.permute.xlu0 %1806
    %1808 = vrot.lane.b32.xlu0 %v1087, 127
    %v1809 = vpop.permute.xlu0 %1808
    %1810 = vrot.lane.b32.xlu0 %v1091, 127
    %v1811 = vpop.permute.xlu0 %1810
    %1812 = vrot.lane.b32.xlu0 %v1064, 127
    %v1813 = vpop.permute.xlu0 %1812
    %1814 = vrot.lane.b32.xlu0 %v1068, 127
    %v1815 = vpop.permute.xlu0 %1814
    %1816 = vrot.lane.b32.xlu0 %v1072, 127
    %v1817 = vpop.permute.xlu0 %1816
    %1818 = vrot.lane.b32.xlu0 %v1076, 127
    %v1819 = vpop.permute.xlu0 %1818
    %1820 = vrot.lane.b32.xlu0 %v1080, 127
    %v1821 = vpop.permute.xlu0 %1820
    %1822 = vrot.lane.b32.xlu0 %v1084, 127
    %v1823 = vpop.permute.xlu0 %1822
    %1824 = vrot.lane.b32.xlu0 %v1088, 127
    %v1825 = vpop.permute.xlu0 %1824
    %1826 = vrot.lane.b32.xlu0 %v1092, 127
    %v1827 = vpop.permute.xlu0 %1826
    %1828 = vrot.lane.b32.xlu0 %v1065, 127
    %v1829 = vpop.permute.xlu0 %1828
    %1830 = vrot.lane.b32.xlu0 %v1069, 127
    %v1831 = vpop.permute.xlu0 %1830
    %1832 = vrot.lane.b32.xlu0 %v1073, 127
    %v1833 = vpop.permute.xlu0 %1832
    %1834 = vrot.lane.b32.xlu0 %v1077, 127
    %v1835 = vpop.permute.xlu0 %1834
    %1836 = vrot.lane.b32.xlu0 %v1081, 127
    %v1837 = vpop.permute.xlu0 %1836
    %1838 = vrot.lane.b32.xlu0 %v1085, 127
    %v1839 = vpop.permute.xlu0 %1838
    %1840 = vrot.lane.b32.xlu0 %v1089, 127
    %v1841 = vpop.permute.xlu0 %1840
    %1842 = vrot.lane.b32.xlu0 %v1093, 127
    %v1843 = vpop.permute.xlu0 %1842
    %1844 = vrot.lane.b32.xlu0 %v1066, 127
    %v1845 = vpop.permute.xlu0 %1844
    %1846 = vrot.lane.b32.xlu0 %v1070, 127
    %v1847 = vpop.permute.xlu0 %1846
    %1848 = vrot.lane.b32.xlu0 %v1074, 127
    %v1849 = vpop.permute.xlu0 %1848
    %1850 = vrot.lane.b32.xlu0 %v1078, 127
    %v1851 = vpop.permute.xlu0 %1850
    %1852 = vrot.lane.b32.xlu0 %v1082, 127
    %v1853 = vpop.permute.xlu0 %1852
    %1854 = vrot.lane.b32.xlu0 %v1086, 127
    %v1855 = vpop.permute.xlu0 %1854
    %1856 = vrot.lane.b32.xlu0 %v1090, 127
    %v1857 = vpop.permute.xlu0 %1856
    %1858 = vrot.lane.b32.xlu0 %v1094, 127
    %v1859 = vpop.permute.xlu0 %1858
    %vm1860 = vcmp.lt.s32.totalorder %v1096, 127
    %v1861 = vsel %vm1860, %v1829, %v1845
    %v1862 = vsel %vm1860, %v1831, %v1847
    %v1863 = vsel %vm1860, %v1833, %v1849
    %v1864 = vsel %vm1860, %v1835, %v1851
    %v1865 = vsel %vm1860, %v1837, %v1853
    %v1866 = vsel %vm1860, %v1839, %v1855
    %v1867 = vsel %vm1860, %v1841, %v1857
    %v1868 = vsel %vm1860, %v1843, %v1859
    %v1869 = vsel %vm1860, %v1813, %v1829
    %v1870 = vsel %vm1860, %v1815, %v1831
    %v1871 = vsel %vm1860, %v1817, %v1833
    %v1872 = vsel %vm1860, %v1819, %v1835
    %v1873 = vsel %vm1860, %v1821, %v1837
    %v1874 = vsel %vm1860, %v1823, %v1839
    %v1875 = vsel %vm1860, %v1825, %v1841
    %v1876 = vsel %vm1860, %v1827, %v1843
    %v1877 = vsel %vm1860, %v1797, %v1813
    %v1878 = vsel %vm1860, %v1799, %v1815
    %v1879 = vsel %vm1860, %v1801, %v1817
    %v1880 = vsel %vm1860, %v1803, %v1819
    %v1881 = vsel %vm1860, %v1805, %v1821
    %v1882 = vsel %vm1860, %v1807, %v1823
    %v1883 = vsel %vm1860, %v1809, %v1825
    %v1884 = vsel %vm1860, %v1811, %v1827
    %v1885 = vsel %vm1860, %v1845, %v1797
    %v1886 = vsel %vm1860, %v1847, %v1799
    %v1887 = vsel %vm1860, %v1849, %v1801
    %v1888 = vsel %vm1860, %v1851, %v1803
    %v1889 = vsel %vm1860, %v1853, %v1805
    %v1890 = vsel %vm1860, %v1855, %v1807
    %v1891 = vsel %vm1860, %v1857, %v1809
    %v1892 = vsel %vm1860, %v1859, %v1811
    %v1893 = vsel %vm1792, 1, 0
    %v1894 = vsel %vm1793, 1, 0
    %v1895 = vsel %vm1794, 1, 0
    %v1896 = vsel %vm1795, 1, 0
    %vm1897 = vcmp.eq.s32.totalorder %v1893, 1
    %vm1898 = vcmp.eq.s32.totalorder %v1894, 1
    %vm1899 = vcmp.eq.s32.totalorder %v1895, 1
    %vm1900 = vcmp.eq.s32.totalorder %v1896, 1
    %v1901 = vsel %vm1897, %v1877, 0.0
    %v1902 = vsel %vm1898, %v1869, 0.0
    %v1903 = vsel %vm1899, %v1861, 0.0
    %v1904 = vsel %vm1900, %v1885, 0.0
    %v1905 = vsel %vm1897, %v1878, 0.0
    %v1906 = vsel %vm1898, %v1870, 0.0
    %v1907 = vsel %vm1899, %v1862, 0.0
    %v1908 = vsel %vm1900, %v1886, 0.0
    %v1909 = vsel %vm1897, %v1879, 0.0
    %v1910 = vsel %vm1898, %v1871, 0.0
    %v1911 = vsel %vm1899, %v1863, 0.0
    %v1912 = vsel %vm1900, %v1887, 0.0
    %v1913 = vsel %vm1897, %v1880, 0.0
    %v1914 = vsel %vm1898, %v1872, 0.0
    %v1915 = vsel %vm1899, %v1864, 0.0
    %v1916 = vsel %vm1900, %v1888, 0.0
    %v1917 = vsel %vm1897, %v1881, 0.0
    %v1918 = vsel %vm1898, %v1873, 0.0
    %v1919 = vsel %vm1899, %v1865, 0.0
    %v1920 = vsel %vm1900, %v1889, 0.0
    %v1921 = vsel %vm1897, %v1882, 0.0
    %v1922 = vsel %vm1898, %v1874, 0.0
    %v1923 = vsel %vm1899, %v1866, 0.0
    %v1924 = vsel %vm1900, %v1890, 0.0
    %v1925 = vsel %vm1897, %v1883, 0.0
    %v1926 = vsel %vm1898, %v1875, 0.0
    %v1927 = vsel %vm1899, %v1867, 0.0
    %v1928 = vsel %vm1900, %v1891, 0.0
    %v1929 = vsel %vm1897, %v1884, 0.0
    %v1930 = vsel %vm1898, %v1876, 0.0
    %v1931 = vsel %vm1899, %v1868, 0.0
    %v1932 = vsel %vm1900, %v1892, 0.0
    %v1933 = vadd.s32 %v1108, 1
    %v1934 = vadd.s32 %v1109, 1
    %v1935 = vadd.s32 %v1110, 1
    %v1936 = vadd.s32 %v1111, 1
    %vm1937 = vcmp.ge.s32.totalorder %v1933, 0
    %vm1938 = vcmp.ge.s32.totalorder %v1934, 0
    %vm1939 = vcmp.ge.s32.totalorder %v1935, 0
    %vm1940 = vcmp.ge.s32.totalorder %v1936, 0
    %vm1941 = vcmp.lt.s32.totalorder %v1933, 16
    %vm1942 = vcmp.lt.s32.totalorder %v1934, 16
    %vm1943 = vcmp.lt.s32.totalorder %v1935, 16
    %vm1944 = vcmp.lt.s32.totalorder %v1936, 16
    %vm1945 = vmand %vm1937, %vm1941
    %vm1946 = vmand %vm1938, %vm1942
    %vm1947 = vmand %vm1939, %vm1943
    %vm1948 = vmand %vm1940, %vm1944
    %vm1949 = vmand %vm1945, %vm1140
    %vm1950 = vmand %vm1946, %vm1141
    %vm1951 = vmand %vm1947, %vm1142
    %vm1952 = vmand %vm1948, %vm1143
    %1953 = vrot.lane.b32.xlu0 %v1063, 113
    %v1954 = vpop.permute.xlu0 %1953
    %1955 = vrot.lane.b32.xlu0 %v1067, 113
    %v1956 = vpop.permute.xlu0 %1955
    %1957 = vrot.lane.b32.xlu0 %v1071, 113
    %v1958 = vpop.permute.xlu0 %1957
    %1959 = vrot.lane.b32.xlu0 %v1075, 113
    %v1960 = vpop.permute.xlu0 %1959
    %1961 = vrot.lane.b32.xlu0 %v1079, 113
    %v1962 = vpop.permute.xlu0 %1961
    %1963 = vrot.lane.b32.xlu0 %v1083, 113
    %v1964 = vpop.permute.xlu0 %1963
    %1965 = vrot.lane.b32.xlu0 %v1087, 113
    %v1966 = vpop.permute.xlu0 %1965
    %1967 = vrot.lane.b32.xlu0 %v1091, 113
    %v1968 = vpop.permute.xlu0 %1967
    %1969 = vrot.lane.b32.xlu0 %v1064, 113
    %v1970 = vpop.permute.xlu0 %1969
    %1971 = vrot.lane.b32.xlu0 %v1068, 113
    %v1972 = vpop.permute.xlu0 %1971
    %1973 = vrot.lane.b32.xlu0 %v1072, 113
    %v1974 = vpop.permute.xlu0 %1973
    %1975 = vrot.lane.b32.xlu0 %v1076, 113
    %v1976 = vpop.permute.xlu0 %1975
    %1977 = vrot.lane.b32.xlu0 %v1080, 113
    %v1978 = vpop.permute.xlu0 %1977
    %1979 = vrot.lane.b32.xlu0 %v1084, 113
    %v1980 = vpop.permute.xlu0 %1979
    %1981 = vrot.lane.b32.xlu0 %v1088, 113
    %v1982 = vpop.permute.xlu0 %1981
    %1983 = vrot.lane.b32.xlu0 %v1092, 113
    %v1984 = vpop.permute.xlu0 %1983
    %1985 = vrot.lane.b32.xlu0 %v1065, 113
    %v1986 = vpop.permute.xlu0 %1985
    %1987 = vrot.lane.b32.xlu0 %v1069, 113
    %v1988 = vpop.permute.xlu0 %1987
    %1989 = vrot.lane.b32.xlu0 %v1073, 113
    %v1990 = vpop.permute.xlu0 %1989
    %1991 = vrot.lane.b32.xlu0 %v1077, 113
    %v1992 = vpop.permute.xlu0 %1991
    %1993 = vrot.lane.b32.xlu0 %v1081, 113
    %v1994 = vpop.permute.xlu0 %1993
    %1995 = vrot.lane.b32.xlu0 %v1085, 113
    %v1996 = vpop.permute.xlu0 %1995
    %1997 = vrot.lane.b32.xlu0 %v1089, 113
    %v1998 = vpop.permute.xlu0 %1997
    %1999 = vrot.lane.b32.xlu0 %v1093, 113
    %v2000 = vpop.permute.xlu0 %1999
    %2001 = vrot.lane.b32.xlu0 %v1066, 113
    %v2002 = vpop.permute.xlu0 %2001
    %2003 = vrot.lane.b32.xlu0 %v1070, 113
    %v2004 = vpop.permute.xlu0 %2003
    %2005 = vrot.lane.b32.xlu0 %v1074, 113
    %v2006 = vpop.permute.xlu0 %2005
    %2007 = vrot.lane.b32.xlu0 %v1078, 113
    %v2008 = vpop.permute.xlu0 %2007
    %2009 = vrot.lane.b32.xlu0 %v1082, 113
    %v2010 = vpop.permute.xlu0 %2009
    %2011 = vrot.lane.b32.xlu0 %v1086, 113
    %v2012 = vpop.permute.xlu0 %2011
    %2013 = vrot.lane.b32.xlu0 %v1090, 113
    %v2014 = vpop.permute.xlu0 %2013
    %2015 = vrot.lane.b32.xlu0 %v1094, 113
    %v2016 = vpop.permute.xlu0 %2015
    %vm2017 = vcmp.lt.s32.totalorder %v1096, 113
    %v2018 = vsel %vm2017, %v1986, %v2002
    %v2019 = vsel %vm2017, %v1988, %v2004
    %v2020 = vsel %vm2017, %v1990, %v2006
    %v2021 = vsel %vm2017, %v1992, %v2008
    %v2022 = vsel %vm2017, %v1994, %v2010
    %v2023 = vsel %vm2017, %v1996, %v2012
    %v2024 = vsel %vm2017, %v1998, %v2014
    %v2025 = vsel %vm2017, %v2000, %v2016
    %v2026 = vsel %vm2017, %v1970, %v1986
    %v2027 = vsel %vm2017, %v1972, %v1988
    %v2028 = vsel %vm2017, %v1974, %v1990
    %v2029 = vsel %vm2017, %v1976, %v1992
    %v2030 = vsel %vm2017, %v1978, %v1994
    %v2031 = vsel %vm2017, %v1980, %v1996
    %v2032 = vsel %vm2017, %v1982, %v1998
    %v2033 = vsel %vm2017, %v1984, %v2000
    %v2034 = vsel %vm2017, %v1954, %v1970
    %v2035 = vsel %vm2017, %v1956, %v1972
    %v2036 = vsel %vm2017, %v1958, %v1974
    %v2037 = vsel %vm2017, %v1960, %v1976
    %v2038 = vsel %vm2017, %v1962, %v1978
    %v2039 = vsel %vm2017, %v1964, %v1980
    %v2040 = vsel %vm2017, %v1966, %v1982
    %v2041 = vsel %vm2017, %v1968, %v1984
    %v2042 = vsel %vm2017, %v2002, %v1954
    %v2043 = vsel %vm2017, %v2004, %v1956
    %v2044 = vsel %vm2017, %v2006, %v1958
    %v2045 = vsel %vm2017, %v2008, %v1960
    %v2046 = vsel %vm2017, %v2010, %v1962
    %v2047 = vsel %vm2017, %v2012, %v1964
    %v2048 = vsel %vm2017, %v2014, %v1966
    %v2049 = vsel %vm2017, %v2016, %v1968
    %v2050 = vsel %vm1949, 1, 0
    %v2051 = vsel %vm1950, 1, 0
    %v2052 = vsel %vm1951, 1, 0
    %v2053 = vsel %vm1952, 1, 0
    %vm2054 = vcmp.eq.s32.totalorder %v2050, 1
    %vm2055 = vcmp.eq.s32.totalorder %v2051, 1
    %vm2056 = vcmp.eq.s32.totalorder %v2052, 1
    %vm2057 = vcmp.eq.s32.totalorder %v2053, 1
    %v2058 = vsel %vm2054, %v2034, 0.0
    %v2059 = vsel %vm2055, %v2026, 0.0
    %v2060 = vsel %vm2056, %v2018, 0.0
    %v2061 = vsel %vm2057, %v2042, 0.0
    %v2062 = vsel %vm2054, %v2035, 0.0
    %v2063 = vsel %vm2055, %v2027, 0.0
    %v2064 = vsel %vm2056, %v2019, 0.0
    %v2065 = vsel %vm2057, %v2043, 0.0
    %v2066 = vsel %vm2054, %v2036, 0.0
    %v2067 = vsel %vm2055, %v2028, 0.0
    %v2068 = vsel %vm2056, %v2020, 0.0
    %v2069 = vsel %vm2057, %v2044, 0.0
    %v2070 = vsel %vm2054, %v2037, 0.0
    %v2071 = vsel %vm2055, %v2029, 0.0
    %v2072 = vsel %vm2056, %v2021, 0.0
    %v2073 = vsel %vm2057, %v2045, 0.0
    %v2074 = vsel %vm2054, %v2038, 0.0
    %v2075 = vsel %vm2055, %v2030, 0.0
    %v2076 = vsel %vm2056, %v2022, 0.0
    %v2077 = vsel %vm2057, %v2046, 0.0
    %v2078 = vsel %vm2054, %v2039, 0.0
    %v2079 = vsel %vm2055, %v2031, 0.0
    %v2080 = vsel %vm2056, %v2023, 0.0
    %v2081 = vsel %vm2057, %v2047, 0.0
    %v2082 = vsel %vm2054, %v2040, 0.0
    %v2083 = vsel %vm2055, %v2032, 0.0
    %v2084 = vsel %vm2056, %v2024, 0.0
    %v2085 = vsel %vm2057, %v2048, 0.0
    %v2086 = vsel %vm2054, %v2041, 0.0
    %v2087 = vsel %vm2055, %v2033, 0.0
    %v2088 = vsel %vm2056, %v2025, 0.0
    %v2089 = vsel %vm2057, %v2049, 0.0
    %vm2090 = vmand %vm1945, %vm1293
    %vm2091 = vmand %vm1946, %vm1294
    %vm2092 = vmand %vm1947, %vm1295
    %vm2093 = vmand %vm1948, %vm1296
    %2094 = vrot.lane.b32.xlu0 %v1063, 112
    %v2095 = vpop.permute.xlu0 %2094
    %2096 = vrot.lane.b32.xlu0 %v1067, 112
    %v2097 = vpop.permute.xlu0 %2096
    %2098 = vrot.lane.b32.xlu0 %v1071, 112
    %v2099 = vpop.permute.xlu0 %2098
    %2100 = vrot.lane.b32.xlu0 %v1075, 112
    %v2101 = vpop.permute.xlu0 %2100
    %2102 = vrot.lane.b32.xlu0 %v1079, 112
    %v2103 = vpop.permute.xlu0 %2102
    %2104 = vrot.lane.b32.xlu0 %v1083, 112
    %v2105 = vpop.permute.xlu0 %2104
    %2106 = vrot.lane.b32.xlu0 %v1087, 112
    %v2107 = vpop.permute.xlu0 %2106
    %2108 = vrot.lane.b32.xlu0 %v1091, 112
    %v2109 = vpop.permute.xlu0 %2108
    %2110 = vrot.lane.b32.xlu0 %v1064, 112
    %v2111 = vpop.permute.xlu0 %2110
    %2112 = vrot.lane.b32.xlu0 %v1068, 112
    %v2113 = vpop.permute.xlu0 %2112
    %2114 = vrot.lane.b32.xlu0 %v1072, 112
    %v2115 = vpop.permute.xlu0 %2114
    %2116 = vrot.lane.b32.xlu0 %v1076, 112
    %v2117 = vpop.permute.xlu0 %2116
    %2118 = vrot.lane.b32.xlu0 %v1080, 112
    %v2119 = vpop.permute.xlu0 %2118
    %2120 = vrot.lane.b32.xlu0 %v1084, 112
    %v2121 = vpop.permute.xlu0 %2120
    %2122 = vrot.lane.b32.xlu0 %v1088, 112
    %v2123 = vpop.permute.xlu0 %2122
    %2124 = vrot.lane.b32.xlu0 %v1092, 112
    %v2125 = vpop.permute.xlu0 %2124
    %2126 = vrot.lane.b32.xlu0 %v1065, 112
    %v2127 = vpop.permute.xlu0 %2126
    %2128 = vrot.lane.b32.xlu0 %v1069, 112
    %v2129 = vpop.permute.xlu0 %2128
    %2130 = vrot.lane.b32.xlu0 %v1073, 112
    %v2131 = vpop.permute.xlu0 %2130
    %2132 = vrot.lane.b32.xlu0 %v1077, 112
    %v2133 = vpop.permute.xlu0 %2132
    %2134 = vrot.lane.b32.xlu0 %v1081, 112
    %v2135 = vpop.permute.xlu0 %2134
    %2136 = vrot.lane.b32.xlu0 %v1085, 112
    %v2137 = vpop.permute.xlu0 %2136
    %2138 = vrot.lane.b32.xlu0 %v1089, 112
    %v2139 = vpop.permute.xlu0 %2138
    %2140 = vrot.lane.b32.xlu0 %v1093, 112
    %v2141 = vpop.permute.xlu0 %2140
    %2142 = vrot.lane.b32.xlu0 %v1066, 112
    %v2143 = vpop.permute.xlu0 %2142
    %2144 = vrot.lane.b32.xlu0 %v1070, 112
    %v2145 = vpop.permute.xlu0 %2144
    %2146 = vrot.lane.b32.xlu0 %v1074, 112
    %v2147 = vpop.permute.xlu0 %2146
    %2148 = vrot.lane.b32.xlu0 %v1078, 112
    %v2149 = vpop.permute.xlu0 %2148
    %2150 = vrot.lane.b32.xlu0 %v1082, 112
    %v2151 = vpop.permute.xlu0 %2150
    %2152 = vrot.lane.b32.xlu0 %v1086, 112
    %v2153 = vpop.permute.xlu0 %2152
    %2154 = vrot.lane.b32.xlu0 %v1090, 112
    %v2155 = vpop.permute.xlu0 %2154
    %2156 = vrot.lane.b32.xlu0 %v1094, 112
    %v2157 = vpop.permute.xlu0 %2156
    %vm2158 = vcmp.lt.s32.totalorder %v1096, 112
    %v2159 = vsel %vm2158, %v2127, %v2143
    %v2160 = vsel %vm2158, %v2129, %v2145
    %v2161 = vsel %vm2158, %v2131, %v2147
    %v2162 = vsel %vm2158, %v2133, %v2149
    %v2163 = vsel %vm2158, %v2135, %v2151
    %v2164 = vsel %vm2158, %v2137, %v2153
    %v2165 = vsel %vm2158, %v2139, %v2155
    %v2166 = vsel %vm2158, %v2141, %v2157
    %v2167 = vsel %vm2158, %v2111, %v2127
    %v2168 = vsel %vm2158, %v2113, %v2129
    %v2169 = vsel %vm2158, %v2115, %v2131
    %v2170 = vsel %vm2158, %v2117, %v2133
    %v2171 = vsel %vm2158, %v2119, %v2135
    %v2172 = vsel %vm2158, %v2121, %v2137
    %v2173 = vsel %vm2158, %v2123, %v2139
    %v2174 = vsel %vm2158, %v2125, %v2141
    %v2175 = vsel %vm2158, %v2095, %v2111
    %v2176 = vsel %vm2158, %v2097, %v2113
    %v2177 = vsel %vm2158, %v2099, %v2115
    %v2178 = vsel %vm2158, %v2101, %v2117
    %v2179 = vsel %vm2158, %v2103, %v2119
    %v2180 = vsel %vm2158, %v2105, %v2121
    %v2181 = vsel %vm2158, %v2107, %v2123
    %v2182 = vsel %vm2158, %v2109, %v2125
    %v2183 = vsel %vm2158, %v2143, %v2095
    %v2184 = vsel %vm2158, %v2145, %v2097
    %v2185 = vsel %vm2158, %v2147, %v2099
    %v2186 = vsel %vm2158, %v2149, %v2101
    %v2187 = vsel %vm2158, %v2151, %v2103
    %v2188 = vsel %vm2158, %v2153, %v2105
    %v2189 = vsel %vm2158, %v2155, %v2107
    %v2190 = vsel %vm2158, %v2157, %v2109
    %v2191 = vsel %vm2090, 1, 0
    %v2192 = vsel %vm2091, 1, 0
    %v2193 = vsel %vm2092, 1, 0
    %v2194 = vsel %vm2093, 1, 0
    %vm2195 = vcmp.eq.s32.totalorder %v2191, 1
    %vm2196 = vcmp.eq.s32.totalorder %v2192, 1
    %vm2197 = vcmp.eq.s32.totalorder %v2193, 1
    %vm2198 = vcmp.eq.s32.totalorder %v2194, 1
    %v2199 = vsel %vm2195, %v2175, 0.0
    %v2200 = vsel %vm2196, %v2167, 0.0
    %v2201 = vsel %vm2197, %v2159, 0.0
    %v2202 = vsel %vm2198, %v2183, 0.0
    %v2203 = vsel %vm2195, %v2176, 0.0
    %v2204 = vsel %vm2196, %v2168, 0.0
    %v2205 = vsel %vm2197, %v2160, 0.0
    %v2206 = vsel %vm2198, %v2184, 0.0
    %v2207 = vsel %vm2195, %v2177, 0.0
    %v2208 = vsel %vm2196, %v2169, 0.0
    %v2209 = vsel %vm2197, %v2161, 0.0
    %v2210 = vsel %vm2198, %v2185, 0.0
    %v2211 = vsel %vm2195, %v2178, 0.0
    %v2212 = vsel %vm2196, %v2170, 0.0
    %v2213 = vsel %vm2197, %v2162, 0.0
    %v2214 = vsel %vm2198, %v2186, 0.0
    %v2215 = vsel %vm2195, %v2179, 0.0
    %v2216 = vsel %vm2196, %v2171, 0.0
    %v2217 = vsel %vm2197, %v2163, 0.0
    %v2218 = vsel %vm2198, %v2187, 0.0
    %v2219 = vsel %vm2195, %v2180, 0.0
    %v2220 = vsel %vm2196, %v2172, 0.0
    %v2221 = vsel %vm2197, %v2164, 0.0
    %v2222 = vsel %vm2198, %v2188, 0.0
    %v2223 = vsel %vm2195, %v2181, 0.0
    %v2224 = vsel %vm2196, %v2173, 0.0
    %v2225 = vsel %vm2197, %v2165, 0.0
    %v2226 = vsel %vm2198, %v2189, 0.0
    %v2227 = vsel %vm2195, %v2182, 0.0
    %v2228 = vsel %vm2196, %v2174, 0.0
    %v2229 = vsel %vm2197, %v2166, 0.0
    %v2230 = vsel %vm2198, %v2190, 0.0
    %vm2231 = vmand %vm1945, %vm1450
    %vm2232 = vmand %vm1946, %vm1451
    %vm2233 = vmand %vm1947, %vm1452
    %vm2234 = vmand %vm1948, %vm1453
    %2235 = vrot.lane.b32.xlu0 %v1063, 111
    %v2236 = vpop.permute.xlu0 %2235
    %2237 = vrot.lane.b32.xlu0 %v1067, 111
    %v2238 = vpop.permute.xlu0 %2237
    %2239 = vrot.lane.b32.xlu0 %v1071, 111
    %v2240 = vpop.permute.xlu0 %2239
    %2241 = vrot.lane.b32.xlu0 %v1075, 111
    %v2242 = vpop.permute.xlu0 %2241
    %2243 = vrot.lane.b32.xlu0 %v1079, 111
    %v2244 = vpop.permute.xlu0 %2243
    %2245 = vrot.lane.b32.xlu0 %v1083, 111
    %v2246 = vpop.permute.xlu0 %2245
    %2247 = vrot.lane.b32.xlu0 %v1087, 111
    %v2248 = vpop.permute.xlu0 %2247
    %2249 = vrot.lane.b32.xlu0 %v1091, 111
    %v2250 = vpop.permute.xlu0 %2249
    %2251 = vrot.lane.b32.xlu0 %v1064, 111
    %v2252 = vpop.permute.xlu0 %2251
    %2253 = vrot.lane.b32.xlu0 %v1068, 111
    %v2254 = vpop.permute.xlu0 %2253
    %2255 = vrot.lane.b32.xlu0 %v1072, 111
    %v2256 = vpop.permute.xlu0 %2255
    %2257 = vrot.lane.b32.xlu0 %v1076, 111
    %v2258 = vpop.permute.xlu0 %2257
    %2259 = vrot.lane.b32.xlu0 %v1080, 111
    %v2260 = vpop.permute.xlu0 %2259
    %2261 = vrot.lane.b32.xlu0 %v1084, 111
    %v2262 = vpop.permute.xlu0 %2261
    %2263 = vrot.lane.b32.xlu0 %v1088, 111
    %v2264 = vpop.permute.xlu0 %2263
    %2265 = vrot.lane.b32.xlu0 %v1092, 111
    %v2266 = vpop.permute.xlu0 %2265
    %2267 = vrot.lane.b32.xlu0 %v1065, 111
    %v2268 = vpop.permute.xlu0 %2267
    %2269 = vrot.lane.b32.xlu0 %v1069, 111
    %v2270 = vpop.permute.xlu0 %2269
    %2271 = vrot.lane.b32.xlu0 %v1073, 111
    %v2272 = vpop.permute.xlu0 %2271
    %2273 = vrot.lane.b32.xlu0 %v1077, 111
    %v2274 = vpop.permute.xlu0 %2273
    %2275 = vrot.lane.b32.xlu0 %v1081, 111
    %v2276 = vpop.permute.xlu0 %2275
    %2277 = vrot.lane.b32.xlu0 %v1085, 111
    %v2278 = vpop.permute.xlu0 %2277
    %2279 = vrot.lane.b32.xlu0 %v1089, 111
    %v2280 = vpop.permute.xlu0 %2279
    %2281 = vrot.lane.b32.xlu0 %v1093, 111
    %v2282 = vpop.permute.xlu0 %2281
    %2283 = vrot.lane.b32.xlu0 %v1066, 111
    %v2284 = vpop.permute.xlu0 %2283
    %2285 = vrot.lane.b32.xlu0 %v1070, 111
    %v2286 = vpop.permute.xlu0 %2285
    %2287 = vrot.lane.b32.xlu0 %v1074, 111
    %v2288 = vpop.permute.xlu0 %2287
    %2289 = vrot.lane.b32.xlu0 %v1078, 111
    %v2290 = vpop.permute.xlu0 %2289
    %2291 = vrot.lane.b32.xlu0 %v1082, 111
    %v2292 = vpop.permute.xlu0 %2291
    %2293 = vrot.lane.b32.xlu0 %v1086, 111
    %v2294 = vpop.permute.xlu0 %2293
    %2295 = vrot.lane.b32.xlu0 %v1090, 111
    %v2296 = vpop.permute.xlu0 %2295
    %2297 = vrot.lane.b32.xlu0 %v1094, 111
    %v2298 = vpop.permute.xlu0 %2297
    %vm2299 = vcmp.lt.s32.totalorder %v1096, 111
    %v2300 = vsel %vm2299, %v2268, %v2284
    %v2301 = vsel %vm2299, %v2270, %v2286
    %v2302 = vsel %vm2299, %v2272, %v2288
    %v2303 = vsel %vm2299, %v2274, %v2290
    %v2304 = vsel %vm2299, %v2276, %v2292
    %v2305 = vsel %vm2299, %v2278, %v2294
    %v2306 = vsel %vm2299, %v2280, %v2296
    %v2307 = vsel %vm2299, %v2282, %v2298
    %v2308 = vsel %vm2299, %v2252, %v2268
    %v2309 = vsel %vm2299, %v2254, %v2270
    %v2310 = vsel %vm2299, %v2256, %v2272
    %v2311 = vsel %vm2299, %v2258, %v2274
    %v2312 = vsel %vm2299, %v2260, %v2276
    %v2313 = vsel %vm2299, %v2262, %v2278
    %v2314 = vsel %vm2299, %v2264, %v2280
    %v2315 = vsel %vm2299, %v2266, %v2282
    %v2316 = vsel %vm2299, %v2236, %v2252
    %v2317 = vsel %vm2299, %v2238, %v2254
    %v2318 = vsel %vm2299, %v2240, %v2256
    %v2319 = vsel %vm2299, %v2242, %v2258
    %v2320 = vsel %vm2299, %v2244, %v2260
    %v2321 = vsel %vm2299, %v2246, %v2262
    %v2322 = vsel %vm2299, %v2248, %v2264
    %v2323 = vsel %vm2299, %v2250, %v2266
    %v2324 = vsel %vm2299, %v2284, %v2236
    %v2325 = vsel %vm2299, %v2286, %v2238
    %v2326 = vsel %vm2299, %v2288, %v2240
    %v2327 = vsel %vm2299, %v2290, %v2242
    %v2328 = vsel %vm2299, %v2292, %v2244
    %v2329 = vsel %vm2299, %v2294, %v2246
    %v2330 = vsel %vm2299, %v2296, %v2248
    %v2331 = vsel %vm2299, %v2298, %v2250
    %v2332 = vsel %vm2231, 1, 0
    %v2333 = vsel %vm2232, 1, 0
    %v2334 = vsel %vm2233, 1, 0
    %v2335 = vsel %vm2234, 1, 0
    %vm2336 = vcmp.eq.s32.totalorder %v2332, 1
    %vm2337 = vcmp.eq.s32.totalorder %v2333, 1
    %vm2338 = vcmp.eq.s32.totalorder %v2334, 1
    %vm2339 = vcmp.eq.s32.totalorder %v2335, 1
    %v2340 = vsel %vm2336, %v2316, 0.0
    %v2341 = vsel %vm2337, %v2308, 0.0
    %v2342 = vsel %vm2338, %v2300, 0.0
    %v2343 = vsel %vm2339, %v2324, 0.0
    %v2344 = vsel %vm2336, %v2317, 0.0
    %v2345 = vsel %vm2337, %v2309, 0.0
    %v2346 = vsel %vm2338, %v2301, 0.0
    %v2347 = vsel %vm2339, %v2325, 0.0
    %v2348 = vsel %vm2336, %v2318, 0.0
    %v2349 = vsel %vm2337, %v2310, 0.0
    %v2350 = vsel %vm2338, %v2302, 0.0
    %v2351 = vsel %vm2339, %v2326, 0.0
    %v2352 = vsel %vm2336, %v2319, 0.0
    %v2353 = vsel %vm2337, %v2311, 0.0
    %v2354 = vsel %vm2338, %v2303, 0.0
    %v2355 = vsel %vm2339, %v2327, 0.0
    %v2356 = vsel %vm2336, %v2320, 0.0
    %v2357 = vsel %vm2337, %v2312, 0.0
    %v2358 = vsel %vm2338, %v2304, 0.0
    %v2359 = vsel %vm2339, %v2328, 0.0
    %v2360 = vsel %vm2336, %v2321, 0.0
    %v2361 = vsel %vm2337, %v2313, 0.0
    %v2362 = vsel %vm2338, %v2305, 0.0
    %v2363 = vsel %vm2339, %v2329, 0.0
    %v2364 = vsel %vm2336, %v2322, 0.0
    %v2365 = vsel %vm2337, %v2314, 0.0
    %v2366 = vsel %vm2338, %v2306, 0.0
    %v2367 = vsel %vm2339, %v2330, 0.0
    %v2368 = vsel %vm2336, %v2323, 0.0
    %v2369 = vsel %vm2337, %v2315, 0.0
    %v2370 = vsel %vm2338, %v2307, 0.0
    %v2371 = vsel %vm2339, %v2331, 0.0
    %v2372 = vpack.c.bf16 %v1257, %v1253
    %v2373 = vpack.c.bf16 %v1258, %v1254
    %v2374 = vpack.c.bf16 %v1259, %v1255
    %v2375 = vpack.c.bf16 %v1260, %v1256
    %v2376 = vpack.c.bf16 %v1265, %v1261
    %v2377 = vpack.c.bf16 %v1266, %v1262
    %v2378 = vpack.c.bf16 %v1267, %v1263
    %v2379 = vpack.c.bf16 %v1268, %v1264
    %v2380 = vpack.c.bf16 %v1273, %v1269
    %v2381 = vpack.c.bf16 %v1274, %v1270
    %v2382 = vpack.c.bf16 %v1275, %v1271
    %v2383 = vpack.c.bf16 %v1276, %v1272
    %v2384 = vpack.c.bf16 %v1281, %v1277
    %v2385 = vpack.c.bf16 %v1282, %v1278
    %v2386 = vpack.c.bf16 %v1283, %v1279
    %v2387 = vpack.c.bf16 %v1284, %v1280
    %v2388 = vpack.c.bf16 %v1410, %v1406
    %v2389 = vpack.c.bf16 %v1411, %v1407
    %v2390 = vpack.c.bf16 %v1412, %v1408
    %v2391 = vpack.c.bf16 %v1413, %v1409
    %v2392 = vpack.c.bf16 %v1418, %v1414
    %v2393 = vpack.c.bf16 %v1419, %v1415
    %v2394 = vpack.c.bf16 %v1420, %v1416
    %v2395 = vpack.c.bf16 %v1421, %v1417
    %v2396 = vpack.c.bf16 %v1426, %v1422
    %v2397 = vpack.c.bf16 %v1427, %v1423
    %v2398 = vpack.c.bf16 %v1428, %v1424
    %v2399 = vpack.c.bf16 %v1429, %v1425
    %v2400 = vpack.c.bf16 %v1434, %v1430
    %v2401 = vpack.c.bf16 %v1435, %v1431
    %v2402 = vpack.c.bf16 %v1436, %v1432
    %v2403 = vpack.c.bf16 %v1437, %v1433
    %v2404 = vpack.c.bf16 %v1567, %v1563
    %v2405 = vpack.c.bf16 %v1568, %v1564
    %v2406 = vpack.c.bf16 %v1569, %v1565
    %v2407 = vpack.c.bf16 %v1570, %v1566
    %v2408 = vpack.c.bf16 %v1575, %v1571
    %v2409 = vpack.c.bf16 %v1576, %v1572
    %v2410 = vpack.c.bf16 %v1577, %v1573
    %v2411 = vpack.c.bf16 %v1578, %v1574
    %v2412 = vpack.c.bf16 %v1583, %v1579
    %v2413 = vpack.c.bf16 %v1584, %v1580
    %v2414 = vpack.c.bf16 %v1585, %v1581
    %v2415 = vpack.c.bf16 %v1586, %v1582
    %v2416 = vpack.c.bf16 %v1591, %v1587
    %v2417 = vpack.c.bf16 %v1592, %v1588
    %v2418 = vpack.c.bf16 %v1593, %v1589
    %v2419 = vpack.c.bf16 %v1594, %v1590
    %v2420 = vpack.c.bf16 %v1720, %v1716
    %v2421 = vpack.c.bf16 %v1721, %v1717
    %v2422 = vpack.c.bf16 %v1722, %v1718
    %v2423 = vpack.c.bf16 %v1723, %v1719
    %v2424 = vpack.c.bf16 %v1728, %v1724
    %v2425 = vpack.c.bf16 %v1729, %v1725
    %v2426 = vpack.c.bf16 %v1730, %v1726
    %v2427 = vpack.c.bf16 %v1731, %v1727
    %v2428 = vpack.c.bf16 %v1736, %v1732
    %v2429 = vpack.c.bf16 %v1737, %v1733
    %v2430 = vpack.c.bf16 %v1738, %v1734
    %v2431 = vpack.c.bf16 %v1739, %v1735
    %v2432 = vpack.c.bf16 %v1744, %v1740
    %v2433 = vpack.c.bf16 %v1745, %v1741
    %v2434 = vpack.c.bf16 %v1746, %v1742
    %v2435 = vpack.c.bf16 %v1747, %v1743
    %v2436 = vpack.c.bf16 %v1764, %v1760
    %v2437 = vpack.c.bf16 %v1765, %v1761
    %v2438 = vpack.c.bf16 %v1766, %v1762
    %v2439 = vpack.c.bf16 %v1767, %v1763
    %v2440 = vpack.c.bf16 %v1772, %v1768
    %v2441 = vpack.c.bf16 %v1773, %v1769
    %v2442 = vpack.c.bf16 %v1774, %v1770
    %v2443 = vpack.c.bf16 %v1775, %v1771
    %v2444 = vpack.c.bf16 %v1780, %v1776
    %v2445 = vpack.c.bf16 %v1781, %v1777
    %v2446 = vpack.c.bf16 %v1782, %v1778
    %v2447 = vpack.c.bf16 %v1783, %v1779
    %v2448 = vpack.c.bf16 %v1788, %v1784
    %v2449 = vpack.c.bf16 %v1789, %v1785
    %v2450 = vpack.c.bf16 %v1790, %v1786
    %v2451 = vpack.c.bf16 %v1791, %v1787
    %v2452 = vpack.c.bf16 %v1905, %v1901
    %v2453 = vpack.c.bf16 %v1906, %v1902
    %v2454 = vpack.c.bf16 %v1907, %v1903
    %v2455 = vpack.c.bf16 %v1908, %v1904
    %v2456 = vpack.c.bf16 %v1913, %v1909
    %v2457 = vpack.c.bf16 %v1914, %v1910
    %v2458 = vpack.c.bf16 %v1915, %v1911
    %v2459 = vpack.c.bf16 %v1916, %v1912
    %v2460 = vpack.c.bf16 %v1921, %v1917
    %v2461 = vpack.c.bf16 %v1922, %v1918
    %v2462 = vpack.c.bf16 %v1923, %v1919
    %v2463 = vpack.c.bf16 %v1924, %v1920
    %v2464 = vpack.c.bf16 %v1929, %v1925
    %v2465 = vpack.c.bf16 %v1930, %v1926
    %v2466 = vpack.c.bf16 %v1931, %v1927
    %v2467 = vpack.c.bf16 %v1932, %v1928
    %v2468 = vpack.c.bf16 %v2062, %v2058
    %v2469 = vpack.c.bf16 %v2063, %v2059
    %v2470 = vpack.c.bf16 %v2064, %v2060
    %v2471 = vpack.c.bf16 %v2065, %v2061
    %v2472 = vpack.c.bf16 %v2070, %v2066
    %v2473 = vpack.c.bf16 %v2071, %v2067
    %v2474 = vpack.c.bf16 %v2072, %v2068
    %v2475 = vpack.c.bf16 %v2073, %v2069
    %v2476 = vpack.c.bf16 %v2078, %v2074
    %v2477 = vpack.c.bf16 %v2079, %v2075
    %v2478 = vpack.c.bf16 %v2080, %v2076
    %v2479 = vpack.c.bf16 %v2081, %v2077
    %v2480 = vpack.c.bf16 %v2086, %v2082
    %v2481 = vpack.c.bf16 %v2087, %v2083
    %v2482 = vpack.c.bf16 %v2088, %v2084
    %v2483 = vpack.c.bf16 %v2089, %v2085
    %v2484 = vpack.c.bf16 %v2203, %v2199
    %v2485 = vpack.c.bf16 %v2204, %v2200
    %v2486 = vpack.c.bf16 %v2205, %v2201
    %v2487 = vpack.c.bf16 %v2206, %v2202
    %v2488 = vpack.c.bf16 %v2211, %v2207
    %v2489 = vpack.c.bf16 %v2212, %v2208
    %v2490 = vpack.c.bf16 %v2213, %v2209
    %v2491 = vpack.c.bf16 %v2214, %v2210
    %v2492 = vpack.c.bf16 %v2219, %v2215
    %v2493 = vpack.c.bf16 %v2220, %v2216
    %v2494 = vpack.c.bf16 %v2221, %v2217
    %v2495 = vpack.c.bf16 %v2222, %v2218
    %v2496 = vpack.c.bf16 %v2227, %v2223
    %v2497 = vpack.c.bf16 %v2228, %v2224
    %v2498 = vpack.c.bf16 %v2229, %v2225
    %v2499 = vpack.c.bf16 %v2230, %v2226
    %v2500 = vpack.c.bf16 %v2344, %v2340
    %v2501 = vpack.c.bf16 %v2345, %v2341
    %v2502 = vpack.c.bf16 %v2346, %v2342
    %v2503 = vpack.c.bf16 %v2347, %v2343
    %v2504 = vpack.c.bf16 %v2352, %v2348
    %v2505 = vpack.c.bf16 %v2353, %v2349
    %v2506 = vpack.c.bf16 %v2354, %v2350
    %v2507 = vpack.c.bf16 %v2355, %v2351
    %v2508 = vpack.c.bf16 %v2360, %v2356
    %v2509 = vpack.c.bf16 %v2361, %v2357
    %v2510 = vpack.c.bf16 %v2362, %v2358
    %v2511 = vpack.c.bf16 %v2363, %v2359
    %v2512 = vpack.c.bf16 %v2368, %v2364
    %v2513 = vpack.c.bf16 %v2369, %v2365
    %v2514 = vpack.c.bf16 %v2370, %v2366
    %v2515 = vpack.c.bf16 %v2371, %v2367
    %2517 = vset.pattern.permute.xlu0 0
    %2518 = vperm.xlu0 %2517, %v225
    %v2519 = vpop.permute.xlu0 %2518
    %2522 = vset.pattern.permute.xlu0 0
    %2523 = vperm.xlu0 %2522, %v226
    %v2524 = vpop.permute.xlu0 %2523
    %2527 = vset.pattern.permute.xlu0 0
    %2528 = vperm.xlu0 %2527, %v227
    %v2529 = vpop.permute.xlu0 %2528
    %2532 = vset.pattern.permute.xlu0 0
    %2533 = vperm.xlu0 %2532, %v228
    %v2534 = vpop.permute.xlu0 %2533
    %2537 = vset.pattern.permute.xlu0 0
    %2538 = vperm.xlu0 %2537, %v229
    %v2539 = vpop.permute.xlu0 %2538
    %2542 = vset.pattern.permute.xlu0 0
    %2543 = vperm.xlu0 %2542, %v230
    %v2544 = vpop.permute.xlu0 %2543
    %2547 = vset.pattern.permute.xlu0 0
    %2548 = vperm.xlu0 %2547, %v231
    %v2549 = vpop.permute.xlu0 %2548
    %2552 = vset.pattern.permute.xlu0 0
    %2553 = vperm.xlu0 %2552, %v232
    %v2554 = vpop.permute.xlu0 %2553
    %v2580 = vunpack.c.l.b16 %v185
    %v2581 = vunpack.c.h.b16 %v185
    %v2582 = vunpack.c.l.b16 %v186
    %v2583 = vunpack.c.h.b16 %v186
    %v2584 = vunpack.c.l.b16 %v187
    %v2585 = vunpack.c.l.b16 %v188
    %v2586 = vunpack.c.h.b16 %v188
    %v2587 = vunpack.c.l.b16 %v189
    %v2588 = vunpack.c.h.b16 %v189
    %v2589 = vunpack.c.l.b16 %v190
    %v2590 = vunpack.c.l.b16 %v191
    %v2591 = vunpack.c.h.b16 %v191
    %v2592 = vunpack.c.l.b16 %v192
    %v2593 = vunpack.c.h.b16 %v192
    %v2594 = vunpack.c.l.b16 %v193
    %v2595 = vunpack.c.l.b16 %v194
    %v2596 = vunpack.c.h.b16 %v194
    %v2597 = vunpack.c.l.b16 %v195
    %v2598 = vunpack.c.h.b16 %v195
    %v2599 = vunpack.c.l.b16 %v196
    %v2600 = vunpack.c.l.b16 %v197
    %v2601 = vunpack.c.h.b16 %v197
    %v2602 = vunpack.c.l.b16 %v198
    %v2603 = vunpack.c.h.b16 %v198
    %v2604 = vunpack.c.l.b16 %v199
    %v2605 = vunpack.c.l.b16 %v200
    %v2606 = vunpack.c.h.b16 %v200
    %v2607 = vunpack.c.l.b16 %v201
    %v2608 = vunpack.c.h.b16 %v201
    %v2609 = vunpack.c.l.b16 %v202
    %v2610 = vunpack.c.l.b16 %v203
    %v2611 = vunpack.c.h.b16 %v203
    %v2612 = vunpack.c.l.b16 %v204
    %v2613 = vunpack.c.h.b16 %v204
    %v2614 = vunpack.c.l.b16 %v205
    %v2615 = vunpack.c.l.b16 %v206
    %v2616 = vunpack.c.h.b16 %v206
    %v2617 = vunpack.c.l.b16 %v207
    %v2618 = vunpack.c.h.b16 %v207
    %v2619 = vunpack.c.l.b16 %v208
    %v2620 = vpack.c.b16 %v2585, %v2580
    %v2621 = vpack.c.b16 %v2586, %v2581
    %v2622 = vpack.c.b16 %v2587, %v2582
    %v2623 = vpack.c.b16 %v2588, %v2583
    %v2624 = vpack.c.b16 %v2589, %v2584
    %v2625 = vpack.c.b16 %v2595, %v2590
    %v2626 = vpack.c.b16 %v2596, %v2591
    %v2627 = vpack.c.b16 %v2597, %v2592
    %v2628 = vpack.c.b16 %v2598, %v2593
    %v2629 = vpack.c.b16 %v2599, %v2594
    %v2630 = vpack.c.b16 %v2605, %v2600
    %v2631 = vpack.c.b16 %v2606, %v2601
    %v2632 = vpack.c.b16 %v2607, %v2602
    %v2633 = vpack.c.b16 %v2608, %v2603
    %v2634 = vpack.c.b16 %v2609, %v2604
    %v2635 = vpack.c.b16 %v2615, %v2610
    %v2636 = vpack.c.b16 %v2616, %v2611
    %v2637 = vpack.c.b16 %v2617, %v2612
    %v2638 = vpack.c.b16 %v2618, %v2613
    %v2639 = vpack.c.b16 %v2619, %v2614
    %v2657 = vsel %vm317, %v2624, 0
    %v2660 = vsel %vm317, %v2629, 0
    %v2663 = vsel %vm317, %v2634, 0
    %v2666 = vsel %vm317, %v2639, 0
    %2668 = vmatprep.subr.bf16.mxu0 %v2401
    %2669 = vmatpush1.bf16.msra.mxu0 %v2400
    %2670 = vmatprep.subr.bf16.mxu0 %v2397
    %2671 = vmatpush1.bf16.msra.mxu0 %v2396
    %2672 = vmatprep.subr.bf16.mxu0 %v2393
    %2673 = vmatpush1.bf16.msra.mxu0 %v2392
    %2674 = vmatprep.subr.bf16.mxu0 %v2389
    %2675 = vmatpush1.bf16.msra.mxu0 %v2388
    %2676 = vmatprep.subr.bf16.mxu0 %v2385
    %2677 = vmatpush1.bf16.msra.mxu0 %v2384
    %2678 = vmatprep.subr.bf16.mxu0 %v2381
    %2679 = vmatpush1.bf16.msra.mxu0 %v2380
    %2680 = vmatprep.subr.bf16.mxu0 %v2377
    %2681 = vmatpush1.bf16.msra.mxu0 %v2376
    %2682 = vmatprep.subr.bf16.mxu0 %v2373
    %2683 = vmatpush1.bf16.msra.mxu0 %v2372
    %2684 = vmatprep.subr.bf16.mxu0 %v2433
    %2685 = vmatpush2.bf16.msra.mxu0 %v2432
    %2686 = vmatprep.subr.bf16.mxu0 %v2429
    %2687 = vmatpush2.bf16.msra.mxu0 %v2428
    %2688 = vmatprep.subr.bf16.mxu0 %v2425
    %2689 = vmatpush2.bf16.msra.mxu0 %v2424
    %2690 = vmatprep.subr.bf16.mxu0 %v2421
    %2691 = vmatpush2.bf16.msra.mxu0 %v2420
    %2692 = vmatprep.subr.bf16.mxu0 %v2417
    %2693 = vmatpush2.bf16.msra.mxu0 %v2416
    %2694 = vmatprep.subr.bf16.mxu0 %v2413
    %2695 = vmatpush2.bf16.msra.mxu0 %v2412
    %2696 = vmatprep.subr.bf16.mxu0 %v2409
    %2697 = vmatpush2.bf16.msra.mxu0 %v2408
    %2698 = vmatprep.subr.bf16.mxu0 %v2405
    %2699 = vmatpush2.bf16.msra.mxu0 %v2404
    %2700 = vmatprep.mubr.bf16.mxu0 %v2621
    %2701 = vmatmul.mubr.bf16.gmra.mxu0 %v2620
    %v2702 = vpop.f32.mrf.mxu0
    %v2703 = vadd.f32 %v2519, %v2702
    %v2704 = vpop.f32.mrf.mxu0
    %v2705 = vadd.f32 %v2519, %v2704
    %v2706 = vpop.f32.mrf.mxu0
    %v2707 = vadd.f32 %v2524, %v2706
    %v2708 = vpop.f32.mrf.mxu0
    %v2709 = vadd.f32 %v2524, %v2708
    %2710 = vmatprep.mubr.bf16.mxu0 %v2626
    %2711 = vmatmul.mubr.bf16.gmra.mxu0 %v2625
    %v2712 = vpop.f32.mrf.mxu0
    %v2713 = vadd.f32 %v2529, %v2712
    %v2714 = vpop.f32.mrf.mxu0
    %v2715 = vadd.f32 %v2529, %v2714
    %v2716 = vpop.f32.mrf.mxu0
    %v2717 = vadd.f32 %v2534, %v2716
    %v2718 = vpop.f32.mrf.mxu0
    %v2719 = vadd.f32 %v2534, %v2718
    %2720 = vmatprep.mubr.bf16.mxu0 %v2631
    %2721 = vmatmul.mubr.bf16.gmra.mxu0 %v2630
    %v2722 = vpop.f32.mrf.mxu0
    %v2723 = vadd.f32 %v2539, %v2722
    %v2724 = vpop.f32.mrf.mxu0
    %v2725 = vadd.f32 %v2539, %v2724
    %v2726 = vpop.f32.mrf.mxu0
    %v2727 = vadd.f32 %v2544, %v2726
    %v2728 = vpop.f32.mrf.mxu0
    %v2729 = vadd.f32 %v2544, %v2728
    %2730 = vmatprep.mubr.bf16.mxu0 %v2636
    %2731 = vmatmul.mubr.bf16.gmra.mxu0 %v2635
    %v2732 = vpop.f32.mrf.mxu0
    %v2733 = vadd.f32 %v2549, %v2732
    %v2734 = vpop.f32.mrf.mxu0
    %v2735 = vadd.f32 %v2549, %v2734
    %v2736 = vpop.f32.mrf.mxu0
    %v2737 = vadd.f32 %v2554, %v2736
    %v2738 = vpop.f32.mrf.mxu0
    %v2739 = vadd.f32 %v2554, %v2738
    %2740 = vdwg.mxu0
    %2741 = vmatprep.subr.bf16.mxu0 %v2465
    %2742 = vmatpush1.bf16.msra.mxu0 %v2464
    %2743 = vmatprep.subr.bf16.mxu0 %v2461
    %2744 = vmatpush1.bf16.msra.mxu0 %v2460
    %2745 = vmatprep.subr.bf16.mxu0 %v2457
    %2746 = vmatpush1.bf16.msra.mxu0 %v2456
    %2747 = vmatprep.subr.bf16.mxu0 %v2453
    %2748 = vmatpush1.bf16.msra.mxu0 %v2452
    %2749 = vmatprep.subr.bf16.mxu0 %v2449
    %2750 = vmatpush1.bf16.msra.mxu0 %v2448
    %2751 = vmatprep.subr.bf16.mxu0 %v2445
    %2752 = vmatpush1.bf16.msra.mxu0 %v2444
    %2753 = vmatprep.subr.bf16.mxu0 %v2441
    %2754 = vmatpush1.bf16.msra.mxu0 %v2440
    %2755 = vmatprep.subr.bf16.mxu0 %v2437
    %2756 = vmatpush1.bf16.msra.mxu0 %v2436
    %2757 = vmatprep.subr.bf16.mxu0 %v2497
    %2758 = vmatpush2.bf16.msra.mxu0 %v2496
    %2759 = vmatprep.subr.bf16.mxu0 %v2493
    %2760 = vmatpush2.bf16.msra.mxu0 %v2492
    %2761 = vmatprep.subr.bf16.mxu0 %v2489
    %2762 = vmatpush2.bf16.msra.mxu0 %v2488
    %2763 = vmatprep.subr.bf16.mxu0 %v2485
    %2764 = vmatpush2.bf16.msra.mxu0 %v2484
    %2765 = vmatprep.subr.bf16.mxu0 %v2481
    %2766 = vmatpush2.bf16.msra.mxu0 %v2480
    %2767 = vmatprep.subr.bf16.mxu0 %v2477
    %2768 = vmatpush2.bf16.msra.mxu0 %v2476
    %2769 = vmatprep.subr.bf16.mxu0 %v2473
    %2770 = vmatpush2.bf16.msra.mxu0 %v2472
    %2771 = vmatprep.subr.bf16.mxu0 %v2469
    %2772 = vmatpush2.bf16.msra.mxu0 %v2468
    %2773 = vmatprep.mubr.bf16.mxu0 %v2623
    %2774 = vmatmul.mubr.bf16.gmra.mxu0 %v2622
    %v2775 = vpop.f32.mrf.mxu0
    %v2776 = vadd.f32 %v2703, %v2775
    %v2777 = vpop.f32.mrf.mxu0
    %v2778 = vadd.f32 %v2705, %v2777
    %v2779 = vpop.f32.mrf.mxu0
    %v2780 = vadd.f32 %v2707, %v2779
    %v2781 = vpop.f32.mrf.mxu0
    %v2782 = vadd.f32 %v2709, %v2781
    %2783 = vmatprep.mubr.bf16.mxu0 %v2628
    %2784 = vmatmul.mubr.bf16.gmra.mxu0 %v2627
    %v2785 = vpop.f32.mrf.mxu0
    %v2786 = vadd.f32 %v2713, %v2785
    %v2787 = vpop.f32.mrf.mxu0
    %v2788 = vadd.f32 %v2715, %v2787
    %v2789 = vpop.f32.mrf.mxu0
    %v2790 = vadd.f32 %v2717, %v2789
    %v2791 = vpop.f32.mrf.mxu0
    %v2792 = vadd.f32 %v2719, %v2791
    %2793 = vmatprep.mubr.bf16.mxu0 %v2633
    %2794 = vmatmul.mubr.bf16.gmra.mxu0 %v2632
    %v2795 = vpop.f32.mrf.mxu0
    %v2796 = vadd.f32 %v2723, %v2795
    %v2797 = vpop.f32.mrf.mxu0
    %v2798 = vadd.f32 %v2725, %v2797
    %v2799 = vpop.f32.mrf.mxu0
    %v2800 = vadd.f32 %v2727, %v2799
    %v2801 = vpop.f32.mrf.mxu0
    %v2802 = vadd.f32 %v2729, %v2801
    %2803 = vmatprep.mubr.bf16.mxu0 %v2638
    %2804 = vmatmul.mubr.bf16.gmra.mxu0 %v2637
    %v2805 = vpop.f32.mrf.mxu0
    %v2806 = vadd.f32 %v2733, %v2805
    %v2807 = vpop.f32.mrf.mxu0
    %v2808 = vadd.f32 %v2735, %v2807
    %v2809 = vpop.f32.mrf.mxu0
    %v2810 = vadd.f32 %v2737, %v2809
    %v2811 = vpop.f32.mrf.mxu0
    %v2812 = vadd.f32 %v2739, %v2811
    %2813 = vdwg.mxu0
    %2814 = vmatprep.subr.bf16.mxu0 0
    %2815 = vmatpush1.bf16.msra.mxu0 0
    %2816 = vmatprep.subr.bf16.mxu0 0
    %2817 = vmatpush1.bf16.msra.mxu0 0
    %2818 = vmatprep.subr.bf16.mxu0 0
    %2819 = vmatpush1.bf16.msra.mxu0 0
    %2820 = vmatprep.subr.bf16.mxu0 0
    %2821 = vmatpush1.bf16.msra.mxu0 0
    %2822 = vmatprep.subr.bf16.mxu0 %v2513
    %2823 = vmatpush1.bf16.msra.mxu0 %v2512
    %2824 = vmatprep.subr.bf16.mxu0 %v2509
    %2825 = vmatpush1.bf16.msra.mxu0 %v2508
    %2826 = vmatprep.subr.bf16.mxu0 %v2505
    %2827 = vmatpush1.bf16.msra.mxu0 %v2504
    %2828 = vmatprep.subr.bf16.mxu0 %v2501
    %2829 = vmatpush1.bf16.msra.mxu0 %v2500
    %2830 = vmatprep.subr.bf16.mxu0 0
    %2831 = vmatpush2.bf16.msra.mxu0 0
    %2832 = vmatprep.subr.bf16.mxu0 0
    %2833 = vmatpush2.bf16.msra.mxu0 0
    %2834 = vmatprep.subr.bf16.mxu0 0
    %2835 = vmatpush2.bf16.msra.mxu0 0
    %2836 = vmatprep.subr.bf16.mxu0 0
    %2837 = vmatpush2.bf16.msra.mxu0 0
    %2838 = vmatprep.subr.bf16.mxu0 0
    %2839 = vmatpush2.bf16.msra.mxu0 0
    %2840 = vmatprep.subr.bf16.mxu0 0
    %2841 = vmatpush2.bf16.msra.mxu0 0
    %2842 = vmatprep.subr.bf16.mxu0 0
    %2843 = vmatpush2.bf16.msra.mxu0 0
    %2844 = vmatprep.subr.bf16.mxu0 0
    %2845 = vmatpush2.bf16.msra.mxu0 0
    %2846 = vmatprep.mubr.bf16.mxu0 0
    %2847 = vmatmul.mubr.bf16.gmra.mxu0 %v2657
    %v2848 = vpop.f32.mrf.mxu0
    %v2849 = vadd.f32 %v2776, %v2848
    %v2850 = vpop.f32.mrf.mxu0
    %v2851 = vadd.f32 %v2778, %v2850
    %v2852 = vpop.f32.mrf.mxu0
    %v2853 = vadd.f32 %v2780, %v2852
    %v2854 = vpop.f32.mrf.mxu0
    %v2855 = vadd.f32 %v2782, %v2854
    %2856 = vmatprep.mubr.bf16.mxu0 0
    %2857 = vmatmul.mubr.bf16.gmra.mxu0 %v2660
    %v2858 = vpop.f32.mrf.mxu0
    %v2859 = vadd.f32 %v2786, %v2858
    %v2860 = vpop.f32.mrf.mxu0
    %v2861 = vadd.f32 %v2788, %v2860
    %v2862 = vpop.f32.mrf.mxu0
    %v2863 = vadd.f32 %v2790, %v2862
    %v2864 = vpop.f32.mrf.mxu0
    %v2865 = vadd.f32 %v2792, %v2864
    %2866 = vmatprep.mubr.bf16.mxu0 0
    %2867 = vmatmul.mubr.bf16.gmra.mxu0 %v2663
    %v2868 = vpop.f32.mrf.mxu0
    %v2869 = vadd.f32 %v2796, %v2868
    %v2870 = vpop.f32.mrf.mxu0
    %v2871 = vadd.f32 %v2798, %v2870
    %v2872 = vpop.f32.mrf.mxu0
    %v2873 = vadd.f32 %v2800, %v2872
    %v2874 = vpop.f32.mrf.mxu0
    %v2875 = vadd.f32 %v2802, %v2874
    %2876 = vmatprep.mubr.bf16.mxu0 0
    %2877 = vmatmul.mubr.bf16.gmra.mxu0 %v2666
    %v2878 = vpop.f32.mrf.mxu0
    %v2879 = vadd.f32 %v2806, %v2878
    %v2880 = vpop.f32.mrf.mxu0
    %v2881 = vadd.f32 %v2808, %v2880
    %v2882 = vpop.f32.mrf.mxu0
    %v2883 = vadd.f32 %v2810, %v2882
    %v2884 = vpop.f32.mrf.mxu0
    %v2885 = vadd.f32 %v2812, %v2884
    %2886 = vdwg.mxu0
    %2887 = vmatprep.subr.bf16.mxu0 %v2403
    %2888 = vmatpush1.bf16.msra.mxu0 %v2402
    %2889 = vmatprep.subr.bf16.mxu0 %v2399
    %2890 = vmatpush1.bf16.msra.mxu0 %v2398
    %2891 = vmatprep.subr.bf16.mxu0 %v2395
    %2892 = vmatpush1.bf16.msra.mxu0 %v2394
    %2893 = vmatprep.subr.bf16.mxu0 %v2391
    %2894 = vmatpush1.bf16.msra.mxu0 %v2390
    %2895 = vmatprep.subr.bf16.mxu0 %v2387
    %2896 = vmatpush1.bf16.msra.mxu0 %v2386
    %2897 = vmatprep.subr.bf16.mxu0 %v2383
    %2898 = vmatpush1.bf16.msra.mxu0 %v2382
    %2899 = vmatprep.subr.bf16.mxu0 %v2379
    %2900 = vmatpush1.bf16.msra.mxu0 %v2378
    %2901 = vmatprep.subr.bf16.mxu0 %v2375
    %2902 = vmatpush1.bf16.msra.mxu0 %v2374
    %2903 = vmatprep.subr.bf16.mxu0 %v2435
    %2904 = vmatpush2.bf16.msra.mxu0 %v2434
    %2905 = vmatprep.subr.bf16.mxu0 %v2431
    %2906 = vmatpush2.bf16.msra.mxu0 %v2430
    %2907 = vmatprep.subr.bf16.mxu0 %v2427
    %2908 = vmatpush2.bf16.msra.mxu0 %v2426
    %2909 = vmatprep.subr.bf16.mxu0 %v2423
    %2910 = vmatpush2.bf16.msra.mxu0 %v2422
    %2911 = vmatprep.subr.bf16.mxu0 %v2419
    %2912 = vmatpush2.bf16.msra.mxu0 %v2418
    %2913 = vmatprep.subr.bf16.mxu0 %v2415
    %2914 = vmatpush2.bf16.msra.mxu0 %v2414
    %2915 = vmatprep.subr.bf16.mxu0 %v2411
    %2916 = vmatpush2.bf16.msra.mxu0 %v2410
    %2917 = vmatprep.subr.bf16.mxu0 %v2407
    %2918 = vmatpush2.bf16.msra.mxu0 %v2406
    %2919 = vmatprep.mubr.bf16.mxu0 %v2621
    %2920 = vmatmul.mubr.bf16.gmra.mxu0 %v2620
    %v2921 = vpop.f32.mrf.mxu0
    %v2922 = vadd.f32 %v2519, %v2921
    %v2923 = vpop.f32.mrf.mxu0
    %v2924 = vadd.f32 %v2519, %v2923
    %v2925 = vpop.f32.mrf.mxu0
    %v2926 = vadd.f32 %v2524, %v2925
    %v2927 = vpop.f32.mrf.mxu0
    %v2928 = vadd.f32 %v2524, %v2927
    %2929 = vmatprep.mubr.bf16.mxu0 %v2626
    %2930 = vmatmul.mubr.bf16.gmra.mxu0 %v2625
    %v2931 = vpop.f32.mrf.mxu0
    %v2932 = vadd.f32 %v2529, %v2931
    %v2933 = vpop.f32.mrf.mxu0
    %v2934 = vadd.f32 %v2529, %v2933
    %v2935 = vpop.f32.mrf.mxu0
    %v2936 = vadd.f32 %v2534, %v2935
    %v2937 = vpop.f32.mrf.mxu0
    %v2938 = vadd.f32 %v2534, %v2937
    %2939 = vmatprep.mubr.bf16.mxu0 %v2631
    %2940 = vmatmul.mubr.bf16.gmra.mxu0 %v2630
    %v2941 = vpop.f32.mrf.mxu0
    %v2942 = vadd.f32 %v2539, %v2941
    %v2943 = vpop.f32.mrf.mxu0
    %v2944 = vadd.f32 %v2539, %v2943
    %v2945 = vpop.f32.mrf.mxu0
    %v2946 = vadd.f32 %v2544, %v2945
    %v2947 = vpop.f32.mrf.mxu0
    %v2948 = vadd.f32 %v2544, %v2947
    %2949 = vmatprep.mubr.bf16.mxu0 %v2636
    %2950 = vmatmul.mubr.bf16.gmra.mxu0 %v2635
    %v2951 = vpop.f32.mrf.mxu0
    %v2952 = vadd.f32 %v2549, %v2951
    %v2953 = vpop.f32.mrf.mxu0
    %v2954 = vadd.f32 %v2549, %v2953
    %v2955 = vpop.f32.mrf.mxu0
    %v2956 = vadd.f32 %v2554, %v2955
    %v2957 = vpop.f32.mrf.mxu0
    %v2958 = vadd.f32 %v2554, %v2957
    %2959 = vdwg.mxu0
    %2960 = vmatprep.subr.bf16.mxu0 %v2467
    %2961 = vmatpush1.bf16.msra.mxu0 %v2466
    %2962 = vmatprep.subr.bf16.mxu0 %v2463
    %2963 = vmatpush1.bf16.msra.mxu0 %v2462
    %2964 = vmatprep.subr.bf16.mxu0 %v2459
    %2965 = vmatpush1.bf16.msra.mxu0 %v2458
    %2966 = vmatprep.subr.bf16.mxu0 %v2455
    %2967 = vmatpush1.bf16.msra.mxu0 %v2454
    %2968 = vmatprep.subr.bf16.mxu0 %v2451
    %2969 = vmatpush1.bf16.msra.mxu0 %v2450
    %2970 = vmatprep.subr.bf16.mxu0 %v2447
    %2971 = vmatpush1.bf16.msra.mxu0 %v2446
    %2972 = vmatprep.subr.bf16.mxu0 %v2443
    %2973 = vmatpush1.bf16.msra.mxu0 %v2442
    %2974 = vmatprep.subr.bf16.mxu0 %v2439
    %2975 = vmatpush1.bf16.msra.mxu0 %v2438
    %2976 = vmatprep.subr.bf16.mxu0 %v2499
    %2977 = vmatpush2.bf16.msra.mxu0 %v2498
    %2978 = vmatprep.subr.bf16.mxu0 %v2495
    %2979 = vmatpush2.bf16.msra.mxu0 %v2494
    %2980 = vmatprep.subr.bf16.mxu0 %v2491
    %2981 = vmatpush2.bf16.msra.mxu0 %v2490
    %2982 = vmatprep.subr.bf16.mxu0 %v2487
    %2983 = vmatpush2.bf16.msra.mxu0 %v2486
    %2984 = vmatprep.subr.bf16.mxu0 %v2483
    %2985 = vmatpush2.bf16.msra.mxu0 %v2482
    %2986 = vmatprep.subr.bf16.mxu0 %v2479
    %2987 = vmatpush2.bf16.msra.mxu0 %v2478
    %2988 = vmatprep.subr.bf16.mxu0 %v2475
    %2989 = vmatpush2.bf16.msra.mxu0 %v2474
    %2990 = vmatprep.subr.bf16.mxu0 %v2471
    %2991 = vmatpush2.bf16.msra.mxu0 %v2470
    %2992 = vmatprep.mubr.bf16.mxu0 %v2623
    %2993 = vmatmul.mubr.bf16.gmra.mxu0 %v2622
    %v2994 = vpop.f32.mrf.mxu0
    %v2995 = vadd.f32 %v2922, %v2994
    %v2996 = vpop.f32.mrf.mxu0
    %v2997 = vadd.f32 %v2924, %v2996
    %v2998 = vpop.f32.mrf.mxu0
    %v2999 = vadd.f32 %v2926, %v2998
    %v3000 = vpop.f32.mrf.mxu0
    %v3001 = vadd.f32 %v2928, %v3000
    %3002 = vmatprep.mubr.bf16.mxu0 %v2628
    %3003 = vmatmul.mubr.bf16.gmra.mxu0 %v2627
    %v3004 = vpop.f32.mrf.mxu0
    %v3005 = vadd.f32 %v2932, %v3004
    %v3006 = vpop.f32.mrf.mxu0
    %v3007 = vadd.f32 %v2934, %v3006
    %v3008 = vpop.f32.mrf.mxu0
    %v3009 = vadd.f32 %v2936, %v3008
    %v3010 = vpop.f32.mrf.mxu0
    %v3011 = vadd.f32 %v2938, %v3010
    %3012 = vmatprep.mubr.bf16.mxu0 %v2633
    %3013 = vmatmul.mubr.bf16.gmra.mxu0 %v2632
    %v3014 = vpop.f32.mrf.mxu0
    %v3015 = vadd.f32 %v2942, %v3014
    %v3016 = vpop.f32.mrf.mxu0
    %v3017 = vadd.f32 %v2944, %v3016
    %v3018 = vpop.f32.mrf.mxu0
    %v3019 = vadd.f32 %v2946, %v3018
    %v3020 = vpop.f32.mrf.mxu0
    %v3021 = vadd.f32 %v2948, %v3020
    %3022 = vmatprep.mubr.bf16.mxu0 %v2638
    %3023 = vmatmul.mubr.bf16.gmra.mxu0 %v2637
    %v3024 = vpop.f32.mrf.mxu0
    %v3025 = vadd.f32 %v2952, %v3024
    %v3026 = vpop.f32.mrf.mxu0
    %v3027 = vadd.f32 %v2954, %v3026
    %v3028 = vpop.f32.mrf.mxu0
    %v3029 = vadd.f32 %v2956, %v3028
    %v3030 = vpop.f32.mrf.mxu0
    %v3031 = vadd.f32 %v2958, %v3030
    %3032 = vdwg.mxu0
    %3033 = vmatprep.subr.bf16.mxu0 0
    %3034 = vmatpush1.bf16.msra.mxu0 0
    %3035 = vmatprep.subr.bf16.mxu0 0
    %3036 = vmatpush1.bf16.msra.mxu0 0
    %3037 = vmatprep.subr.bf16.mxu0 0
    %3038 = vmatpush1.bf16.msra.mxu0 0
    %3039 = vmatprep.subr.bf16.mxu0 0
    %3040 = vmatpush1.bf16.msra.mxu0 0
    %3041 = vmatprep.subr.bf16.mxu0 %v2515
    %3042 = vmatpush1.bf16.msra.mxu0 %v2514
    %3043 = vmatprep.subr.bf16.mxu0 %v2511
    %3044 = vmatpush1.bf16.msra.mxu0 %v2510
    %3045 = vmatprep.subr.bf16.mxu0 %v2507
    %3046 = vmatpush1.bf16.msra.mxu0 %v2506
    %3047 = vmatprep.subr.bf16.mxu0 %v2503
    %3048 = vmatpush1.bf16.msra.mxu0 %v2502
    %3049 = vmatprep.subr.bf16.mxu0 0
    %3050 = vmatpush2.bf16.msra.mxu0 0
    %3051 = vmatprep.subr.bf16.mxu0 0
    %3052 = vmatpush2.bf16.msra.mxu0 0
    %3053 = vmatprep.subr.bf16.mxu0 0
    %3054 = vmatpush2.bf16.msra.mxu0 0
    %3055 = vmatprep.subr.bf16.mxu0 0
    %3056 = vmatpush2.bf16.msra.mxu0 0
    %3057 = vmatprep.subr.bf16.mxu0 0
    %3058 = vmatpush2.bf16.msra.mxu0 0
    %3059 = vmatprep.subr.bf16.mxu0 0
    %3060 = vmatpush2.bf16.msra.mxu0 0
    %3061 = vmatprep.subr.bf16.mxu0 0
    %3062 = vmatpush2.bf16.msra.mxu0 0
    %3063 = vmatprep.subr.bf16.mxu0 0
    %3064 = vmatpush2.bf16.msra.mxu0 0
    %3065 = vmatprep.mubr.bf16.mxu0 0
    %3066 = vmatmul.mubr.bf16.gmra.mxu0 %v2657
    %v3067 = vpop.f32.mrf.mxu0
    %v3068 = vadd.f32 %v2995, %v3067
    %v3069 = vpop.f32.mrf.mxu0
    %v3070 = vadd.f32 %v2997, %v3069
    %v3071 = vpop.f32.mrf.mxu0
    %v3072 = vadd.f32 %v2999, %v3071
    %v3073 = vpop.f32.mrf.mxu0
    %v3074 = vadd.f32 %v3001, %v3073
    %3075 = vmatprep.mubr.bf16.mxu0 0
    %3076 = vmatmul.mubr.bf16.gmra.mxu0 %v2660
    %v3077 = vpop.f32.mrf.mxu0
    %v3078 = vadd.f32 %v3005, %v3077
    %v3079 = vpop.f32.mrf.mxu0
    %v3080 = vadd.f32 %v3007, %v3079
    %v3081 = vpop.f32.mrf.mxu0
    %v3082 = vadd.f32 %v3009, %v3081
    %v3083 = vpop.f32.mrf.mxu0
    %v3084 = vadd.f32 %v3011, %v3083
    %3085 = vmatprep.mubr.bf16.mxu0 0
    %3086 = vmatmul.mubr.bf16.gmra.mxu0 %v2663
    %v3087 = vpop.f32.mrf.mxu0
    %v3088 = vadd.f32 %v3015, %v3087
    %v3089 = vpop.f32.mrf.mxu0
    %v3090 = vadd.f32 %v3017, %v3089
    %v3091 = vpop.f32.mrf.mxu0
    %v3092 = vadd.f32 %v3019, %v3091
    %v3093 = vpop.f32.mrf.mxu0
    %v3094 = vadd.f32 %v3021, %v3093
    %3095 = vmatprep.mubr.bf16.mxu0 0
    %3096 = vmatmul.mubr.bf16.gmra.mxu0 %v2666
    %v3097 = vpop.f32.mrf.mxu0
    %v3098 = vadd.f32 %v3025, %v3097
    %v3099 = vpop.f32.mrf.mxu0
    %v3100 = vadd.f32 %v3027, %v3099
    %v3101 = vpop.f32.mrf.mxu0
    %v3102 = vadd.f32 %v3029, %v3101
    %v3103 = vpop.f32.mrf.mxu0
    %v3104 = vadd.f32 %v3031, %v3103
    %3105 = vdwg.mxu0
    %v3106 = vpack.c.bf16 %v2853, %v2849
    %v3107 = vpack.c.bf16 %v2855, %v2851
    %v3108 = vpack.c.bf16 %v3072, %v3068
    %v3109 = vpack.c.bf16 %v3074, %v3070
    %v3110 = vpack.c.bf16 %v2863, %v2859
    %v3111 = vpack.c.bf16 %v2865, %v2861
    %v3112 = vpack.c.bf16 %v3082, %v3078
    %v3113 = vpack.c.bf16 %v3084, %v3080
    %v3114 = vpack.c.bf16 %v2873, %v2869
    %v3115 = vpack.c.bf16 %v2875, %v2871
    %v3116 = vpack.c.bf16 %v3092, %v3088
    %v3117 = vpack.c.bf16 %v3094, %v3090
    %v3118 = vpack.c.bf16 %v2883, %v2879
    %v3119 = vpack.c.bf16 %v2885, %v2881
    %v3120 = vpack.c.bf16 %v3102, %v3098
    %v3121 = vpack.c.bf16 %v3104, %v3100
    %v3122 = vpack.c.bf16 %v369, %v365
    %v3123 = vpack.c.bf16 %v371, %v367
    %v3124 = vpack.c.bf16 %v442, %v438
    %v3125 = vpack.c.bf16 %v444, %v440
    %v3126 = vpack.c.bf16 %v379, %v375
    %v3127 = vpack.c.bf16 %v381, %v377
    %v3128 = vpack.c.bf16 %v452, %v448
    %v3129 = vpack.c.bf16 %v454, %v450
    %v3130 = vpack.c.bf16 %v389, %v385
    %v3131 = vpack.c.bf16 %v391, %v387
    %v3132 = vpack.c.bf16 %v462, %v458
    %v3133 = vpack.c.bf16 %v464, %v460
    %v3134 = vpack.c.bf16 %v399, %v395
    %v3135 = vpack.c.bf16 %v401, %v397
    %v3136 = vpack.c.bf16 %v472, %v468
    %v3137 = vpack.c.bf16 %v474, %v470
    %3139 = vset.pattern.permute.xlu0 0
    %3140 = vperm.xlu0 %3139, %v233
    %v3141 = vpop.permute.xlu0 %3140
    %3144 = vset.pattern.permute.xlu0 0
    %3145 = vperm.xlu0 %3144, %v234
    %v3146 = vpop.permute.xlu0 %3145
    %3149 = vset.pattern.permute.xlu0 0
    %3150 = vperm.xlu0 %3149, %v235
    %v3151 = vpop.permute.xlu0 %3150
    %3154 = vset.pattern.permute.xlu0 0
    %3155 = vperm.xlu0 %3154, %v236
    %v3156 = vpop.permute.xlu0 %3155
    %3159 = vset.pattern.permute.xlu0 0
    %3160 = vperm.xlu0 %3159, %v237
    %v3161 = vpop.permute.xlu0 %3160
    %3164 = vset.pattern.permute.xlu0 0
    %3165 = vperm.xlu0 %3164, %v238
    %v3166 = vpop.permute.xlu0 %3165
    %3169 = vset.pattern.permute.xlu0 0
    %3170 = vperm.xlu0 %3169, %v239
    %v3171 = vpop.permute.xlu0 %3170
    %3174 = vset.pattern.permute.xlu0 0
    %3175 = vperm.xlu0 %3174, %v240
    %v3176 = vpop.permute.xlu0 %3175
    %v3186 = vunpack.c.l.b16 %v209
    %v3187 = vunpack.c.l.b16 %v210
    %v3188 = vunpack.c.l.b16 %v211
    %v3189 = vunpack.c.l.b16 %v212
    %v3190 = vunpack.c.l.b16 %v213
    %v3191 = vunpack.c.l.b16 %v214
    %v3192 = vunpack.c.l.b16 %v215
    %v3193 = vunpack.c.l.b16 %v216
    %v3194 = vpack.c.b16 %v3187, %v3186
    %v3195 = vpack.c.b16 %v3189, %v3188
    %v3196 = vpack.c.b16 %v3191, %v3190
    %v3197 = vpack.c.b16 %v3193, %v3192
    %3202 = vmatprep.subr.bf16.mxu0 %v3135
    %3203 = vmatpush1.bf16.msra.mxu0 %v3134
    %3204 = vmatprep.subr.bf16.mxu0 %v3131
    %3205 = vmatpush1.bf16.msra.mxu0 %v3130
    %3206 = vmatprep.subr.bf16.mxu0 %v3127
    %3207 = vmatpush1.bf16.msra.mxu0 %v3126
    %3208 = vmatprep.subr.bf16.mxu0 %v3123
    %3209 = vmatpush1.bf16.msra.mxu0 %v3122
    %3210 = vmatprep.subr.bf16.mxu0 %v3119
    %3211 = vmatpush1.bf16.msra.mxu0 %v3118
    %3212 = vmatprep.subr.bf16.mxu0 %v3115
    %3213 = vmatpush1.bf16.msra.mxu0 %v3114
    %3214 = vmatprep.subr.bf16.mxu0 %v3111
    %3215 = vmatpush1.bf16.msra.mxu0 %v3110
    %3216 = vmatprep.subr.bf16.mxu0 %v3107
    %3217 = vmatpush1.bf16.msra.mxu0 %v3106
    %3218 = vmatprep.subr.bf16.mxu0 0
    %3219 = vmatpush2.bf16.msra.mxu0 0
    %3220 = vmatprep.subr.bf16.mxu0 0
    %3221 = vmatpush2.bf16.msra.mxu0 0
    %3222 = vmatprep.subr.bf16.mxu0 0
    %3223 = vmatpush2.bf16.msra.mxu0 0
    %3224 = vmatprep.subr.bf16.mxu0 0
    %3225 = vmatpush2.bf16.msra.mxu0 0
    %3226 = vmatprep.subr.bf16.mxu0 0
    %3227 = vmatpush2.bf16.msra.mxu0 0
    %3228 = vmatprep.subr.bf16.mxu0 0
    %3229 = vmatpush2.bf16.msra.mxu0 0
    %3230 = vmatprep.subr.bf16.mxu0 0
    %3231 = vmatpush2.bf16.msra.mxu0 0
    %3232 = vmatprep.subr.bf16.mxu0 0
    %3233 = vmatpush2.bf16.msra.mxu0 0
    %3234 = vmatprep.mubr.bf16.mxu0 0
    %3235 = vmatmul.mubr.bf16.gmra.mxu0 %v3194
    %v3236 = vpop.f32.mrf.mxu0
    %v3237 = vadd.f32 %v3141, %v3236
    %v3238 = vpop.f32.mrf.mxu0
    %v3239 = vadd.f32 %v3141, %v3238
    %v3240 = vpop.f32.mrf.mxu0
    %v3241 = vadd.f32 %v3146, %v3240
    %v3242 = vpop.f32.mrf.mxu0
    %v3243 = vadd.f32 %v3146, %v3242
    %3244 = vmatprep.mubr.bf16.mxu0 0
    %3245 = vmatmul.mubr.bf16.gmra.mxu0 %v3195
    %v3246 = vpop.f32.mrf.mxu0
    %v3247 = vadd.f32 %v3151, %v3246
    %v3248 = vpop.f32.mrf.mxu0
    %v3249 = vadd.f32 %v3151, %v3248
    %v3250 = vpop.f32.mrf.mxu0
    %v3251 = vadd.f32 %v3156, %v3250
    %v3252 = vpop.f32.mrf.mxu0
    %v3253 = vadd.f32 %v3156, %v3252
    %3254 = vmatprep.mubr.bf16.mxu0 0
    %3255 = vmatmul.mubr.bf16.gmra.mxu0 %v3196
    %v3256 = vpop.f32.mrf.mxu0
    %v3257 = vadd.f32 %v3161, %v3256
    %v3258 = vpop.f32.mrf.mxu0
    %v3259 = vadd.f32 %v3161, %v3258
    %v3260 = vpop.f32.mrf.mxu0
    %v3261 = vadd.f32 %v3166, %v3260
    %v3262 = vpop.f32.mrf.mxu0
    %v3263 = vadd.f32 %v3166, %v3262
    %3264 = vmatprep.mubr.bf16.mxu0 0
    %3265 = vmatmul.mubr.bf16.gmra.mxu0 %v3197
    %v3266 = vpop.f32.mrf.mxu0
    %v3267 = vadd.f32 %v3171, %v3266
    %v3268 = vpop.f32.mrf.mxu0
    %v3269 = vadd.f32 %v3171, %v3268
    %v3270 = vpop.f32.mrf.mxu0
    %v3271 = vadd.f32 %v3176, %v3270
    %v3272 = vpop.f32.mrf.mxu0
    %v3273 = vadd.f32 %v3176, %v3272
    %3274 = vdwg.mxu0
    %3275 = vmatprep.subr.bf16.mxu0 %v3137
    %3276 = vmatpush1.bf16.msra.mxu0 %v3136
    %3277 = vmatprep.subr.bf16.mxu0 %v3133
    %3278 = vmatpush1.bf16.msra.mxu0 %v3132
    %3279 = vmatprep.subr.bf16.mxu0 %v3129
    %3280 = vmatpush1.bf16.msra.mxu0 %v3128
    %3281 = vmatprep.subr.bf16.mxu0 %v3125
    %3282 = vmatpush1.bf16.msra.mxu0 %v3124
    %3283 = vmatprep.subr.bf16.mxu0 %v3121
    %3284 = vmatpush1.bf16.msra.mxu0 %v3120
    %3285 = vmatprep.subr.bf16.mxu0 %v3117
    %3286 = vmatpush1.bf16.msra.mxu0 %v3116
    %3287 = vmatprep.subr.bf16.mxu0 %v3113
    %3288 = vmatpush1.bf16.msra.mxu0 %v3112
    %3289 = vmatprep.subr.bf16.mxu0 %v3109
    %3290 = vmatpush1.bf16.msra.mxu0 %v3108
    %3291 = vmatprep.subr.bf16.mxu0 0
    %3292 = vmatpush2.bf16.msra.mxu0 0
    %3293 = vmatprep.subr.bf16.mxu0 0
    %3294 = vmatpush2.bf16.msra.mxu0 0
    %3295 = vmatprep.subr.bf16.mxu0 0
    %3296 = vmatpush2.bf16.msra.mxu0 0
    %3297 = vmatprep.subr.bf16.mxu0 0
    %3298 = vmatpush2.bf16.msra.mxu0 0
    %3299 = vmatprep.subr.bf16.mxu0 0
    %3300 = vmatpush2.bf16.msra.mxu0 0
    %3301 = vmatprep.subr.bf16.mxu0 0
    %3302 = vmatpush2.bf16.msra.mxu0 0
    %3303 = vmatprep.subr.bf16.mxu0 0
    %3304 = vmatpush2.bf16.msra.mxu0 0
    %3305 = vmatprep.subr.bf16.mxu0 0
    %3306 = vmatpush2.bf16.msra.mxu0 0
    %3307 = vmatprep.mubr.bf16.mxu0 0
    %3308 = vmatmul.mubr.bf16.gmra.mxu0 %v3194
    %v3309 = vpop.f32.mrf.mxu0
    %v3310 = vadd.f32 %v3141, %v3309
    %v3311 = vpop.f32.mrf.mxu0
    %v3312 = vadd.f32 %v3141, %v3311
    %v3313 = vpop.f32.mrf.mxu0
    %v3314 = vadd.f32 %v3146, %v3313
    %v3315 = vpop.f32.mrf.mxu0
    %v3316 = vadd.f32 %v3146, %v3315
    %3317 = vmatprep.mubr.bf16.mxu0 0
    %3318 = vmatmul.mubr.bf16.gmra.mxu0 %v3195
    %v3319 = vpop.f32.mrf.mxu0
    %v3320 = vadd.f32 %v3151, %v3319
    %v3321 = vpop.f32.mrf.mxu0
    %v3322 = vadd.f32 %v3151, %v3321
    %v3323 = vpop.f32.mrf.mxu0
    %v3324 = vadd.f32 %v3156, %v3323
    %v3325 = vpop.f32.mrf.mxu0
    %v3326 = vadd.f32 %v3156, %v3325
    %3327 = vmatprep.mubr.bf16.mxu0 0
    %3328 = vmatmul.mubr.bf16.gmra.mxu0 %v3196
    %v3329 = vpop.f32.mrf.mxu0
    %v3330 = vadd.f32 %v3161, %v3329
    %v3331 = vpop.f32.mrf.mxu0
    %v3332 = vadd.f32 %v3161, %v3331
    %v3333 = vpop.f32.mrf.mxu0
    %v3334 = vadd.f32 %v3166, %v3333
    %v3335 = vpop.f32.mrf.mxu0
    %v3336 = vadd.f32 %v3166, %v3335
    %3337 = vmatprep.mubr.bf16.mxu0 0
    %3338 = vmatmul.mubr.bf16.gmra.mxu0 %v3197
    %v3339 = vpop.f32.mrf.mxu0
    %v3340 = vadd.f32 %v3171, %v3339
    %v3341 = vpop.f32.mrf.mxu0
    %v3342 = vadd.f32 %v3171, %v3341
    %v3343 = vpop.f32.mrf.mxu0
    %v3344 = vadd.f32 %v3176, %v3343
    %v3345 = vpop.f32.mrf.mxu0
    %v3346 = vadd.f32 %v3176, %v3345
    %3347 = vdwg.mxu0
    %v3348 = vadd.f32 %v365, %v3237
    %v3349 = vadd.f32 %v367, %v3239
    %v3350 = vadd.f32 %v438, %v3310
    %v3351 = vadd.f32 %v440, %v3312
    %v3352 = vadd.f32 %v369, %v3241
    %v3353 = vadd.f32 %v371, %v3243
    %v3354 = vadd.f32 %v442, %v3314
    %v3355 = vadd.f32 %v444, %v3316
    %v3356 = vadd.f32 %v375, %v3247
    %v3357 = vadd.f32 %v377, %v3249
    %v3358 = vadd.f32 %v448, %v3320
    %v3359 = vadd.f32 %v450, %v3322
    %v3360 = vadd.f32 %v379, %v3251
    %v3361 = vadd.f32 %v381, %v3253
    %v3362 = vadd.f32 %v452, %v3324
    %v3363 = vadd.f32 %v454, %v3326
    %v3364 = vadd.f32 %v385, %v3257
    %v3365 = vadd.f32 %v387, %v3259
    %v3366 = vadd.f32 %v458, %v3330
    %v3367 = vadd.f32 %v460, %v3332
    %v3368 = vadd.f32 %v389, %v3261
    %v3369 = vadd.f32 %v391, %v3263
    %v3370 = vadd.f32 %v462, %v3334
    %v3371 = vadd.f32 %v464, %v3336
    %v3372 = vadd.f32 %v395, %v3267
    %v3373 = vadd.f32 %v397, %v3269
    %v3374 = vadd.f32 %v468, %v3340
    %v3375 = vadd.f32 %v470, %v3342
    %v3376 = vadd.f32 %v399, %v3271
    %v3377 = vadd.f32 %v401, %v3273
    %v3378 = vadd.f32 %v472, %v3344
    %v3379 = vadd.f32 %v474, %v3346
    %3380 = vst [vmem:[#allocation7] sm:$0xff] %v3348
    %3381 = vst [vmem:[#allocation7 + $0x8] sm:$0xff] %v3349
    %3382 = vst [vmem:[#allocation7 + $0x10] sm:$0xff] %v3350
    %3383 = vst [vmem:[#allocation7 + $0x18] sm:$0xff] %v3351
    %3384 = vst [vmem:[#allocation7 + $0x20] sm:$0xff] %v3352
    %3385 = vst [vmem:[#allocation7 + $0x28] sm:$0xff] %v3353
    %3386 = vst [vmem:[#allocation7 + $0x30] sm:$0xff] %v3354
    %3387 = vst [vmem:[#allocation7 + $0x38] sm:$0xff] %v3355
    %3388 = vst [vmem:[#allocation7 + $0x40] sm:$0xff] %v3356
    %3389 = vst [vmem:[#allocation7 + $0x48] sm:$0xff] %v3357
    %3390 = vst [vmem:[#allocation7 + $0x50] sm:$0xff] %v3358
    %3391 = vst [vmem:[#allocation7 + $0x58] sm:$0xff] %v3359
    %3392 = vst [vmem:[#allocation7 + $0x60] sm:$0xff] %v3360
    %3393 = vst [vmem:[#allocation7 + $0x68] sm:$0xff] %v3361
    %3394 = vst [vmem:[#allocation7 + $0x70] sm:$0xff] %v3362
    %3395 = vst [vmem:[#allocation7 + $0x78] sm:$0xff] %v3363
    %3396 = vst [vmem:[#allocation7 + $0x80] sm:$0xff] %v3364
    %3397 = vst [vmem:[#allocation7 + $0x88] sm:$0xff] %v3365
    %3398 = vst [vmem:[#allocation7 + $0x90] sm:$0xff] %v3366
    %3399 = vst [vmem:[#allocation7 + $0x98] sm:$0xff] %v3367
    %3400 = vst [vmem:[#allocation7 + $0xa0] sm:$0xff] %v3368
    %3401 = vst [vmem:[#allocation7 + $0xa8] sm:$0xff] %v3369
    %3402 = vst [vmem:[#allocation7 + $0xb0] sm:$0xff] %v3370
    %3403 = vst [vmem:[#allocation7 + $0xb8] sm:$0xff] %v3371
    %3404 = vst [vmem:[#allocation7 + $0xc0] sm:$0xff] %v3372
    %3405 = vst [vmem:[#allocation7 + $0xc8] sm:$0xff] %v3373
    %3406 = vst [vmem:[#allocation7 + $0xd0] sm:$0xff] %v3374
    %3407 = vst [vmem:[#allocation7 + $0xd8] sm:$0xff] %v3375
    %3408 = vst [vmem:[#allocation7 + $0xe0] sm:$0xff] %v3376
    %3409 = vst [vmem:[#allocation7 + $0xe8] sm:$0xff] %v3377
    %3410 = vst [vmem:[#allocation7 + $0xf0] sm:$0xff] %v3378
    %3411 = vst [vmem:[#allocation7 + $0xf8] sm:$0xff] %v3379
    // Predicated region
    $region50: #{tpu_custom_call.1} parent=1 // pred_check
      _
    $region51: #{tpu_custom_call.1} parent=1 // pred_check_branch
      %3413 = sbr.rel (0) target = $region53
    $region52: #{tpu_custom_call.1} parent=1 // pred_region
      %s3415 = ssub.s32 4096, 4096
      %3416 = vsyncadd [#allocation4], %s3415
      %s3417 = sshll.u32 [#allocation7], 4
      %s3418 = int_to_ptr.vmem [resolvable:$true] %s3417
      %3423 = dma.vmem_to_hbm [thread:$0]  %s3418, 4096, %s10, [#allocation4], 512, 512, 32
    $region53: #{tpu_custom_call.1} parent=1 // pred_fallthru
      _
    // Predicated region
    $region54: #{tpu_custom_call.1} parent=1 // pred_check
      _
    $region55: #{tpu_custom_call.1} parent=1 // pred_check_branch
      %3425 = sbr.rel (0) target = $region57
    $region56: #{tpu_custom_call.1} parent=1 // pred_region
      %3426 = dma.done [#allocation4], 4096
    $region57: #{tpu_custom_call.1} parent=1 // pred_fallthru
      _
    %3427 = vsyncpa [#allocation3], 1
    %3428 = vsyncpa [#allocation6], 1
    %3429 = vsyncpa [#allocation4], 1

</llo_original>
